<compile_context>
chip_gen: v6e
topology: v6e:2x2x1
jax: 0.10.0
libtpu: 0.0.40
codegen_flags: <defaults>
</compile_context>

<pallas_src>
import jax
import jax.numpy as jnp
import numpy as np
from jax.experimental import pallas as pl
from jax.experimental.pallas import tpu as pltpu

B = 8  # images processed per grid step (batch is padded to a multiple of B)


# ----------------------------- fused kernel ---------------------------------

def _net_kernel(x_ref,
                b1t_ref, b1b_ref, re1_ref, ro1_ref, ce1_ref, co1_ref,
                b2t_ref, b2b_ref, re2_ref, ro2_ref, ce2_ref, co2_ref,
                wf_ref, f1b_ref, w2_ref, f2b_ref,
                o_ref):
    f32, bf16 = jnp.float32, jnp.bfloat16
    x = x_ref[...]                                            # (B, 28, 28) f32

    # ---- conv1 (1->10, k=5, valid): 5 banded matmuls, M = B*24 stacked rows.
    # y1 row order: b*24 + out_row ; lanes: out_channel*24 + out_col.
    acc1 = b1b_ref[...]                                       # (1, 240) bias
    for ki in range(5):
        lhs = x[:, ki:ki + 24, :].reshape(B * 24, 28).astype(bf16)
        acc1 = acc1 + jnp.dot(lhs, b1t_ref[ki], preferred_element_type=f32)
    y1 = acc1.astype(bf16)                                    # (B*24, 240)

    # ---- 2x2 max-pool + relu.  Row selectors are block-diagonal over the B
    # images and re-order rows to height-major (r*B + b) for free.
    yh = jnp.maximum(
        jnp.dot(re1_ref[...], y1, preferred_element_type=f32),
        jnp.dot(ro1_ref[...], y1, preferred_element_type=f32)).astype(bf16)
    p1 = jnp.maximum(
        jnp.maximum(jnp.dot(yh, ce1_ref[...], preferred_element_type=f32),
                    jnp.dot(yh, co1_ref[...], preferred_element_type=f32)),
        0.0).astype(bf16)                                     # (B*12, 120)

    # ---- conv2 (10->20, k=5): thanks to height-major rows, each of the 5
    # shifted windows is a contiguous, 8-aligned slice of p1.
    acc2 = b2b_ref[...]                                       # (1, 160) bias
    for ki in range(5):
        acc2 = acc2 + jnp.dot(p1[ki * B:(ki + 8) * B, :], b2t_ref[ki],
                              preferred_element_type=f32)
    y2 = acc2.astype(bf16)                                    # (B*8, 160)

    # ---- 2x2 max-pool + relu.
    yh2 = jnp.maximum(
        jnp.dot(re2_ref[...], y2, preferred_element_type=f32),
        jnp.dot(ro2_ref[...], y2, preferred_element_type=f32)).astype(bf16)
    p2 = jnp.maximum(
        jnp.maximum(jnp.dot(yh2, ce2_ref[...], preferred_element_type=f32),
                    jnp.dot(yh2, co2_ref[...], preferred_element_type=f32)),
        0.0).astype(bf16)                                     # (B*4, 80)

    # ---- fc1 + relu: 320 features = 4 pooled rows x 80 (channel*4 + width).
    # p2 rows are height-major, so row h of every image is p2[h*B:(h+1)*B].
    hf = f1b_ref[...]                                         # (1, 50)
    for h in range(4):
        hf = hf + jnp.dot(p2[h * B:(h + 1) * B, :], wf_ref[h],
                          preferred_element_type=f32)
    hf = jnp.maximum(hf, 0.0).astype(bf16)                    # (B, 50)

    # ---- fc2 padded to 128 lanes (dense store) + masked log_softmax.
    logits = jnp.dot(hf, w2_ref[...],
                     preferred_element_type=f32) + f2b_ref[...]   # (B, 128)
    lane = jax.lax.broadcasted_iota(jnp.int32, (B, 128), 1)
    valid = lane < 10
    lm = jnp.where(valid, logits, jnp.float32(-1e30))
    m = jnp.max(lm, axis=-1, keepdims=True)
    lse = m + jnp.log(jnp.sum(jnp.exp(lm - m), axis=-1, keepdims=True))
    o_ref[...] = jnp.where(valid, logits - lse, 0.0)


# ----------------------------- parameter prep --------------------------------

def init_params(key):
    """Random parameters in the PyTorch layout of the original module."""
    k1, k2, k3, k4 = jax.random.split(key, 4)
    return {
        "conv1_w": 0.1 * jax.random.normal(k1, (10, 1, 5, 5), jnp.float32),
        "conv1_b": jnp.linspace(-0.1, 0.1, 10).astype(jnp.float32),
        "conv2_w": 0.05 * jax.random.normal(k2, (20, 10, 5, 5), jnp.float32),
        "conv2_b": jnp.linspace(-0.05, 0.05, 20).astype(jnp.float32),
        "fc1_w": 0.05 * jax.random.normal(k3, (50, 320), jnp.float32),  # (out, in)
        "fc1_b": jnp.linspace(-0.02, 0.02, 50).astype(jnp.float32),
        "fc2_w": 0.1 * jax.random.normal(k4, (10, 50), jnp.float32),    # (out, in)
        "fc2_b": jnp.linspace(-0.01, 0.01, 10).astype(jnp.float32),
    }


def prepare_params(params):
    """One-time host-side repack of torch-layout weights into kernel operands."""
    w1 = np.asarray(params["conv1_w"], np.float32)   # (10, 1, 5, 5)
    b1 = np.asarray(params["conv1_b"], np.float32)
    w2 = np.asarray(params["conv2_w"], np.float32)   # (20, 10, 5, 5)
    b2 = np.asarray(params["conv2_b"], np.float32)
    f1w = np.asarray(params["fc1_w"], np.float32)    # (50, 320)
    f1b = np.asarray(params["fc1_b"], np.float32)
    f2w = np.asarray(params["fc2_w"], np.float32)    # (10, 50)
    f2b = np.asarray(params["fc2_b"], np.float32)

    # conv1 banded matrices: Y1[io, c*24+jo] += sum_kj x[io+ki, jo+kj]*w1[c,0,ki,kj]
    b1t = np.zeros((5, 28, 240), np.float32)
    cols10 = np.arange(10) * 24
    for ki in range(5):
        for jo in range(24):
            for kj in range(5):
                b1t[ki, jo + kj, cols10 + jo] = w1[:, 0, ki, kj]
    b1row = np.repeat(b1, 24).reshape(1, 240)

    # conv2 banded matrices: Y2[., d*8+jo] += sum P1[., c*12+jo+kj]*w2[d,c,ki,kj]
    b2t = np.zeros((5, 120, 160), np.float32)
    rows10 = np.arange(10) * 12
    cols20 = np.arange(20) * 8
    for ki in range(5):
        for jo in range(8):
            for kj in range(5):
                b2t[ki][np.ix_(rows10 + jo + kj, cols20 + jo)] = w2[:, :, ki, kj].T
    b2row = np.repeat(b2, 8).reshape(1, 160)

    # 2x2 max-pool ROW selectors: block-diagonal over the B images in a step,
    # and they permute rows image-major -> height-major (r*B + b).
    re1 = np.zeros((12 * B, 24 * B), np.float32)
    ro1 = np.zeros((12 * B, 24 * B), np.float32)
    re2 = np.zeros((4 * B, 8 * B), np.float32)
    ro2 = np.zeros((4 * B, 8 * B), np.float32)
    for b in range(B):
        for r in range(12):                      # pool1: input rows b*24 + io
            re1[r * B + b, b * 24 + 2 * r] = 1.0
            ro1[r * B + b, b * 24 + 2 * r + 1] = 1.0
        for r in range(4):                       # pool2: input rows io*B + b
            re2[r * B + b, (2 * r) * B + b] = 1.0
            ro2[r * B + b, (2 * r + 1) * B + b] = 1.0

    # 2x2 max-pool COLUMN selectors (batch independent).
    i24 = np.eye(24, dtype=np.float32)
    i8 = np.eye(8, dtype=np.float32)
    ce1 = np.kron(np.eye(10, dtype=np.float32), i24[:, 0::2])    # (240, 120)
    co1 = np.kron(np.eye(10, dtype=np.float32), i24[:, 1::2])
    ce2 = np.kron(np.eye(20, dtype=np.float32), i8[:, 0::2])     # (160, 80)
    co2 = np.kron(np.eye(20, dtype=np.float32), i8[:, 1::2])

    # fc1: torch flatten order is (channel, height, width); kernel lanes are
    # channel*4 + width and rows are height-major -> permute the 320 inputs.
    wf = f1w.reshape(50, 20, 4, 4).transpose(2, 1, 3, 0).reshape(4, 80, 50)
    f1brow = f1b.reshape(1, 50)

    # fc2 zero-padded to 128 output lanes (lane-dense final store).
    f2w_pad = np.zeros((50, 128), np.float32)
    f2w_pad[:, :10] = f2w.T
    f2b_pad = np.zeros((1, 128), np.float32)
    f2b_pad[0, :10] = f2b

    bf = jnp.bfloat16
    return [
        jnp.asarray(b1t, bf), jnp.asarray(b1row),
        jnp.asarray(re1, bf), jnp.asarray(ro1, bf),
        jnp.asarray(ce1, bf), jnp.asarray(co1, bf),
        jnp.asarray(b2t, bf), jnp.asarray(b2row),
        jnp.asarray(re2, bf), jnp.asarray(ro2, bf),
        jnp.asarray(ce2, bf), jnp.asarray(co2, bf),
        jnp.asarray(wf, bf), jnp.asarray(f1brow),
        jnp.asarray(f2w_pad, bf), jnp.asarray(f2b_pad),
    ]


# ------------------------------- forward -------------------------------------

def _const_index_map(nd):
    return lambda i: (0,) * nd


@jax.jit
def net_forward(prepared, x):
    """x: (N, 1, 28, 28) float32 NCHW -> (N, 10) log-probs."""
    n = x.shape[0]
    x2 = x.reshape(n, 28, 28)                 # Cin == 1
    n_pad = ((n + B - 1) // B) * B
    if n_pad != n:
        x2 = jnp.pad(x2, ((0, n_pad - n), (0, 0), (0, 0)))

    in_specs = [pl.BlockSpec((B, 28, 28), lambda i: (i, 0, 0))]
    for w in prepared:                        # weights: whole-array VMEM blocks
        in_specs.append(pl.BlockSpec(w.shape, _const_index_map(w.ndim)))

    out = pl.pallas_call(
        _net_kernel,
        out_shape=jax.ShapeDtypeStruct((n_pad, 128), jnp.float32),
        grid=(n_pad // B,),
        in_specs=in_specs,
        out_specs=pl.BlockSpec((B, 128), lambda i: (i, 0)),
        compiler_params=pltpu.CompilerParams(
            dimension_semantics=("parallel",)),   # megacore batch sharding
    )(x2, *prepared)

    return out[:n, :10]


# ----------------------------- pure-JAX reference ----------------------------

def net_reference(params, x):
    dn = ("NCHW", "OIHW", "NCHW")
    y = jax.lax.conv_general_dilated(x, params["conv1_w"], (1, 1), "VALID",
                                     dimension_numbers=dn)
    y = y + params["conv1_b"][None, :, None, None]
    y = jax.lax.reduce_window(y, -jnp.inf, jax.lax.max,
                              (1, 1, 2, 2), (1, 1, 2, 2), "VALID")
    y = jnp.maximum(y, 0.0)
    y = jax.lax.conv_general_dilated(y, params["conv2_w"], (1, 1), "VALID",
                                     dimension_numbers=dn)
    y = y + params["conv2_b"][None, :, None, None]
    y = jax.lax.reduce_window(y, -jnp.inf, jax.lax.max,
                              (1, 1, 2, 2), (1, 1, 2, 2), "VALID")
    y = jnp.maximum(y, 0.0)
    y = y.reshape(y.shape[0], 320)
    y = jnp.maximum(y @ params["fc1_w"].T + params["fc1_b"], 0.0)
    y = y @ params["fc2_w"].T + params["fc2_b"]
    return jax.nn.log_softmax(y, axis=1)


if __name__ == "__main__":
    key = jax.random.PRNGKey(0)
    pkey, xkey = jax.random.split(key)
    params = init_params(pkey)
    prepared = prepare_params(params)

    # 28x28 spatial is required by fc1's 320 = 20*4*4 flatten; batch = 12
    # (pads to 16 -> grid of 2 steps, 8 images each).
    x = jax.random.normal(xkey, (12, 1, 28, 28), jnp.float32)

    out = net_forward(prepared, x)
    jax.block_until_ready(out)

    ref = net_reference(params, x)
    assert out.shape == (12, 10)
    # log_softmax rows exponentiate-and-sum to 1.
    assert jnp.allclose(jnp.exp(out).sum(axis=1), 1.0, atol=1e-3)
    # bf16 weights / f32 accumulation: generous tolerance vs. f32 reference.
    assert float(jnp.max(jnp.abs(out - ref))) < 0.2
    print("KERNEL_OK")
</pallas_src>

<mosaic_0001>
module attributes {stable_mosaic.version = 11 : i64} {
  func.func @_net_kernel(%arg0: i32, %arg1: memref<8x28x28xf32, #tpu.memory_space<vmem>>, %arg2: memref<5x28x240xbf16, #tpu.memory_space<vmem>>, %arg3: memref<1x240xf32, #tpu.memory_space<vmem>>, %arg4: memref<96x192xbf16, #tpu.memory_space<vmem>>, %arg5: memref<96x192xbf16, #tpu.memory_space<vmem>>, %arg6: memref<240x120xbf16, #tpu.memory_space<vmem>>, %arg7: memref<240x120xbf16, #tpu.memory_space<vmem>>, %arg8: memref<5x120x160xbf16, #tpu.memory_space<vmem>>, %arg9: memref<1x160xf32, #tpu.memory_space<vmem>>, %arg10: memref<32x64xbf16, #tpu.memory_space<vmem>>, %arg11: memref<32x64xbf16, #tpu.memory_space<vmem>>, %arg12: memref<160x80xbf16, #tpu.memory_space<vmem>>, %arg13: memref<160x80xbf16, #tpu.memory_space<vmem>>, %arg14: memref<4x80x50xbf16, #tpu.memory_space<vmem>>, %arg15: memref<1x50xf32, #tpu.memory_space<vmem>>, %arg16: memref<50x128xbf16, #tpu.memory_space<vmem>>, %arg17: memref<1x128xf32, #tpu.memory_space<vmem>>, %arg18: memref<8x128xf32, #tpu.memory_space<vmem>>) attributes {dimension_semantics = [#tpu.dimension_semantics<parallel>], iteration_bounds = array<i64: 2>, scalar_prefetch = 0 : i64, scratch_operands = 0 : i64, tpu.core_type = #tpu.core_type<tc>, window_params = [{transform_indices = @transform_0, window_bounds = array<i64: 8, 28, 28>}, {pipeline_mode = #tpu.pipeline_mode<synchronous>, transform_indices = @transform_1, window_bounds = array<i64: 5, 28, 240>}, {pipeline_mode = #tpu.pipeline_mode<synchronous>, transform_indices = @transform_2, window_bounds = array<i64: 1, 240>}, {pipeline_mode = #tpu.pipeline_mode<synchronous>, transform_indices = @transform_3, window_bounds = array<i64: 96, 192>}, {pipeline_mode = #tpu.pipeline_mode<synchronous>, transform_indices = @transform_4, window_bounds = array<i64: 96, 192>}, {pipeline_mode = #tpu.pipeline_mode<synchronous>, transform_indices = @transform_5, window_bounds = array<i64: 240, 120>}, {pipeline_mode = #tpu.pipeline_mode<synchronous>, transform_indices = @transform_6, window_bounds = array<i64: 240, 120>}, {pipeline_mode = #tpu.pipeline_mode<synchronous>, transform_indices = @transform_7, window_bounds = array<i64: 5, 120, 160>}, {pipeline_mode = #tpu.pipeline_mode<synchronous>, transform_indices = @transform_8, window_bounds = array<i64: 1, 160>}, {pipeline_mode = #tpu.pipeline_mode<synchronous>, transform_indices = @transform_9, window_bounds = array<i64: 32, 64>}, {pipeline_mode = #tpu.pipeline_mode<synchronous>, transform_indices = @transform_10, window_bounds = array<i64: 32, 64>}, {pipeline_mode = #tpu.pipeline_mode<synchronous>, transform_indices = @transform_11, window_bounds = array<i64: 160, 80>}, {pipeline_mode = #tpu.pipeline_mode<synchronous>, transform_indices = @transform_12, window_bounds = array<i64: 160, 80>}, {pipeline_mode = #tpu.pipeline_mode<synchronous>, transform_indices = @transform_13, window_bounds = array<i64: 4, 80, 50>}, {pipeline_mode = #tpu.pipeline_mode<synchronous>, transform_indices = @transform_14, window_bounds = array<i64: 1, 50>}, {pipeline_mode = #tpu.pipeline_mode<synchronous>, transform_indices = @transform_15, window_bounds = array<i64: 50, 128>}, {pipeline_mode = #tpu.pipeline_mode<synchronous>, transform_indices = @transform_16, window_bounds = array<i64: 1, 128>}, {transform_indices = @transform_17, window_bounds = array<i64: 8, 128>}]} {
    %c0 = arith.constant 0 : index
    %c0_0 = arith.constant 0 : index
    %c0_1 = arith.constant 0 : index
    %0 = vector.load %arg1[%c0, %c0_0, %c0_1] : memref<8x28x28xf32, #tpu.memory_space<vmem>>, vector<8x28x28xf32>
    %c0_2 = arith.constant 0 : index
    %c0_3 = arith.constant 0 : index
    %1 = vector.load %arg3[%c0_2, %c0_3] : memref<1x240xf32, #tpu.memory_space<vmem>>, vector<1x240xf32>
    %2 = vector.extract_strided_slice %0 {offsets = [0, 0, 0], sizes = [8, 24, 28], strides = [1, 1, 1]} : vector<8x28x28xf32> to vector<8x24x28xf32>
    %3 = vector.shape_cast %2 : vector<8x24x28xf32> to vector<192x28xf32>
    %4 = arith.truncf %3 : vector<192x28xf32> to vector<192x28xbf16>
    %c0_4 = arith.constant 0 : index
    %c0_5 = arith.constant 0 : index
    %c0_6 = arith.constant 0 : index
    %5 = vector.load %arg2[%c0_4, %c0_5, %c0_6] : memref<5x28x240xbf16, #tpu.memory_space<vmem>>, vector<1x28x240xbf16>
    %6 = vector.shape_cast %5 : vector<1x28x240xbf16> to vector<28x240xbf16>
    %cst = arith.constant dense<0.000000e+00> : vector<192x240xf32>
    %7 = tpu.matmul %4, %6, %cst {dimension_numbers = #tpu.dot_dimension_numbers<[1], [0], [0], [1], [0, 0, 1, 1], [], []>} : vector<192x28xbf16>, vector<28x240xbf16>, vector<192x240xf32> -> vector<192x240xf32>
    %8 = vector.broadcast %1 : vector<1x240xf32> to vector<192x240xf32>
    %9 = arith.addf %8, %7 : vector<192x240xf32>
    %10 = vector.extract_strided_slice %0 {offsets = [0, 1, 0], sizes = [8, 24, 28], strides = [1, 1, 1]} : vector<8x28x28xf32> to vector<8x24x28xf32>
    %11 = vector.shape_cast %10 : vector<8x24x28xf32> to vector<192x28xf32>
    %12 = arith.truncf %11 : vector<192x28xf32> to vector<192x28xbf16>
    %c1 = arith.constant 1 : index
    %c0_7 = arith.constant 0 : index
    %c0_8 = arith.constant 0 : index
    %13 = vector.load %arg2[%c1, %c0_7, %c0_8] : memref<5x28x240xbf16, #tpu.memory_space<vmem>>, vector<1x28x240xbf16>
    %14 = vector.shape_cast %13 : vector<1x28x240xbf16> to vector<28x240xbf16>
    %cst_9 = arith.constant dense<0.000000e+00> : vector<192x240xf32>
    %15 = tpu.matmul %12, %14, %cst_9 {dimension_numbers = #tpu.dot_dimension_numbers<[1], [0], [0], [1], [0, 0, 1, 1], [], []>} : vector<192x28xbf16>, vector<28x240xbf16>, vector<192x240xf32> -> vector<192x240xf32>
    %16 = arith.addf %9, %15 : vector<192x240xf32>
    %17 = vector.extract_strided_slice %0 {offsets = [0, 2, 0], sizes = [8, 24, 28], strides = [1, 1, 1]} : vector<8x28x28xf32> to vector<8x24x28xf32>
    %18 = vector.shape_cast %17 : vector<8x24x28xf32> to vector<192x28xf32>
    %19 = arith.truncf %18 : vector<192x28xf32> to vector<192x28xbf16>
    %c2 = arith.constant 2 : index
    %c0_10 = arith.constant 0 : index
    %c0_11 = arith.constant 0 : index
    %20 = vector.load %arg2[%c2, %c0_10, %c0_11] : memref<5x28x240xbf16, #tpu.memory_space<vmem>>, vector<1x28x240xbf16>
    %21 = vector.shape_cast %20 : vector<1x28x240xbf16> to vector<28x240xbf16>
    %cst_12 = arith.constant dense<0.000000e+00> : vector<192x240xf32>
    %22 = tpu.matmul %19, %21, %cst_12 {dimension_numbers = #tpu.dot_dimension_numbers<[1], [0], [0], [1], [0, 0, 1, 1], [], []>} : vector<192x28xbf16>, vector<28x240xbf16>, vector<192x240xf32> -> vector<192x240xf32>
    %23 = arith.addf %16, %22 : vector<192x240xf32>
    %24 = vector.extract_strided_slice %0 {offsets = [0, 3, 0], sizes = [8, 24, 28], strides = [1, 1, 1]} : vector<8x28x28xf32> to vector<8x24x28xf32>
    %25 = vector.shape_cast %24 : vector<8x24x28xf32> to vector<192x28xf32>
    %26 = arith.truncf %25 : vector<192x28xf32> to vector<192x28xbf16>
    %c3 = arith.constant 3 : index
    %c0_13 = arith.constant 0 : index
    %c0_14 = arith.constant 0 : index
    %27 = vector.load %arg2[%c3, %c0_13, %c0_14] : memref<5x28x240xbf16, #tpu.memory_space<vmem>>, vector<1x28x240xbf16>
    %28 = vector.shape_cast %27 : vector<1x28x240xbf16> to vector<28x240xbf16>
    %cst_15 = arith.constant dense<0.000000e+00> : vector<192x240xf32>
    %29 = tpu.matmul %26, %28, %cst_15 {dimension_numbers = #tpu.dot_dimension_numbers<[1], [0], [0], [1], [0, 0, 1, 1], [], []>} : vector<192x28xbf16>, vector<28x240xbf16>, vector<192x240xf32> -> vector<192x240xf32>
    %30 = arith.addf %23, %29 : vector<192x240xf32>
    %31 = vector.extract_strided_slice %0 {offsets = [0, 4, 0], sizes = [8, 24, 28], strides = [1, 1, 1]} : vector<8x28x28xf32> to vector<8x24x28xf32>
    %32 = vector.shape_cast %31 : vector<8x24x28xf32> to vector<192x28xf32>
    %33 = arith.truncf %32 : vector<192x28xf32> to vector<192x28xbf16>
    %c4 = arith.constant 4 : index
    %c0_16 = arith.constant 0 : index
    %c0_17 = arith.constant 0 : index
    %34 = vector.load %arg2[%c4, %c0_16, %c0_17] : memref<5x28x240xbf16, #tpu.memory_space<vmem>>, vector<1x28x240xbf16>
    %35 = vector.shape_cast %34 : vector<1x28x240xbf16> to vector<28x240xbf16>
    %cst_18 = arith.constant dense<0.000000e+00> : vector<192x240xf32>
    %36 = tpu.matmul %33, %35, %cst_18 {dimension_numbers = #tpu.dot_dimension_numbers<[1], [0], [0], [1], [0, 0, 1, 1], [], []>} : vector<192x28xbf16>, vector<28x240xbf16>, vector<192x240xf32> -> vector<192x240xf32>
    %37 = arith.addf %30, %36 : vector<192x240xf32>
    %38 = arith.truncf %37 : vector<192x240xf32> to vector<192x240xbf16>
    %c0_19 = arith.constant 0 : index
    %c0_20 = arith.constant 0 : index
    %39 = vector.load %arg4[%c0_19, %c0_20] : memref<96x192xbf16, #tpu.memory_space<vmem>>, vector<96x192xbf16>
    %cst_21 = arith.constant dense<0.000000e+00> : vector<96x240xf32>
    %40 = tpu.matmul %39, %38, %cst_21 {dimension_numbers = #tpu.dot_dimension_numbers<[1], [0], [0], [1], [0, 0, 1, 1], [], []>} : vector<96x192xbf16>, vector<192x240xbf16>, vector<96x240xf32> -> vector<96x240xf32>
    %c0_22 = arith.constant 0 : index
    %c0_23 = arith.constant 0 : index
    %41 = vector.load %arg5[%c0_22, %c0_23] : memref<96x192xbf16, #tpu.memory_space<vmem>>, vector<96x192xbf16>
    %cst_24 = arith.constant dense<0.000000e+00> : vector<96x240xf32>
    %42 = tpu.matmul %41, %38, %cst_24 {dimension_numbers = #tpu.dot_dimension_numbers<[1], [0], [0], [1], [0, 0, 1, 1], [], []>} : vector<96x192xbf16>, vector<192x240xbf16>, vector<96x240xf32> -> vector<96x240xf32>
    %43 = arith.maximumf %40, %42 : vector<96x240xf32>
    %44 = arith.truncf %43 : vector<96x240xf32> to vector<96x240xbf16>
    %c0_25 = arith.constant 0 : index
    %c0_26 = arith.constant 0 : index
    %45 = vector.load %arg6[%c0_25, %c0_26] : memref<240x120xbf16, #tpu.memory_space<vmem>>, vector<240x120xbf16>
    %cst_27 = arith.constant dense<0.000000e+00> : vector<96x120xf32>
    %46 = tpu.matmul %44, %45, %cst_27 {dimension_numbers = #tpu.dot_dimension_numbers<[1], [0], [0], [1], [0, 0, 1, 1], [], []>} : vector<96x240xbf16>, vector<240x120xbf16>, vector<96x120xf32> -> vector<96x120xf32>
    %c0_28 = arith.constant 0 : index
    %c0_29 = arith.constant 0 : index
    %47 = vector.load %arg7[%c0_28, %c0_29] : memref<240x120xbf16, #tpu.memory_space<vmem>>, vector<240x120xbf16>
    %cst_30 = arith.constant dense<0.000000e+00> : vector<96x120xf32>
    %48 = tpu.matmul %44, %47, %cst_30 {dimension_numbers = #tpu.dot_dimension_numbers<[1], [0], [0], [1], [0, 0, 1, 1], [], []>} : vector<96x240xbf16>, vector<240x120xbf16>, vector<96x120xf32> -> vector<96x120xf32>
    %49 = arith.maximumf %46, %48 : vector<96x120xf32>
    %cst_31 = arith.constant 0.000000e+00 : f32
    %50 = vector.broadcast %cst_31 : f32 to vector<96x120xf32>
    %51 = arith.maximumf %49, %50 : vector<96x120xf32>
    %52 = arith.truncf %51 : vector<96x120xf32> to vector<96x120xbf16>
    %c0_32 = arith.constant 0 : index
    %c0_33 = arith.constant 0 : index
    %53 = vector.load %arg9[%c0_32, %c0_33] : memref<1x160xf32, #tpu.memory_space<vmem>>, vector<1x160xf32>
    %54 = vector.extract_strided_slice %52 {offsets = [0, 0], sizes = [64, 120], strides = [1, 1]} : vector<96x120xbf16> to vector<64x120xbf16>
    %c0_34 = arith.constant 0 : index
    %c0_35 = arith.constant 0 : index
    %c0_36 = arith.constant 0 : index
    %55 = vector.load %arg8[%c0_34, %c0_35, %c0_36] : memref<5x120x160xbf16, #tpu.memory_space<vmem>>, vector<1x120x160xbf16>
    %56 = vector.shape_cast %55 : vector<1x120x160xbf16> to vector<120x160xbf16>
    %cst_37 = arith.constant dense<0.000000e+00> : vector<64x160xf32>
    %57 = tpu.matmul %54, %56, %cst_37 {dimension_numbers = #tpu.dot_dimension_numbers<[1], [0], [0], [1], [0, 0, 1, 1], [], []>} : vector<64x120xbf16>, vector<120x160xbf16>, vector<64x160xf32> -> vector<64x160xf32>
    %58 = vector.broadcast %53 : vector<1x160xf32> to vector<64x160xf32>
    %59 = arith.addf %58, %57 : vector<64x160xf32>
    %60 = vector.extract_strided_slice %52 {offsets = [8, 0], sizes = [64, 120], strides = [1, 1]} : vector<96x120xbf16> to vector<64x120xbf16>
    %c1_38 = arith.constant 1 : index
    %c0_39 = arith.constant 0 : index
    %c0_40 = arith.constant 0 : index
    %61 = vector.load %arg8[%c1_38, %c0_39, %c0_40] : memref<5x120x160xbf16, #tpu.memory_space<vmem>>, vector<1x120x160xbf16>
    %62 = vector.shape_cast %61 : vector<1x120x160xbf16> to vector<120x160xbf16>
    %cst_41 = arith.constant dense<0.000000e+00> : vector<64x160xf32>
    %63 = tpu.matmul %60, %62, %cst_41 {dimension_numbers = #tpu.dot_dimension_numbers<[1], [0], [0], [1], [0, 0, 1, 1], [], []>} : vector<64x120xbf16>, vector<120x160xbf16>, vector<64x160xf32> -> vector<64x160xf32>
    %64 = arith.addf %59, %63 : vector<64x160xf32>
    %65 = vector.extract_strided_slice %52 {offsets = [16, 0], sizes = [64, 120], strides = [1, 1]} : vector<96x120xbf16> to vector<64x120xbf16>
    %c2_42 = arith.constant 2 : index
    %c0_43 = arith.constant 0 : index
    %c0_44 = arith.constant 0 : index
    %66 = vector.load %arg8[%c2_42, %c0_43, %c0_44] : memref<5x120x160xbf16, #tpu.memory_space<vmem>>, vector<1x120x160xbf16>
    %67 = vector.shape_cast %66 : vector<1x120x160xbf16> to vector<120x160xbf16>
    %cst_45 = arith.constant dense<0.000000e+00> : vector<64x160xf32>
    %68 = tpu.matmul %65, %67, %cst_45 {dimension_numbers = #tpu.dot_dimension_numbers<[1], [0], [0], [1], [0, 0, 1, 1], [], []>} : vector<64x120xbf16>, vector<120x160xbf16>, vector<64x160xf32> -> vector<64x160xf32>
    %69 = arith.addf %64, %68 : vector<64x160xf32>
    %70 = vector.extract_strided_slice %52 {offsets = [24, 0], sizes = [64, 120], strides = [1, 1]} : vector<96x120xbf16> to vector<64x120xbf16>
    %c3_46 = arith.constant 3 : index
    %c0_47 = arith.constant 0 : index
    %c0_48 = arith.constant 0 : index
    %71 = vector.load %arg8[%c3_46, %c0_47, %c0_48] : memref<5x120x160xbf16, #tpu.memory_space<vmem>>, vector<1x120x160xbf16>
    %72 = vector.shape_cast %71 : vector<1x120x160xbf16> to vector<120x160xbf16>
    %cst_49 = arith.constant dense<0.000000e+00> : vector<64x160xf32>
    %73 = tpu.matmul %70, %72, %cst_49 {dimension_numbers = #tpu.dot_dimension_numbers<[1], [0], [0], [1], [0, 0, 1, 1], [], []>} : vector<64x120xbf16>, vector<120x160xbf16>, vector<64x160xf32> -> vector<64x160xf32>
    %74 = arith.addf %69, %73 : vector<64x160xf32>
    %75 = vector.extract_strided_slice %52 {offsets = [32, 0], sizes = [64, 120], strides = [1, 1]} : vector<96x120xbf16> to vector<64x120xbf16>
    %c4_50 = arith.constant 4 : index
    %c0_51 = arith.constant 0 : index
    %c0_52 = arith.constant 0 : index
    %76 = vector.load %arg8[%c4_50, %c0_51, %c0_52] : memref<5x120x160xbf16, #tpu.memory_space<vmem>>, vector<1x120x160xbf16>
    %77 = vector.shape_cast %76 : vector<1x120x160xbf16> to vector<120x160xbf16>
    %cst_53 = arith.constant dense<0.000000e+00> : vector<64x160xf32>
    %78 = tpu.matmul %75, %77, %cst_53 {dimension_numbers = #tpu.dot_dimension_numbers<[1], [0], [0], [1], [0, 0, 1, 1], [], []>} : vector<64x120xbf16>, vector<120x160xbf16>, vector<64x160xf32> -> vector<64x160xf32>
    %79 = arith.addf %74, %78 : vector<64x160xf32>
    %80 = arith.truncf %79 : vector<64x160xf32> to vector<64x160xbf16>
    %c0_54 = arith.constant 0 : index
    %c0_55 = arith.constant 0 : index
    %81 = vector.load %arg10[%c0_54, %c0_55] : memref<32x64xbf16, #tpu.memory_space<vmem>>, vector<32x64xbf16>
    %cst_56 = arith.constant dense<0.000000e+00> : vector<32x160xf32>
    %82 = tpu.matmul %81, %80, %cst_56 {dimension_numbers = #tpu.dot_dimension_numbers<[1], [0], [0], [1], [0, 0, 1, 1], [], []>} : vector<32x64xbf16>, vector<64x160xbf16>, vector<32x160xf32> -> vector<32x160xf32>
    %c0_57 = arith.constant 0 : index
    %c0_58 = arith.constant 0 : index
    %83 = vector.load %arg11[%c0_57, %c0_58] : memref<32x64xbf16, #tpu.memory_space<vmem>>, vector<32x64xbf16>
    %cst_59 = arith.constant dense<0.000000e+00> : vector<32x160xf32>
    %84 = tpu.matmul %83, %80, %cst_59 {dimension_numbers = #tpu.dot_dimension_numbers<[1], [0], [0], [1], [0, 0, 1, 1], [], []>} : vector<32x64xbf16>, vector<64x160xbf16>, vector<32x160xf32> -> vector<32x160xf32>
    %85 = arith.maximumf %82, %84 : vector<32x160xf32>
    %86 = arith.truncf %85 : vector<32x160xf32> to vector<32x160xbf16>
    %c0_60 = arith.constant 0 : index
    %c0_61 = arith.constant 0 : index
    %87 = vector.load %arg12[%c0_60, %c0_61] : memref<160x80xbf16, #tpu.memory_space<vmem>>, vector<160x80xbf16>
    %cst_62 = arith.constant dense<0.000000e+00> : vector<32x80xf32>
    %88 = tpu.matmul %86, %87, %cst_62 {dimension_numbers = #tpu.dot_dimension_numbers<[1], [0], [0], [1], [0, 0, 1, 1], [], []>} : vector<32x160xbf16>, vector<160x80xbf16>, vector<32x80xf32> -> vector<32x80xf32>
    %c0_63 = arith.constant 0 : index
    %c0_64 = arith.constant 0 : index
    %89 = vector.load %arg13[%c0_63, %c0_64] : memref<160x80xbf16, #tpu.memory_space<vmem>>, vector<160x80xbf16>
    %cst_65 = arith.constant dense<0.000000e+00> : vector<32x80xf32>
    %90 = tpu.matmul %86, %89, %cst_65 {dimension_numbers = #tpu.dot_dimension_numbers<[1], [0], [0], [1], [0, 0, 1, 1], [], []>} : vector<32x160xbf16>, vector<160x80xbf16>, vector<32x80xf32> -> vector<32x80xf32>
    %91 = arith.maximumf %88, %90 : vector<32x80xf32>
    %cst_66 = arith.constant 0.000000e+00 : f32
    %92 = vector.broadcast %cst_66 : f32 to vector<32x80xf32>
    %93 = arith.maximumf %91, %92 : vector<32x80xf32>
    %94 = arith.truncf %93 : vector<32x80xf32> to vector<32x80xbf16>
    %c0_67 = arith.constant 0 : index
    %c0_68 = arith.constant 0 : index
    %95 = vector.load %arg15[%c0_67, %c0_68] : memref<1x50xf32, #tpu.memory_space<vmem>>, vector<1x50xf32>
    %96 = vector.extract_strided_slice %94 {offsets = [0, 0], sizes = [8, 80], strides = [1, 1]} : vector<32x80xbf16> to vector<8x80xbf16>
    %c0_69 = arith.constant 0 : index
    %c0_70 = arith.constant 0 : index
    %c0_71 = arith.constant 0 : index
    %97 = vector.load %arg14[%c0_69, %c0_70, %c0_71] : memref<4x80x50xbf16, #tpu.memory_space<vmem>>, vector<1x80x50xbf16>
    %98 = vector.shape_cast %97 : vector<1x80x50xbf16> to vector<80x50xbf16>
    %cst_72 = arith.constant dense<0.000000e+00> : vector<8x50xf32>
    %99 = tpu.matmul %96, %98, %cst_72 {dimension_numbers = #tpu.dot_dimension_numbers<[1], [0], [0], [1], [0, 0, 1, 1], [], []>} : vector<8x80xbf16>, vector<80x50xbf16>, vector<8x50xf32> -> vector<8x50xf32>
    %100 = vector.broadcast %95 : vector<1x50xf32> to vector<8x50xf32>
    %101 = arith.addf %100, %99 : vector<8x50xf32>
    %102 = vector.extract_strided_slice %94 {offsets = [8, 0], sizes = [8, 80], strides = [1, 1]} : vector<32x80xbf16> to vector<8x80xbf16>
    %c1_73 = arith.constant 1 : index
    %c0_74 = arith.constant 0 : index
    %c0_75 = arith.constant 0 : index
    %103 = vector.load %arg14[%c1_73, %c0_74, %c0_75] : memref<4x80x50xbf16, #tpu.memory_space<vmem>>, vector<1x80x50xbf16>
    %104 = vector.shape_cast %103 : vector<1x80x50xbf16> to vector<80x50xbf16>
    %cst_76 = arith.constant dense<0.000000e+00> : vector<8x50xf32>
    %105 = tpu.matmul %102, %104, %cst_76 {dimension_numbers = #tpu.dot_dimension_numbers<[1], [0], [0], [1], [0, 0, 1, 1], [], []>} : vector<8x80xbf16>, vector<80x50xbf16>, vector<8x50xf32> -> vector<8x50xf32>
    %106 = arith.addf %101, %105 : vector<8x50xf32>
    %107 = vector.extract_strided_slice %94 {offsets = [16, 0], sizes = [8, 80], strides = [1, 1]} : vector<32x80xbf16> to vector<8x80xbf16>
    %c2_77 = arith.constant 2 : index
    %c0_78 = arith.constant 0 : index
    %c0_79 = arith.constant 0 : index
    %108 = vector.load %arg14[%c2_77, %c0_78, %c0_79] : memref<4x80x50xbf16, #tpu.memory_space<vmem>>, vector<1x80x50xbf16>
    %109 = vector.shape_cast %108 : vector<1x80x50xbf16> to vector<80x50xbf16>
    %cst_80 = arith.constant dense<0.000000e+00> : vector<8x50xf32>
    %110 = tpu.matmul %107, %109, %cst_80 {dimension_numbers = #tpu.dot_dimension_numbers<[1], [0], [0], [1], [0, 0, 1, 1], [], []>} : vector<8x80xbf16>, vector<80x50xbf16>, vector<8x50xf32> -> vector<8x50xf32>
    %111 = arith.addf %106, %110 : vector<8x50xf32>
    %112 = vector.extract_strided_slice %94 {offsets = [24, 0], sizes = [8, 80], strides = [1, 1]} : vector<32x80xbf16> to vector<8x80xbf16>
    %c3_81 = arith.constant 3 : index
    %c0_82 = arith.constant 0 : index
    %c0_83 = arith.constant 0 : index
    %113 = vector.load %arg14[%c3_81, %c0_82, %c0_83] : memref<4x80x50xbf16, #tpu.memory_space<vmem>>, vector<1x80x50xbf16>
    %114 = vector.shape_cast %113 : vector<1x80x50xbf16> to vector<80x50xbf16>
    %cst_84 = arith.constant dense<0.000000e+00> : vector<8x50xf32>
    %115 = tpu.matmul %112, %114, %cst_84 {dimension_numbers = #tpu.dot_dimension_numbers<[1], [0], [0], [1], [0, 0, 1, 1], [], []>} : vector<8x80xbf16>, vector<80x50xbf16>, vector<8x50xf32> -> vector<8x50xf32>
    %116 = arith.addf %111, %115 : vector<8x50xf32>
    %cst_85 = arith.constant 0.000000e+00 : f32
    %117 = vector.broadcast %cst_85 : f32 to vector<8x50xf32>
    %118 = arith.maximumf %116, %117 : vector<8x50xf32>
    %119 = arith.truncf %118 : vector<8x50xf32> to vector<8x50xbf16>
    %c0_86 = arith.constant 0 : index
    %c0_87 = arith.constant 0 : index
    %120 = vector.load %arg16[%c0_86, %c0_87] : memref<50x128xbf16, #tpu.memory_space<vmem>>, vector<50x128xbf16>
    %cst_88 = arith.constant dense<0.000000e+00> : vector<8x128xf32>
    %121 = tpu.matmul %119, %120, %cst_88 {dimension_numbers = #tpu.dot_dimension_numbers<[1], [0], [0], [1], [0, 0, 1, 1], [], []>} : vector<8x50xbf16>, vector<50x128xbf16>, vector<8x128xf32> -> vector<8x128xf32>
    %c0_89 = arith.constant 0 : index
    %c0_90 = arith.constant 0 : index
    %122 = vector.load %arg17[%c0_89, %c0_90] : memref<1x128xf32, #tpu.memory_space<vmem>>, vector<1x128xf32>
    %123 = vector.broadcast %122 : vector<1x128xf32> to vector<8x128xf32>
    %124 = arith.addf %121, %123 : vector<8x128xf32>
    %125 = tpu.iota {dimensions = array<i32: 1>} : vector<8x128xi32>
    %c10_i32 = arith.constant 10 : i32
    %126 = vector.broadcast %c10_i32 : i32 to vector<8x128xi32>
    %127 = arith.cmpi slt, %125, %126 : vector<8x128xi32>
    %cst_91 = arith.constant -1.000000e+30 : f32
    %128 = vector.broadcast %cst_91 : f32 to vector<8x128xf32>
    %129 = arith.select %127, %124, %128 : vector<8x128xi1>, vector<8x128xf32>
    %cst_92 = arith.constant dense<0xFF800000> : vector<8xf32>
    %130 = vector.multi_reduction <maximumf>, %129, %cst_92 [1] : vector<8x128xf32> to vector<8xf32>
    %131 = vector.shape_cast %130 : vector<8xf32> to vector<8x1xf32>
    %132 = vector.broadcast %131 : vector<8x1xf32> to vector<8x128xf32>
    %133 = arith.subf %129, %132 : vector<8x128xf32>
    %134 = math.exp %133 : vector<8x128xf32>
    %cst_93 = arith.constant dense<0.000000e+00> : vector<8xf32>
    %135 = vector.multi_reduction <add>, %134, %cst_93 [1] : vector<8x128xf32> to vector<8xf32>
    %136 = vector.shape_cast %135 : vector<8xf32> to vector<8x1xf32>
    %137 = math.log %136 : vector<8x1xf32>
    %138 = arith.addf %131, %137 : vector<8x1xf32>
    %139 = vector.broadcast %138 : vector<8x1xf32> to vector<8x128xf32>
    %140 = arith.subf %124, %139 : vector<8x128xf32>
    %cst_94 = arith.constant 0.000000e+00 : f32
    %141 = vector.broadcast %cst_94 : f32 to vector<8x128xf32>
    %142 = arith.select %127, %140, %141 : vector<8x128xi1>, vector<8x128xf32>
    %c0_95 = arith.constant 0 : index
    %c0_96 = arith.constant 0 : index
    %143 = vector.load %arg18[%c0_95, %c0_96] : memref<8x128xf32, #tpu.memory_space<vmem>>, vector<8x128xf32>
    tpu.vector_store %arg18[%c0_95, %c0_96], %142 {strides = array<i32>} : memref<8x128xf32, #tpu.memory_space<vmem>>, vector<8x128xf32>,
    return
  }
  func.func @transform_0(%arg0: i32) -> (i32, i32, i32) {
    %c0_i32 = arith.constant 0 : i32
    %c0_i32_0 = arith.constant 0 : i32
    %c0_i32_1 = arith.constant 0 : i32
    return %arg0, %c0_i32, %c0_i32_0 : i32, i32, i32
  }
  func.func @transform_1(%arg0: i32) -> (i32, i32, i32) {
    %c0_i32 = arith.constant 0 : i32
    %c0_i32_0 = arith.constant 0 : i32
    %c0_i32_1 = arith.constant 0 : i32
    %c0_i32_2 = arith.constant 0 : i32
    return %c0_i32, %c0_i32_0, %c0_i32_1 : i32, i32, i32
  }
  func.func @transform_2(%arg0: i32) -> (i32, i32) {
    %c0_i32 = arith.constant 0 : i32
    %c0_i32_0 = arith.constant 0 : i32
    %c0_i32_1 = arith.constant 0 : i32
    return %c0_i32, %c0_i32_0 : i32, i32
  }
  func.func @transform_3(%arg0: i32) -> (i32, i32) {
    %c0_i32 = arith.constant 0 : i32
    %c0_i32_0 = arith.constant 0 : i32
    %c0_i32_1 = arith.constant 0 : i32
    return %c0_i32, %c0_i32_0 : i32, i32
  }
  func.func @transform_4(%arg0: i32) -> (i32, i32) {
    %c0_i32 = arith.constant 0 : i32
    %c0_i32_0 = arith.constant 0 : i32
    %c0_i32_1 = arith.constant 0 : i32
    return %c0_i32, %c0_i32_0 : i32, i32
  }
  func.func @transform_5(%arg0: i32) -> (i32, i32) {
    %c0_i32 = arith.constant 0 : i32
    %c0_i32_0 = arith.constant 0 : i32
    %c0_i32_1 = arith.constant 0 : i32
    return %c0_i32, %c0_i32_0 : i32, i32
  }
  func.func @transform_6(%arg0: i32) -> (i32, i32) {
    %c0_i32 = arith.constant 0 : i32
    %c0_i32_0 = arith.constant 0 : i32
    %c0_i32_1 = arith.constant 0 : i32
    return %c0_i32, %c0_i32_0 : i32, i32
  }
  func.func @transform_7(%arg0: i32) -> (i32, i32, i32) {
    %c0_i32 = arith.constant 0 : i32
    %c0_i32_0 = arith.constant 0 : i32
    %c0_i32_1 = arith.constant 0 : i32
    %c0_i32_2 = arith.constant 0 : i32
    return %c0_i32, %c0_i32_0, %c0_i32_1 : i32, i32, i32
  }
  func.func @transform_8(%arg0: i32) -> (i32, i32) {
    %c0_i32 = arith.constant 0 : i32
    %c0_i32_0 = arith.constant 0 : i32
    %c0_i32_1 = arith.constant 0 : i32
    return %c0_i32, %c0_i32_0 : i32, i32
  }
  func.func @transform_9(%arg0: i32) -> (i32, i32) {
    %c0_i32 = arith.constant 0 : i32
    %c0_i32_0 = arith.constant 0 : i32
    %c0_i32_1 = arith.constant 0 : i32
    return %c0_i32, %c0_i32_0 : i32, i32
  }
  func.func @transform_10(%arg0: i32) -> (i32, i32) {
    %c0_i32 = arith.constant 0 : i32
    %c0_i32_0 = arith.constant 0 : i32
    %c0_i32_1 = arith.constant 0 : i32
    return %c0_i32, %c0_i32_0 : i32, i32
  }
  func.func @transform_11(%arg0: i32) -> (i32, i32) {
    %c0_i32 = arith.constant 0 : i32
    %c0_i32_0 = arith.constant 0 : i32
    %c0_i32_1 = arith.constant 0 : i32
    return %c0_i32, %c0_i32_0 : i32, i32
  }
  func.func @transform_12(%arg0: i32) -> (i32, i32) {
    %c0_i32 = arith.constant 0 : i32
    %c0_i32_0 = arith.constant 0 : i32
    %c0_i32_1 = arith.constant 0 : i32
    return %c0_i32, %c0_i32_0 : i32, i32
  }
  func.func @transform_13(%arg0: i32) -> (i32, i32, i32) {
    %c0_i32 = arith.constant 0 : i32
    %c0_i32_0 = arith.constant 0 : i32
    %c0_i32_1 = arith.constant 0 : i32
    %c0_i32_2 = arith.constant 0 : i32
    return %c0_i32, %c0_i32_0, %c0_i32_1 : i32, i32, i32
  }
  func.func @transform_14(%arg0: i32) -> (i32, i32) {
    %c0_i32 = arith.constant 0 : i32
    %c0_i32_0 = arith.constant 0 : i32
    %c0_i32_1 = arith.constant 0 : i32
    return %c0_i32, %c0_i32_0 : i32, i32
  }
  func.func @transform_15(%arg0: i32) -> (i32, i32) {
    %c0_i32 = arith.constant 0 : i32
    %c0_i32_0 = arith.constant 0 : i32
    %c0_i32_1 = arith.constant 0 : i32
    return %c0_i32, %c0_i32_0 : i32, i32
  }
  func.func @transform_16(%arg0: i32) -> (i32, i32) {
    %c0_i32 = arith.constant 0 : i32
    %c0_i32_0 = arith.constant 0 : i32
    %c0_i32_1 = arith.constant 0 : i32
    return %c0_i32, %c0_i32_0 : i32, i32
  }
  func.func @transform_17(%arg0: i32) -> (i32, i32) {
    %c0_i32 = arith.constant 0 : i32
    %c0_i32_0 = arith.constant 0 : i32
    return %arg0, %c0_i32 : i32, i32
  }
}

</mosaic_0001>

<llo_original>
// kernel: net_forward.1
$region0: #{net_forward.1}
  #allocation0 [shape = 'u32[]', space=smem, size = 0x4, offset = 0x4, fixed_abs, tag = 'smem constant byte address 0x4 - core index']
  #allocation1 [shape = 'u32[144,128]{1,0:T(1,128)}', space=vmem, size = 0x12000, scoped, tag = 'internal scratch']
  %s0 = inlined_call_operand.vmem [shape: f32[16,28,28], index: 0, kind: input, shape index: {}]
  %s1 = inlined_call_operand.vmem [shape: bf16[5,28,240], index: 1, kind: input, shape index: {}]
  %s2 = inlined_call_operand.vmem [shape: f32[1,240], index: 2, kind: input, shape index: {}]
  %s3 = inlined_call_operand.vmem [shape: bf16[96,192], index: 3, kind: input, shape index: {}]
  %s4 = inlined_call_operand.vmem [shape: bf16[96,192], index: 4, kind: input, shape index: {}]
  %s5 = inlined_call_operand.vmem [shape: bf16[240,120], index: 5, kind: input, shape index: {}]
  %s6 = inlined_call_operand.vmem [shape: bf16[240,120], index: 6, kind: input, shape index: {}]
  %s7 = inlined_call_operand.vmem [shape: bf16[5,120,160], index: 7, kind: input, shape index: {}]
  %s8 = inlined_call_operand.vmem [shape: f32[1,160], index: 8, kind: input, shape index: {}]
  %s9 = inlined_call_operand.vmem [shape: bf16[32,64], index: 9, kind: input, shape index: {}]
  %s10 = inlined_call_operand.vmem [shape: bf16[32,64], index: 10, kind: input, shape index: {}]
  %s11 = inlined_call_operand.vmem [shape: bf16[160,80], index: 11, kind: input, shape index: {}]
  %s12 = inlined_call_operand.vmem [shape: bf16[160,80], index: 12, kind: input, shape index: {}]
  %s13 = inlined_call_operand.vmem [shape: bf16[4,80,50], index: 13, kind: input, shape index: {}]
  %s14 = inlined_call_operand.vmem [shape: f32[1,50], index: 14, kind: input, shape index: {}]
  %s15 = inlined_call_operand.vmem [shape: bf16[50,128], index: 15, kind: input, shape index: {}]
  %s16 = inlined_call_operand.vmem [shape: f32[1,128], index: 16, kind: input, shape index: {}]
  %s17 = inlined_call_operand.hbm [shape: f32[16,128], index: 17, kind: output, shape index: {}]
  %s18 = sld [smem:[#allocation0]]
  $region101: #{net_forward.1} parent=0
    _
  %s20 = ssub.s32 1, %s18
  %s21 = scalar_select 0, %s20, %s18
  $region1: #{net_forward.1} parent=0
    #allocation2 [shape = 'u8[8192]{0}', space=vmem, size = 0x2000, scoped, tag = 'output window, operand 0']
    #allocation3 [shape = 's32[2]{0}', space=sflag, size = 0x8, scoped, tag = 'scoped memory for net_forward.1']
    %22 = vsyncpa [#allocation3], 0
    %s23 = scalar_lea.sflag [#allocation3], 1
    %24 = vsyncpa %s23, 0
    loop: start=0, step=1, limit=4
    $region2: #{net_forward.1} parent=1 // loop_pre_header
      _
    $region3: #{net_forward.1} parent=1 // loop_header
      %s26 = sphi 0, %s30
      %p27 = scmp.ge.s32.totalorder %s26, 4
      %s36 = sphi 0, %s38
      %s39 = sphi 0, %s36
      %s40 = sphi 0, %s39
      %s56 = sphi 0, %s40
      %s60 = sphi 0, %s60
      %s62 = sphi 0, %s60
      %s63 = sphi 0, %s62
      %s77 = sphi 0, %s63
      %s81 = sphi 0, %s81
      %s83 = sphi 0, %s81
      %s84 = sphi 0, %s83
      %s98 = sphi 0, %s84
      %s102 = sphi 0, %s102
      %s104 = sphi 0, %s102
      %s105 = sphi 0, %s104
      %s119 = sphi 0, %s105
      %s123 = sphi 0, %s123
      %s125 = sphi 0, %s123
      %s126 = sphi 0, %s125
      %s140 = sphi 0, %s126
      %s144 = sphi 0, %s144
      %s146 = sphi 0, %s144
      %s147 = sphi 0, %s146
      %s161 = sphi 0, %s147
      %s165 = sphi 0, %s165
      %s167 = sphi 0, %s165
      %s168 = sphi 0, %s167
      %s182 = sphi 0, %s168
      %s186 = sphi 0, %s186
      %s188 = sphi 0, %s186
      %s189 = sphi 0, %s188
      %s203 = sphi 0, %s189
      %s207 = sphi 0, %s207
      %s209 = sphi 0, %s207
      %s210 = sphi 0, %s209
      %s224 = sphi 0, %s210
      %s228 = sphi 0, %s228
      %s230 = sphi 0, %s228
      %s231 = sphi 0, %s230
      %s245 = sphi 0, %s231
      %s249 = sphi 0, %s249
      %s251 = sphi 0, %s249
      %s252 = sphi 0, %s251
      %s266 = sphi 0, %s252
      %s270 = sphi 0, %s270
      %s272 = sphi 0, %s270
      %s273 = sphi 0, %s272
      %s287 = sphi 0, %s273
      %s291 = sphi 0, %s291
      %s293 = sphi 0, %s291
      %s294 = sphi 0, %s293
      %s308 = sphi 0, %s294
      %s312 = sphi 0, %s312
      %s314 = sphi 0, %s312
      %s315 = sphi 0, %s314
      %s329 = sphi 0, %s315
      %s333 = sphi 0, %s333
      %s335 = sphi 0, %s333
      %s336 = sphi 0, %s335
      %s350 = sphi 0, %s336
      %s354 = sphi 0, %s354
      %s356 = sphi 0, %s354
      %s357 = sphi 0, %s356
      %s371 = sphi 0, %s357
      %s375 = sphi 0, %s375
      %s377 = sphi 0, %s375
      %s378 = sphi 0, %s377
      %s392 = sphi 0, %s378
      %s398 = sphi 0, %s400
      %s401 = sphi 0, %s398
      %s402 = sphi 0, %s401
      %s418 = sphi 0, %s402
    $region4: #{net_forward.1} parent=1 // loop_header_branch
      %29 = sbr.rel (%p27) target = $region8
    $region5: #{net_forward.1} parent=1 // loop_body
      %s31 = ssub.s32 %s26, 1
      %s32 = ssub.s32 %s26, 2
      %s33 = sadd.s32 %s26, 1
      %s34 = ssub.s32 %s26, %s33
      %p35 = scmp.eq.s32.totalorder %s34, 0
      %s37 = sadd.s32 %s36, 1
      %s38 = scalar_select %p35, %s36, %s37
      %p41 = pneg %p35
      %p42 = scmp.eq.s32.totalorder %s26, 1
      %p43 = por %p41, %p42
      %p44 = scmp.ne.s32.totalorder %s36, %s39
      %p45 = scmp.eq.s32.totalorder %s26, 0
      %p46 = por %p44, %p45
      %p47 = scmp.ne.s32.totalorder %s36, %s39
      %p48 = scmp.eq.s32.totalorder %s31, 1
      %p49 = por %p47, %p48
      %p50 = scmp.ne.s32.totalorder %s39, %s40
      %p51 = scmp.eq.s32.totalorder %s31, 0
      %p52 = por %p50, %p51
      %p53 = scmp.ne.s32.totalorder %s39, %s40
      %p54 = scmp.eq.s32.totalorder %s32, 1
      %p55 = por %p53, %p54
      %p57 = scmp.ne.s32.totalorder %s40, %s56
      %p58 = scmp.eq.s32.totalorder %s32, 0
      %p59 = por %p57, %p58
      %s61 = sadd.s32 %s60, 1
      %p64 = scmp.eq.s32.totalorder %s26, 1
      %p65 = scmp.ne.s32.totalorder %s60, %s62
      %p66 = scmp.eq.s32.totalorder %s26, 0
      %p67 = por %p65, %p66
      %p68 = scmp.ne.s32.totalorder %s60, %s62
      %p69 = scmp.eq.s32.totalorder %s31, 1
      %p70 = por %p68, %p69
      %p71 = scmp.ne.s32.totalorder %s62, %s63
      %p72 = scmp.eq.s32.totalorder %s31, 0
      %p73 = por %p71, %p72
      %p74 = scmp.ne.s32.totalorder %s62, %s63
      %p75 = scmp.eq.s32.totalorder %s32, 1
      %p76 = por %p74, %p75
      %p78 = scmp.ne.s32.totalorder %s63, %s77
      %p79 = scmp.eq.s32.totalorder %s32, 0
      %p80 = por %p78, %p79
      %s82 = sadd.s32 %s81, 1
      %p85 = scmp.eq.s32.totalorder %s26, 1
      %p86 = scmp.ne.s32.totalorder %s81, %s83
      %p87 = scmp.eq.s32.totalorder %s26, 0
      %p88 = por %p86, %p87
      %p89 = scmp.ne.s32.totalorder %s81, %s83
      %p90 = scmp.eq.s32.totalorder %s31, 1
      %p91 = por %p89, %p90
      %p92 = scmp.ne.s32.totalorder %s83, %s84
      %p93 = scmp.eq.s32.totalorder %s31, 0
      %p94 = por %p92, %p93
      %p95 = scmp.ne.s32.totalorder %s83, %s84
      %p96 = scmp.eq.s32.totalorder %s32, 1
      %p97 = por %p95, %p96
      %p99 = scmp.ne.s32.totalorder %s84, %s98
      %p100 = scmp.eq.s32.totalorder %s32, 0
      %p101 = por %p99, %p100
      %s103 = sadd.s32 %s102, 1
      %p106 = scmp.eq.s32.totalorder %s26, 1
      %p107 = scmp.ne.s32.totalorder %s102, %s104
      %p108 = scmp.eq.s32.totalorder %s26, 0
      %p109 = por %p107, %p108
      %p110 = scmp.ne.s32.totalorder %s102, %s104
      %p111 = scmp.eq.s32.totalorder %s31, 1
      %p112 = por %p110, %p111
      %p113 = scmp.ne.s32.totalorder %s104, %s105
      %p114 = scmp.eq.s32.totalorder %s31, 0
      %p115 = por %p113, %p114
      %p116 = scmp.ne.s32.totalorder %s104, %s105
      %p117 = scmp.eq.s32.totalorder %s32, 1
      %p118 = por %p116, %p117
      %p120 = scmp.ne.s32.totalorder %s105, %s119
      %p121 = scmp.eq.s32.totalorder %s32, 0
      %p122 = por %p120, %p121
      %s124 = sadd.s32 %s123, 1
      %p127 = scmp.eq.s32.totalorder %s26, 1
      %p128 = scmp.ne.s32.totalorder %s123, %s125
      %p129 = scmp.eq.s32.totalorder %s26, 0
      %p130 = por %p128, %p129
      %p131 = scmp.ne.s32.totalorder %s123, %s125
      %p132 = scmp.eq.s32.totalorder %s31, 1
      %p133 = por %p131, %p132
      %p134 = scmp.ne.s32.totalorder %s125, %s126
      %p135 = scmp.eq.s32.totalorder %s31, 0
      %p136 = por %p134, %p135
      %p137 = scmp.ne.s32.totalorder %s125, %s126
      %p138 = scmp.eq.s32.totalorder %s32, 1
      %p139 = por %p137, %p138
      %p141 = scmp.ne.s32.totalorder %s126, %s140
      %p142 = scmp.eq.s32.totalorder %s32, 0
      %p143 = por %p141, %p142
      %s145 = sadd.s32 %s144, 1
      %p148 = scmp.eq.s32.totalorder %s26, 1
      %p149 = scmp.ne.s32.totalorder %s144, %s146
      %p150 = scmp.eq.s32.totalorder %s26, 0
      %p151 = por %p149, %p150
      %p152 = scmp.ne.s32.totalorder %s144, %s146
      %p153 = scmp.eq.s32.totalorder %s31, 1
      %p154 = por %p152, %p153
      %p155 = scmp.ne.s32.totalorder %s146, %s147
      %p156 = scmp.eq.s32.totalorder %s31, 0
      %p157 = por %p155, %p156
      %p158 = scmp.ne.s32.totalorder %s146, %s147
      %p159 = scmp.eq.s32.totalorder %s32, 1
      %p160 = por %p158, %p159
      %p162 = scmp.ne.s32.totalorder %s147, %s161
      %p163 = scmp.eq.s32.totalorder %s32, 0
      %p164 = por %p162, %p163
      %s166 = sadd.s32 %s165, 1
      %p169 = scmp.eq.s32.totalorder %s26, 1
      %p170 = scmp.ne.s32.totalorder %s165, %s167
      %p171 = scmp.eq.s32.totalorder %s26, 0
      %p172 = por %p170, %p171
      %p173 = scmp.ne.s32.totalorder %s165, %s167
      %p174 = scmp.eq.s32.totalorder %s31, 1
      %p175 = por %p173, %p174
      %p176 = scmp.ne.s32.totalorder %s167, %s168
      %p177 = scmp.eq.s32.totalorder %s31, 0
      %p178 = por %p176, %p177
      %p179 = scmp.ne.s32.totalorder %s167, %s168
      %p180 = scmp.eq.s32.totalorder %s32, 1
      %p181 = por %p179, %p180
      %p183 = scmp.ne.s32.totalorder %s168, %s182
      %p184 = scmp.eq.s32.totalorder %s32, 0
      %p185 = por %p183, %p184
      %s187 = sadd.s32 %s186, 1
      %p190 = scmp.eq.s32.totalorder %s26, 1
      %p191 = scmp.ne.s32.totalorder %s186, %s188
      %p192 = scmp.eq.s32.totalorder %s26, 0
      %p193 = por %p191, %p192
      %p194 = scmp.ne.s32.totalorder %s186, %s188
      %p195 = scmp.eq.s32.totalorder %s31, 1
      %p196 = por %p194, %p195
      %p197 = scmp.ne.s32.totalorder %s188, %s189
      %p198 = scmp.eq.s32.totalorder %s31, 0
      %p199 = por %p197, %p198
      %p200 = scmp.ne.s32.totalorder %s188, %s189
      %p201 = scmp.eq.s32.totalorder %s32, 1
      %p202 = por %p200, %p201
      %p204 = scmp.ne.s32.totalorder %s189, %s203
      %p205 = scmp.eq.s32.totalorder %s32, 0
      %p206 = por %p204, %p205
      %s208 = sadd.s32 %s207, 1
      %p211 = scmp.eq.s32.totalorder %s26, 1
      %p212 = scmp.ne.s32.totalorder %s207, %s209
      %p213 = scmp.eq.s32.totalorder %s26, 0
      %p214 = por %p212, %p213
      %p215 = scmp.ne.s32.totalorder %s207, %s209
      %p216 = scmp.eq.s32.totalorder %s31, 1
      %p217 = por %p215, %p216
      %p218 = scmp.ne.s32.totalorder %s209, %s210
      %p219 = scmp.eq.s32.totalorder %s31, 0
      %p220 = por %p218, %p219
      %p221 = scmp.ne.s32.totalorder %s209, %s210
      %p222 = scmp.eq.s32.totalorder %s32, 1
      %p223 = por %p221, %p222
      %p225 = scmp.ne.s32.totalorder %s210, %s224
      %p226 = scmp.eq.s32.totalorder %s32, 0
      %p227 = por %p225, %p226
      %s229 = sadd.s32 %s228, 1
      %p232 = scmp.eq.s32.totalorder %s26, 1
      %p233 = scmp.ne.s32.totalorder %s228, %s230
      %p234 = scmp.eq.s32.totalorder %s26, 0
      %p235 = por %p233, %p234
      %p236 = scmp.ne.s32.totalorder %s228, %s230
      %p237 = scmp.eq.s32.totalorder %s31, 1
      %p238 = por %p236, %p237
      %p239 = scmp.ne.s32.totalorder %s230, %s231
      %p240 = scmp.eq.s32.totalorder %s31, 0
      %p241 = por %p239, %p240
      %p242 = scmp.ne.s32.totalorder %s230, %s231
      %p243 = scmp.eq.s32.totalorder %s32, 1
      %p244 = por %p242, %p243
      %p246 = scmp.ne.s32.totalorder %s231, %s245
      %p247 = scmp.eq.s32.totalorder %s32, 0
      %p248 = por %p246, %p247
      %s250 = sadd.s32 %s249, 1
      %p253 = scmp.eq.s32.totalorder %s26, 1
      %p254 = scmp.ne.s32.totalorder %s249, %s251
      %p255 = scmp.eq.s32.totalorder %s26, 0
      %p256 = por %p254, %p255
      %p257 = scmp.ne.s32.totalorder %s249, %s251
      %p258 = scmp.eq.s32.totalorder %s31, 1
      %p259 = por %p257, %p258
      %p260 = scmp.ne.s32.totalorder %s251, %s252
      %p261 = scmp.eq.s32.totalorder %s31, 0
      %p262 = por %p260, %p261
      %p263 = scmp.ne.s32.totalorder %s251, %s252
      %p264 = scmp.eq.s32.totalorder %s32, 1
      %p265 = por %p263, %p264
      %p267 = scmp.ne.s32.totalorder %s252, %s266
      %p268 = scmp.eq.s32.totalorder %s32, 0
      %p269 = por %p267, %p268
      %s271 = sadd.s32 %s270, 1
      %p274 = scmp.eq.s32.totalorder %s26, 1
      %p275 = scmp.ne.s32.totalorder %s270, %s272
      %p276 = scmp.eq.s32.totalorder %s26, 0
      %p277 = por %p275, %p276
      %p278 = scmp.ne.s32.totalorder %s270, %s272
      %p279 = scmp.eq.s32.totalorder %s31, 1
      %p280 = por %p278, %p279
      %p281 = scmp.ne.s32.totalorder %s272, %s273
      %p282 = scmp.eq.s32.totalorder %s31, 0
      %p283 = por %p281, %p282
      %p284 = scmp.ne.s32.totalorder %s272, %s273
      %p285 = scmp.eq.s32.totalorder %s32, 1
      %p286 = por %p284, %p285
      %p288 = scmp.ne.s32.totalorder %s273, %s287
      %p289 = scmp.eq.s32.totalorder %s32, 0
      %p290 = por %p288, %p289
      %s292 = sadd.s32 %s291, 1
      %p295 = scmp.eq.s32.totalorder %s26, 1
      %p296 = scmp.ne.s32.totalorder %s291, %s293
      %p297 = scmp.eq.s32.totalorder %s26, 0
      %p298 = por %p296, %p297
      %p299 = scmp.ne.s32.totalorder %s291, %s293
      %p300 = scmp.eq.s32.totalorder %s31, 1
      %p301 = por %p299, %p300
      %p302 = scmp.ne.s32.totalorder %s293, %s294
      %p303 = scmp.eq.s32.totalorder %s31, 0
      %p304 = por %p302, %p303
      %p305 = scmp.ne.s32.totalorder %s293, %s294
      %p306 = scmp.eq.s32.totalorder %s32, 1
      %p307 = por %p305, %p306
      %p309 = scmp.ne.s32.totalorder %s294, %s308
      %p310 = scmp.eq.s32.totalorder %s32, 0
      %p311 = por %p309, %p310
      %s313 = sadd.s32 %s312, 1
      %p316 = scmp.eq.s32.totalorder %s26, 1
      %p317 = scmp.ne.s32.totalorder %s312, %s314
      %p318 = scmp.eq.s32.totalorder %s26, 0
      %p319 = por %p317, %p318
      %p320 = scmp.ne.s32.totalorder %s312, %s314
      %p321 = scmp.eq.s32.totalorder %s31, 1
      %p322 = por %p320, %p321
      %p323 = scmp.ne.s32.totalorder %s314, %s315
      %p324 = scmp.eq.s32.totalorder %s31, 0
      %p325 = por %p323, %p324
      %p326 = scmp.ne.s32.totalorder %s314, %s315
      %p327 = scmp.eq.s32.totalorder %s32, 1
      %p328 = por %p326, %p327
      %p330 = scmp.ne.s32.totalorder %s315, %s329
      %p331 = scmp.eq.s32.totalorder %s32, 0
      %p332 = por %p330, %p331
      %s334 = sadd.s32 %s333, 1
      %p337 = scmp.eq.s32.totalorder %s26, 1
      %p338 = scmp.ne.s32.totalorder %s333, %s335
      %p339 = scmp.eq.s32.totalorder %s26, 0
      %p340 = por %p338, %p339
      %p341 = scmp.ne.s32.totalorder %s333, %s335
      %p342 = scmp.eq.s32.totalorder %s31, 1
      %p343 = por %p341, %p342
      %p344 = scmp.ne.s32.totalorder %s335, %s336
      %p345 = scmp.eq.s32.totalorder %s31, 0
      %p346 = por %p344, %p345
      %p347 = scmp.ne.s32.totalorder %s335, %s336
      %p348 = scmp.eq.s32.totalorder %s32, 1
      %p349 = por %p347, %p348
      %p351 = scmp.ne.s32.totalorder %s336, %s350
      %p352 = scmp.eq.s32.totalorder %s32, 0
      %p353 = por %p351, %p352
      %s355 = sadd.s32 %s354, 1
      %p358 = scmp.eq.s32.totalorder %s26, 1
      %p359 = scmp.ne.s32.totalorder %s354, %s356
      %p360 = scmp.eq.s32.totalorder %s26, 0
      %p361 = por %p359, %p360
      %p362 = scmp.ne.s32.totalorder %s354, %s356
      %p363 = scmp.eq.s32.totalorder %s31, 1
      %p364 = por %p362, %p363
      %p365 = scmp.ne.s32.totalorder %s356, %s357
      %p366 = scmp.eq.s32.totalorder %s31, 0
      %p367 = por %p365, %p366
      %p368 = scmp.ne.s32.totalorder %s356, %s357
      %p369 = scmp.eq.s32.totalorder %s32, 1
      %p370 = por %p368, %p369
      %p372 = scmp.ne.s32.totalorder %s357, %s371
      %p373 = scmp.eq.s32.totalorder %s32, 0
      %p374 = por %p372, %p373
      %s376 = sadd.s32 %s375, 1
      %p379 = scmp.eq.s32.totalorder %s26, 1
      %p380 = scmp.ne.s32.totalorder %s375, %s377
      %p381 = scmp.eq.s32.totalorder %s26, 0
      %p382 = por %p380, %p381
      %p383 = scmp.ne.s32.totalorder %s375, %s377
      %p384 = scmp.eq.s32.totalorder %s31, 1
      %p385 = por %p383, %p384
      %p386 = scmp.ne.s32.totalorder %s377, %s378
      %p387 = scmp.eq.s32.totalorder %s31, 0
      %p388 = por %p386, %p387
      %p389 = scmp.ne.s32.totalorder %s377, %s378
      %p390 = scmp.eq.s32.totalorder %s32, 1
      %p391 = por %p389, %p390
      %p393 = scmp.ne.s32.totalorder %s378, %s392
      %p394 = scmp.eq.s32.totalorder %s32, 0
      %p395 = por %p393, %p394
      %s396 = ssub.s32 %s26, %s33
      %p397 = scmp.eq.s32.totalorder %s396, 0
      %s399 = sadd.s32 %s398, 1
      %s400 = scalar_select %p397, %s398, %s399
      %p403 = pneg %p397
      %p404 = scmp.eq.s32.totalorder %s26, 1
      %p405 = por %p403, %p404
      %p406 = scmp.ne.s32.totalorder %s398, %s401
      %p407 = scmp.eq.s32.totalorder %s26, 0
      %p408 = por %p406, %p407
      %p409 = scmp.ne.s32.totalorder %s398, %s401
      %p410 = scmp.eq.s32.totalorder %s31, 1
      %p411 = por %p409, %p410
      %p412 = scmp.ne.s32.totalorder %s401, %s402
      %p413 = scmp.eq.s32.totalorder %s31, 0
      %p414 = por %p412, %p413
      %p415 = scmp.ne.s32.totalorder %s401, %s402
      %p416 = scmp.eq.s32.totalorder %s32, 1
      %p417 = por %p415, %p416
      %p419 = scmp.ne.s32.totalorder %s402, %s418
      %p420 = scmp.eq.s32.totalorder %s32, 0
      %p421 = por %p419, %p420
      %p422 = scmp.le.s32.totalorder 1, %s26
      %p423 = scmp.lt.s32.totalorder %s26, 3
      %p424 = pnand %p422, %p423
      %p425 = pneg %p424
      // Predicated region
      $region9: #{net_forward.1} parent=5 // pred_check
        _
      $region10: #{net_forward.1} parent=5 // pred_check_branch
        %427 = sbr.rel (%p424) target = $region12
      $region11: #{net_forward.1} parent=5 // pred_region
        %s428 = ssub.s32 %s26, 1
        // Predicated region
        $region13: #{net_forward.1} parent=11 // pred_check
          %p429 = pneg %p73
        $region14: #{net_forward.1} parent=11 // pred_check_branch
          %431 = sbr.rel (%p429) target = $region16
        $region15: #{net_forward.1} parent=11 // pred_region
          _
        $region16: #{net_forward.1} parent=11 // pred_fallthru
          _
        // Predicated region
        $region17: #{net_forward.1} parent=11 // pred_check
          %p432 = pneg %p94
        $region18: #{net_forward.1} parent=11 // pred_check_branch
          %434 = sbr.rel (%p432) target = $region20
        $region19: #{net_forward.1} parent=11 // pred_region
          _
        $region20: #{net_forward.1} parent=11 // pred_fallthru
          _
        // Predicated region
        $region21: #{net_forward.1} parent=11 // pred_check
          %p435 = pneg %p115
        $region22: #{net_forward.1} parent=11 // pred_check_branch
          %437 = sbr.rel (%p435) target = $region24
        $region23: #{net_forward.1} parent=11 // pred_region
          _
        $region24: #{net_forward.1} parent=11 // pred_fallthru
          _
        // Predicated region
        $region25: #{net_forward.1} parent=11 // pred_check
          %p438 = pneg %p136
        $region26: #{net_forward.1} parent=11 // pred_check_branch
          %440 = sbr.rel (%p438) target = $region28
        $region27: #{net_forward.1} parent=11 // pred_region
          _
        $region28: #{net_forward.1} parent=11 // pred_fallthru
          _
        // Predicated region
        $region29: #{net_forward.1} parent=11 // pred_check
          %p441 = pneg %p157
        $region30: #{net_forward.1} parent=11 // pred_check_branch
          %443 = sbr.rel (%p441) target = $region32
        $region31: #{net_forward.1} parent=11 // pred_region
          _
        $region32: #{net_forward.1} parent=11 // pred_fallthru
          _
        // Predicated region
        $region33: #{net_forward.1} parent=11 // pred_check
          %p444 = pneg %p178
        $region34: #{net_forward.1} parent=11 // pred_check_branch
          %446 = sbr.rel (%p444) target = $region36
        $region35: #{net_forward.1} parent=11 // pred_region
          _
        $region36: #{net_forward.1} parent=11 // pred_fallthru
          _
        // Predicated region
        $region37: #{net_forward.1} parent=11 // pred_check
          %p447 = pneg %p199
        $region38: #{net_forward.1} parent=11 // pred_check_branch
          %449 = sbr.rel (%p447) target = $region40
        $region39: #{net_forward.1} parent=11 // pred_region
          _
        $region40: #{net_forward.1} parent=11 // pred_fallthru
          _
        // Predicated region
        $region41: #{net_forward.1} parent=11 // pred_check
          %p450 = pneg %p220
        $region42: #{net_forward.1} parent=11 // pred_check_branch
          %452 = sbr.rel (%p450) target = $region44
        $region43: #{net_forward.1} parent=11 // pred_region
          _
        $region44: #{net_forward.1} parent=11 // pred_fallthru
          _
        // Predicated region
        $region45: #{net_forward.1} parent=11 // pred_check
          %p453 = pneg %p241
        $region46: #{net_forward.1} parent=11 // pred_check_branch
          %455 = sbr.rel (%p453) target = $region48
        $region47: #{net_forward.1} parent=11 // pred_region
          _
        $region48: #{net_forward.1} parent=11 // pred_fallthru
          _
        // Predicated region
        $region49: #{net_forward.1} parent=11 // pred_check
          %p456 = pneg %p262
        $region50: #{net_forward.1} parent=11 // pred_check_branch
          %458 = sbr.rel (%p456) target = $region52
        $region51: #{net_forward.1} parent=11 // pred_region
          _
        $region52: #{net_forward.1} parent=11 // pred_fallthru
          _
        // Predicated region
        $region53: #{net_forward.1} parent=11 // pred_check
          %p459 = pneg %p283
        $region54: #{net_forward.1} parent=11 // pred_check_branch
          %461 = sbr.rel (%p459) target = $region56
        $region55: #{net_forward.1} parent=11 // pred_region
          _
        $region56: #{net_forward.1} parent=11 // pred_fallthru
          _
        // Predicated region
        $region57: #{net_forward.1} parent=11 // pred_check
          %p462 = pneg %p304
        $region58: #{net_forward.1} parent=11 // pred_check_branch
          %464 = sbr.rel (%p462) target = $region60
        $region59: #{net_forward.1} parent=11 // pred_region
          _
        $region60: #{net_forward.1} parent=11 // pred_fallthru
          _
        // Predicated region
        $region61: #{net_forward.1} parent=11 // pred_check
          %p465 = pneg %p325
        $region62: #{net_forward.1} parent=11 // pred_check_branch
          %467 = sbr.rel (%p465) target = $region64
        $region63: #{net_forward.1} parent=11 // pred_region
          _
        $region64: #{net_forward.1} parent=11 // pred_fallthru
          _
        // Predicated region
        $region65: #{net_forward.1} parent=11 // pred_check
          %p468 = pneg %p346
        $region66: #{net_forward.1} parent=11 // pred_check_branch
          %470 = sbr.rel (%p468) target = $region68
        $region67: #{net_forward.1} parent=11 // pred_region
          _
        $region68: #{net_forward.1} parent=11 // pred_fallthru
          _
        // Predicated region
        $region69: #{net_forward.1} parent=11 // pred_check
          %p471 = pneg %p367
        $region70: #{net_forward.1} parent=11 // pred_check_branch
          %473 = sbr.rel (%p471) target = $region72
        $region71: #{net_forward.1} parent=11 // pred_region
          _
        $region72: #{net_forward.1} parent=11 // pred_fallthru
          _
        // Predicated region
        $region73: #{net_forward.1} parent=11 // pred_check
          %p474 = pneg %p388
        $region74: #{net_forward.1} parent=11 // pred_check_branch
          %476 = sbr.rel (%p474) target = $region76
        $region75: #{net_forward.1} parent=11 // pred_region
          _
        $region76: #{net_forward.1} parent=11 // pred_fallthru
          _
      $region12: #{net_forward.1} parent=5 // pred_fallthru
        _
      %p477 = scmp.lt.s32.totalorder %s26, 2
      // Predicated region
      $region77: #{net_forward.1} parent=5 // pred_check
        %p478 = pneg %p477
      $region78: #{net_forward.1} parent=5 // pred_check_branch
        %480 = sbr.rel (%p478) target = $region80
      $region79: #{net_forward.1} parent=5 // pred_region
        // Predicated region
        $region81: #{net_forward.1} parent=79 // pred_check
          %p481 = pneg %p46
        $region82: #{net_forward.1} parent=79 // pred_check_branch
          %483 = sbr.rel (%p481) target = $region84
        $region83: #{net_forward.1} parent=79 // pred_region
          %s484 = smul.u32 8, %s26
          %p485 = scmp.lt.s32.totalorder %s484, 15
          %s486 = scalar_select %p485, %s484, 15
          %s487 = smul.addr %s486, 4
          %s488 = smul.addr %s487, 8
          %s489 = scalar_lea.vmem %s0, %s488
          %s490 = smul.u32 8, %s26
        $region84: #{net_forward.1} parent=79 // pred_fallthru
          _
      $region80: #{net_forward.1} parent=5 // pred_fallthru
        _
      %p491 = scmp.le.s32.totalorder 1, %s26
      %p492 = scmp.lt.s32.totalorder %s26, 3
      %p493 = pnand %p491, %p492
      %p494 = pneg %p493
      // Predicated region
      $region85: #{net_forward.1} parent=5 // pred_check
        _
      $region86: #{net_forward.1} parent=5 // pred_check_branch
        %496 = sbr.rel (%p493) target = $region88
      $region87: #{net_forward.1} parent=5 // pred_region
        %s497 = ssub.s32 %s26, 1
        %s498 = smul.u32 8, %s31
        %p499 = scmp.lt.s32.totalorder %s498, 15
        %s500 = scalar_select %p499, %s498, 15
        %s501 = smul.addr %s500, 4
        %s502 = smul.addr %s501, 8
        %s503 = scalar_lea.vmem %s0, %s502
        %p504 = pneg %p52
        %p505 = pneg %p49
        %p506 = pneg %p73
        %p507 = pneg %p70
        %p508 = pneg %p94
        %p509 = pneg %p91
        %p510 = pneg %p115
        %p511 = pneg %p112
        %p512 = pneg %p136
        %p513 = pneg %p133
        %p514 = pneg %p157
        %p515 = pneg %p154
        %p516 = pneg %p178
        %p517 = pneg %p175
        %p518 = pneg %p199
        %p519 = pneg %p196
        %p520 = pneg %p220
        %p521 = pneg %p217
        %p522 = pneg %p241
        %p523 = pneg %p238
        %p524 = pneg %p262
        %p525 = pneg %p259
        %p526 = pneg %p283
        %p527 = pneg %p280
        %p528 = pneg %p304
        %p529 = pneg %p301
        %p530 = pneg %p325
        %p531 = pneg %p322
        %p532 = pneg %p346
        %p533 = pneg %p343
        %p534 = pneg %p367
        %p535 = pneg %p364
        %p536 = pneg %p388
        %p537 = pneg %p385
        %p538 = pneg %p414
        %p539 = pneg %p411
        %s540 = sand.u32 %s401, 1
        %s541 = scalar_lea.sflag [#allocation3], %s540
        %s542 = sand.u32 %s401, 1
        %s543 = smul.addr %s542, 8
        %s544 = scalar_lea.vmem [#allocation2], %s543
        %s545 = smul.u32 8, %s31
        %p546 = scmp.lt.s32.totalorder %s545, 15
        %s547 = scalar_select %p546, %s545, 15
        %s548 = smul.addr %s547, 4
        %s549 = smul.addr %s548, 8
        %s550 = scalar_lea.vmem %s0, %s549
        %s551 = smul.u32 8, %s31
        %v553 = vld [vmem:[%s550] sm:$0xff]
        %v554 = vld [vmem:[%s550 + $0x8] sm:$0xff]
        %v555 = vld [vmem:[%s550 + $0x10] sm:$0xff]
        %v556 = vld [vmem:[%s550 + $0x18] sm:$0xf]
        %v557 = vld [vmem:[%s550 + $0x20] sm:$0xff]
        %v558 = vld [vmem:[%s550 + $0x28] sm:$0xff]
        %v559 = vld [vmem:[%s550 + $0x30] sm:$0xff]
        %v560 = vld [vmem:[%s550 + $0x38] sm:$0xf]
        %v561 = vld [vmem:[%s550 + $0x40] sm:$0xff]
        %v562 = vld [vmem:[%s550 + $0x48] sm:$0xff]
        %v563 = vld [vmem:[%s550 + $0x50] sm:$0xff]
        %v564 = vld [vmem:[%s550 + $0x58] sm:$0xf]
        %v565 = vld [vmem:[%s550 + $0x60] sm:$0xff]
        %v566 = vld [vmem:[%s550 + $0x68] sm:$0xff]
        %v567 = vld [vmem:[%s550 + $0x70] sm:$0xff]
        %v568 = vld [vmem:[%s550 + $0x78] sm:$0xf]
        %v569 = vld [vmem:[%s550 + $0x80] sm:$0xff]
        %v570 = vld [vmem:[%s550 + $0x88] sm:$0xff]
        %v571 = vld [vmem:[%s550 + $0x90] sm:$0xff]
        %v572 = vld [vmem:[%s550 + $0x98] sm:$0xf]
        %v573 = vld [vmem:[%s550 + $0xa0] sm:$0xff]
        %v574 = vld [vmem:[%s550 + $0xa8] sm:$0xff]
        %v575 = vld [vmem:[%s550 + $0xb0] sm:$0xff]
        %v576 = vld [vmem:[%s550 + $0xb8] sm:$0xf]
        %v577 = vld [vmem:[%s550 + $0xc0] sm:$0xff]
        %v578 = vld [vmem:[%s550 + $0xc8] sm:$0xff]
        %v579 = vld [vmem:[%s550 + $0xd0] sm:$0xff]
        %v580 = vld [vmem:[%s550 + $0xd8] sm:$0xf]
        %v581 = vld [vmem:[%s550 + $0xe0] sm:$0xff]
        %v582 = vld [vmem:[%s550 + $0xe8] sm:$0xff]
        %v583 = vld [vmem:[%s550 + $0xf0] sm:$0xff]
        %v584 = vld [vmem:[%s550 + $0xf8] sm:$0xf]
        %v585 = vld [vmem:[%s2] sm:$0x3]
        %v586 = vpack.c.bf16 %v554, %v553
        %v587 = vpack.c.bf16 %v557, %v555
        %v588 = vpack.c.bf16 %v559, %v558
        %v589 = vpack.c.bf16 %v562, %v561
        %v590 = vpack.c.bf16 %v565, %v563
        %v591 = vpack.c.bf16 %v567, %v566
        %v592 = vpack.c.bf16 %v570, %v569
        %v593 = vpack.c.bf16 %v573, %v571
        %v594 = vpack.c.bf16 %v575, %v574
        %v595 = vpack.c.bf16 %v578, %v577
        %v596 = vpack.c.bf16 %v581, %v579
        %v597 = vpack.c.bf16 %v583, %v582
        %v598 = vld [vmem:[%s1] sm:$0xff]
        %v599 = vld [vmem:[%s1 + $0x8] sm:$0xff]
        %v600 = vld [vmem:[%s1 + $0x10] sm:$0xff]
        %v601 = vld [vmem:[%s1 + $0x18] sm:$0x33]
        %v606 = vunpack.c.l.b16 %v598
        %v607 = vunpack.c.h.b16 %v598
        %v608 = vunpack.c.l.b16 %v599
        %v609 = vunpack.c.h.b16 %v599
        %v610 = vunpack.c.l.b16 %v600
        %v611 = vunpack.c.h.b16 %v600
        %v612 = vunpack.c.l.b16 %v601
        %v613 = vunpack.c.h.b16 %v601
        %v614 = vpack.c.b16 %v608, %v606
        %v615 = vpack.c.b16 %v609, %v607
        %v616 = vpack.c.b16 %v612, %v610
        %v617 = vpack.c.b16 %v613, %v611
        %vm620 = vcmask 228352
        %v622 = vsel %vm620, %v586, 0
        %v625 = vsel %vm620, %v587, 0
        %v628 = vsel %vm620, %v588, 0
        %v631 = vsel %vm620, %v589, 0
        %v634 = vsel %vm620, %v590, 0
        %v637 = vsel %vm620, %v591, 0
        %v640 = vsel %vm620, %v592, 0
        %v643 = vsel %vm620, %v593, 0
        %v646 = vsel %vm620, %v594, 0
        %v649 = vsel %vm620, %v595, 0
        %v652 = vsel %vm620, %v596, 0
        %v655 = vsel %vm620, %v597, 0
        %vm657 = vcmask 1045504
        %v659 = vsel %vm657, %v616, 0
        %v662 = vsel %vm657, %v617, 0
        %664 = vmatprep.subr.bf16.mxu0 0
        %665 = vmatpush1.bf16.msra.mxu0 0
        %666 = vmatprep.subr.bf16.mxu0 0
        %667 = vmatpush1.bf16.msra.mxu0 0
        %668 = vmatprep.subr.bf16.mxu0 0
        %669 = vmatpush1.bf16.msra.mxu0 0
        %670 = vmatprep.subr.bf16.mxu0 0
        %671 = vmatpush1.bf16.msra.mxu0 0
        %672 = vmatprep.subr.bf16.mxu0 0
        %673 = vmatpush1.bf16.msra.mxu0 0
        %674 = vmatprep.subr.bf16.mxu0 0
        %675 = vmatpush1.bf16.msra.mxu0 0
        %676 = vmatprep.subr.bf16.mxu0 %v662
        %677 = vmatpush1.bf16.msra.mxu0 %v659
        %678 = vmatprep.subr.bf16.mxu0 %v615
        %679 = vmatpush1.bf16.msra.mxu0 %v614
        %680 = vmatprep.subr.bf16.mxu0 0
        %681 = vmatpush2.bf16.msra.mxu0 0
        %682 = vmatprep.subr.bf16.mxu0 0
        %683 = vmatpush2.bf16.msra.mxu0 0
        %684 = vmatprep.subr.bf16.mxu0 0
        %685 = vmatpush2.bf16.msra.mxu0 0
        %686 = vmatprep.subr.bf16.mxu0 0
        %687 = vmatpush2.bf16.msra.mxu0 0
        %688 = vmatprep.subr.bf16.mxu0 0
        %689 = vmatpush2.bf16.msra.mxu0 0
        %690 = vmatprep.subr.bf16.mxu0 0
        %691 = vmatpush2.bf16.msra.mxu0 0
        %692 = vmatprep.subr.bf16.mxu0 0
        %693 = vmatpush2.bf16.msra.mxu0 0
        %694 = vmatprep.subr.bf16.mxu0 0
        %695 = vmatpush2.bf16.msra.mxu0 0
        %696 = vmatprep.mubr.bf16.mxu0 0
        %697 = vmatmul.mubr.bf16.gmra.mxu0 %v622
        %v698 = vpop.f32.mrf.mxu0
        %v699 = vadd.f32 0.0, %v698
        %v700 = vpop.f32.mrf.mxu0
        %v701 = vadd.f32 0.0, %v700
        %v702 = vpop.f32.mrf.mxu0
        %v703 = vadd.f32 0.0, %v702
        %v704 = vpop.f32.mrf.mxu0
        %v705 = vadd.f32 0.0, %v704
        %706 = vmatprep.mubr.bf16.mxu0 0
        %707 = vmatmul.mubr.bf16.gmra.mxu0 %v625
        %v708 = vpop.f32.mrf.mxu0
        %v709 = vadd.f32 0.0, %v708
        %v710 = vpop.f32.mrf.mxu0
        %v711 = vadd.f32 0.0, %v710
        %v712 = vpop.f32.mrf.mxu0
        %v713 = vadd.f32 0.0, %v712
        %v714 = vpop.f32.mrf.mxu0
        %v715 = vadd.f32 0.0, %v714
        %716 = vmatprep.mubr.bf16.mxu0 0
        %717 = vmatmul.mubr.bf16.gmra.mxu0 %v628
        %v718 = vpop.f32.mrf.mxu0
        %v719 = vadd.f32 0.0, %v718
        %v720 = vpop.f32.mrf.mxu0
        %v721 = vadd.f32 0.0, %v720
        %v722 = vpop.f32.mrf.mxu0
        %v723 = vadd.f32 0.0, %v722
        %v724 = vpop.f32.mrf.mxu0
        %v725 = vadd.f32 0.0, %v724
        %726 = vmatprep.mubr.bf16.mxu0 0
        %727 = vmatmul.mubr.bf16.gmra.mxu0 %v631
        %v728 = vpop.f32.mrf.mxu0
        %v729 = vadd.f32 0.0, %v728
        %v730 = vpop.f32.mrf.mxu0
        %v731 = vadd.f32 0.0, %v730
        %v732 = vpop.f32.mrf.mxu0
        %v733 = vadd.f32 0.0, %v732
        %v734 = vpop.f32.mrf.mxu0
        %v735 = vadd.f32 0.0, %v734
        %736 = vmatprep.mubr.bf16.mxu0 0
        %737 = vmatmul.mubr.bf16.gmra.mxu0 %v634
        %v738 = vpop.f32.mrf.mxu0
        %v739 = vadd.f32 0.0, %v738
        %v740 = vpop.f32.mrf.mxu0
        %v741 = vadd.f32 0.0, %v740
        %v742 = vpop.f32.mrf.mxu0
        %v743 = vadd.f32 0.0, %v742
        %v744 = vpop.f32.mrf.mxu0
        %v745 = vadd.f32 0.0, %v744
        %746 = vmatprep.mubr.bf16.mxu0 0
        %747 = vmatmul.mubr.bf16.gmra.mxu0 %v637
        %v748 = vpop.f32.mrf.mxu0
        %v749 = vadd.f32 0.0, %v748
        %v750 = vpop.f32.mrf.mxu0
        %v751 = vadd.f32 0.0, %v750
        %v752 = vpop.f32.mrf.mxu0
        %v753 = vadd.f32 0.0, %v752
        %v754 = vpop.f32.mrf.mxu0
        %v755 = vadd.f32 0.0, %v754
        %756 = vmatprep.mubr.bf16.mxu0 0
        %757 = vmatmul.mubr.bf16.gmra.mxu0 %v640
        %v758 = vpop.f32.mrf.mxu0
        %v759 = vadd.f32 0.0, %v758
        %v760 = vpop.f32.mrf.mxu0
        %v761 = vadd.f32 0.0, %v760
        %v762 = vpop.f32.mrf.mxu0
        %v763 = vadd.f32 0.0, %v762
        %v764 = vpop.f32.mrf.mxu0
        %v765 = vadd.f32 0.0, %v764
        %766 = vmatprep.mubr.bf16.mxu0 0
        %767 = vmatmul.mubr.bf16.gmra.mxu0 %v643
        %v768 = vpop.f32.mrf.mxu0
        %v769 = vadd.f32 0.0, %v768
        %v770 = vpop.f32.mrf.mxu0
        %v771 = vadd.f32 0.0, %v770
        %v772 = vpop.f32.mrf.mxu0
        %v773 = vadd.f32 0.0, %v772
        %v774 = vpop.f32.mrf.mxu0
        %v775 = vadd.f32 0.0, %v774
        %776 = vmatprep.mubr.bf16.mxu0 0
        %777 = vmatmul.mubr.bf16.gmra.mxu0 %v646
        %v778 = vpop.f32.mrf.mxu0
        %v779 = vadd.f32 0.0, %v778
        %v780 = vpop.f32.mrf.mxu0
        %v781 = vadd.f32 0.0, %v780
        %v782 = vpop.f32.mrf.mxu0
        %v783 = vadd.f32 0.0, %v782
        %v784 = vpop.f32.mrf.mxu0
        %v785 = vadd.f32 0.0, %v784
        %786 = vmatprep.mubr.bf16.mxu0 0
        %787 = vmatmul.mubr.bf16.gmra.mxu0 %v649
        %v788 = vpop.f32.mrf.mxu0
        %v789 = vadd.f32 0.0, %v788
        %v790 = vpop.f32.mrf.mxu0
        %v791 = vadd.f32 0.0, %v790
        %v792 = vpop.f32.mrf.mxu0
        %v793 = vadd.f32 0.0, %v792
        %v794 = vpop.f32.mrf.mxu0
        %v795 = vadd.f32 0.0, %v794
        %796 = vmatprep.mubr.bf16.mxu0 0
        %797 = vmatmul.mubr.bf16.gmra.mxu0 %v652
        %v798 = vpop.f32.mrf.mxu0
        %v799 = vadd.f32 0.0, %v798
        %v800 = vpop.f32.mrf.mxu0
        %v801 = vadd.f32 0.0, %v800
        %v802 = vpop.f32.mrf.mxu0
        %v803 = vadd.f32 0.0, %v802
        %v804 = vpop.f32.mrf.mxu0
        %v805 = vadd.f32 0.0, %v804
        %806 = vmatprep.mubr.bf16.mxu0 0
        %807 = vmatmul.mubr.bf16.gmra.mxu0 %v655
        %v808 = vpop.f32.mrf.mxu0
        %v809 = vadd.f32 0.0, %v808
        %v810 = vpop.f32.mrf.mxu0
        %v811 = vadd.f32 0.0, %v810
        %v812 = vpop.f32.mrf.mxu0
        %v813 = vadd.f32 0.0, %v812
        %v814 = vpop.f32.mrf.mxu0
        %v815 = vadd.f32 0.0, %v814
        %816 = vdwg.mxu0
        %v818 = vlaneseq
        %v819 = vshrl.u32 %v818, 7
        %v820 = vsub.s32 0, %v819
        %v821 = vrot.slane %v585, %v820
        %v822 = vlaneseq
        %v823 = vshrl.u32 %v822, 7
        %v824 = vsub.s32 1, %v823
        %v825 = vrot.slane %v585, %v824
        %v828 = vadd.f32 %v821, %v699
        %v829 = vadd.f32 %v825, %v701
        %v830 = vadd.f32 %v821, %v703
        %v831 = vadd.f32 %v825, %v705
        %v832 = vadd.f32 %v821, %v709
        %v833 = vadd.f32 %v825, %v711
        %v834 = vadd.f32 %v821, %v713
        %v835 = vadd.f32 %v825, %v715
        %v836 = vadd.f32 %v821, %v719
        %v837 = vadd.f32 %v825, %v721
        %v838 = vadd.f32 %v821, %v723
        %v839 = vadd.f32 %v825, %v725
        %v840 = vadd.f32 %v821, %v729
        %v841 = vadd.f32 %v825, %v731
        %v842 = vadd.f32 %v821, %v733
        %v843 = vadd.f32 %v825, %v735
        %v844 = vadd.f32 %v821, %v739
        %v845 = vadd.f32 %v825, %v741
        %v846 = vadd.f32 %v821, %v743
        %v847 = vadd.f32 %v825, %v745
        %v848 = vadd.f32 %v821, %v749
        %v849 = vadd.f32 %v825, %v751
        %v850 = vadd.f32 %v821, %v753
        %v851 = vadd.f32 %v825, %v755
        %v852 = vadd.f32 %v821, %v759
        %v853 = vadd.f32 %v825, %v761
        %v854 = vadd.f32 %v821, %v763
        %v855 = vadd.f32 %v825, %v765
        %v856 = vadd.f32 %v821, %v769
        %v857 = vadd.f32 %v825, %v771
        %v858 = vadd.f32 %v821, %v773
        %v859 = vadd.f32 %v825, %v775
        %v860 = vadd.f32 %v821, %v779
        %v861 = vadd.f32 %v825, %v781
        %v862 = vadd.f32 %v821, %v783
        %v863 = vadd.f32 %v825, %v785
        %v864 = vadd.f32 %v821, %v789
        %v865 = vadd.f32 %v825, %v791
        %v866 = vadd.f32 %v821, %v793
        %v867 = vadd.f32 %v825, %v795
        %v868 = vadd.f32 %v821, %v799
        %v869 = vadd.f32 %v825, %v801
        %v870 = vadd.f32 %v821, %v803
        %v871 = vadd.f32 %v825, %v805
        %v872 = vadd.f32 %v821, %v809
        %v873 = vadd.f32 %v825, %v811
        %v874 = vadd.f32 %v821, %v813
        %v875 = vadd.f32 %v825, %v815
        %vm908 = vcmask 1046528
        %v909 = vrot.slane %v553, 1
        %v910 = vrot.slane %v554, 1
        %v911 = vsel %vm908, %v909, %v910
        %v912 = vrot.slane %v555, 1
        %v913 = vsel %vm908, %v910, %v912
        %v914 = vrot.slane %v556, 1
        %v915 = vsel %vm908, %v912, %v914
        %v916 = vrot.slane %v557, 1
        %v917 = vrot.slane %v558, 1
        %v918 = vsel %vm908, %v916, %v917
        %v919 = vrot.slane %v559, 1
        %v920 = vsel %vm908, %v917, %v919
        %v921 = vrot.slane %v560, 1
        %v922 = vsel %vm908, %v919, %v921
        %v923 = vrot.slane %v561, 1
        %v924 = vrot.slane %v562, 1
        %v925 = vsel %vm908, %v923, %v924
        %v926 = vrot.slane %v563, 1
        %v927 = vsel %vm908, %v924, %v926
        %v928 = vrot.slane %v564, 1
        %v929 = vsel %vm908, %v926, %v928
        %v930 = vrot.slane %v565, 1
        %v931 = vrot.slane %v566, 1
        %v932 = vsel %vm908, %v930, %v931
        %v933 = vrot.slane %v567, 1
        %v934 = vsel %vm908, %v931, %v933
        %v935 = vrot.slane %v568, 1
        %v936 = vsel %vm908, %v933, %v935
        %v937 = vrot.slane %v569, 1
        %v938 = vrot.slane %v570, 1
        %v939 = vsel %vm908, %v937, %v938
        %v940 = vrot.slane %v571, 1
        %v941 = vsel %vm908, %v938, %v940
        %v942 = vrot.slane %v572, 1
        %v943 = vsel %vm908, %v940, %v942
        %v944 = vrot.slane %v573, 1
        %v945 = vrot.slane %v574, 1
        %v946 = vsel %vm908, %v944, %v945
        %v947 = vrot.slane %v575, 1
        %v948 = vsel %vm908, %v945, %v947
        %v949 = vrot.slane %v576, 1
        %v950 = vsel %vm908, %v947, %v949
        %v951 = vrot.slane %v577, 1
        %v952 = vrot.slane %v578, 1
        %v953 = vsel %vm908, %v951, %v952
        %v954 = vrot.slane %v579, 1
        %v955 = vsel %vm908, %v952, %v954
        %v956 = vrot.slane %v580, 1
        %v957 = vsel %vm908, %v954, %v956
        %v958 = vrot.slane %v581, 1
        %v959 = vrot.slane %v582, 1
        %v960 = vsel %vm908, %v958, %v959
        %v961 = vrot.slane %v583, 1
        %v962 = vsel %vm908, %v959, %v961
        %v963 = vrot.slane %v584, 1
        %v964 = vsel %vm908, %v961, %v963
        %v989 = vpack.c.bf16 %v913, %v911
        %v990 = vpack.c.bf16 %v918, %v915
        %v991 = vpack.c.bf16 %v922, %v920
        %v992 = vpack.c.bf16 %v927, %v925
        %v993 = vpack.c.bf16 %v932, %v929
        %v994 = vpack.c.bf16 %v936, %v934
        %v995 = vpack.c.bf16 %v941, %v939
        %v996 = vpack.c.bf16 %v946, %v943
        %v997 = vpack.c.bf16 %v950, %v948
        %v998 = vpack.c.bf16 %v955, %v953
        %v999 = vpack.c.bf16 %v960, %v957
        %v1000 = vpack.c.bf16 %v964, %v962
        %s1001 = scalar_lea.vmem %s1, 32
        %v1002 = vld [vmem:[%s1001] sm:$0xff]
        %v1003 = vld [vmem:[%s1001 + $0x8] sm:$0xff]
        %v1004 = vld [vmem:[%s1001 + $0x10] sm:$0xff]
        %v1005 = vld [vmem:[%s1001 + $0x18] sm:$0x33]
        %v1010 = vunpack.c.l.b16 %v1002
        %v1011 = vunpack.c.h.b16 %v1002
        %v1012 = vunpack.c.l.b16 %v1003
        %v1013 = vunpack.c.h.b16 %v1003
        %v1014 = vunpack.c.l.b16 %v1004
        %v1015 = vunpack.c.h.b16 %v1004
        %v1016 = vunpack.c.l.b16 %v1005
        %v1017 = vunpack.c.h.b16 %v1005
        %v1018 = vpack.c.b16 %v1012, %v1010
        %v1019 = vpack.c.b16 %v1013, %v1011
        %v1020 = vpack.c.b16 %v1016, %v1014
        %v1021 = vpack.c.b16 %v1017, %v1015
        %v1025 = vsel %vm620, %v989, 0
        %v1028 = vsel %vm620, %v990, 0
        %v1031 = vsel %vm620, %v991, 0
        %v1034 = vsel %vm620, %v992, 0
        %v1037 = vsel %vm620, %v993, 0
        %v1040 = vsel %vm620, %v994, 0
        %v1043 = vsel %vm620, %v995, 0
        %v1046 = vsel %vm620, %v996, 0
        %v1049 = vsel %vm620, %v997, 0
        %v1052 = vsel %vm620, %v998, 0
        %v1055 = vsel %vm620, %v999, 0
        %v1058 = vsel %vm620, %v1000, 0
        %v1061 = vsel %vm657, %v1020, 0
        %v1064 = vsel %vm657, %v1021, 0
        %1066 = vmatprep.subr.bf16.mxu0 0
        %1067 = vmatpush1.bf16.msra.mxu0 0
        %1068 = vmatprep.subr.bf16.mxu0 0
        %1069 = vmatpush1.bf16.msra.mxu0 0
        %1070 = vmatprep.subr.bf16.mxu0 0
        %1071 = vmatpush1.bf16.msra.mxu0 0
        %1072 = vmatprep.subr.bf16.mxu0 0
        %1073 = vmatpush1.bf16.msra.mxu0 0
        %1074 = vmatprep.subr.bf16.mxu0 0
        %1075 = vmatpush1.bf16.msra.mxu0 0
        %1076 = vmatprep.subr.bf16.mxu0 0
        %1077 = vmatpush1.bf16.msra.mxu0 0
        %1078 = vmatprep.subr.bf16.mxu0 %v1064
        %1079 = vmatpush1.bf16.msra.mxu0 %v1061
        %1080 = vmatprep.subr.bf16.mxu0 %v1019
        %1081 = vmatpush1.bf16.msra.mxu0 %v1018
        %1082 = vmatprep.subr.bf16.mxu0 0
        %1083 = vmatpush2.bf16.msra.mxu0 0
        %1084 = vmatprep.subr.bf16.mxu0 0
        %1085 = vmatpush2.bf16.msra.mxu0 0
        %1086 = vmatprep.subr.bf16.mxu0 0
        %1087 = vmatpush2.bf16.msra.mxu0 0
        %1088 = vmatprep.subr.bf16.mxu0 0
        %1089 = vmatpush2.bf16.msra.mxu0 0
        %1090 = vmatprep.subr.bf16.mxu0 0
        %1091 = vmatpush2.bf16.msra.mxu0 0
        %1092 = vmatprep.subr.bf16.mxu0 0
        %1093 = vmatpush2.bf16.msra.mxu0 0
        %1094 = vmatprep.subr.bf16.mxu0 0
        %1095 = vmatpush2.bf16.msra.mxu0 0
        %1096 = vmatprep.subr.bf16.mxu0 0
        %1097 = vmatpush2.bf16.msra.mxu0 0
        %1098 = vmatprep.mubr.bf16.mxu0 0
        %1099 = vmatmul.mubr.bf16.gmra.mxu0 %v1025
        %v1100 = vpop.f32.mrf.mxu0
        %v1101 = vadd.f32 0.0, %v1100
        %v1102 = vpop.f32.mrf.mxu0
        %v1103 = vadd.f32 0.0, %v1102
        %v1104 = vpop.f32.mrf.mxu0
        %v1105 = vadd.f32 0.0, %v1104
        %v1106 = vpop.f32.mrf.mxu0
        %v1107 = vadd.f32 0.0, %v1106
        %1108 = vmatprep.mubr.bf16.mxu0 0
        %1109 = vmatmul.mubr.bf16.gmra.mxu0 %v1028
        %v1110 = vpop.f32.mrf.mxu0
        %v1111 = vadd.f32 0.0, %v1110
        %v1112 = vpop.f32.mrf.mxu0
        %v1113 = vadd.f32 0.0, %v1112
        %v1114 = vpop.f32.mrf.mxu0
        %v1115 = vadd.f32 0.0, %v1114
        %v1116 = vpop.f32.mrf.mxu0
        %v1117 = vadd.f32 0.0, %v1116
        %1118 = vmatprep.mubr.bf16.mxu0 0
        %1119 = vmatmul.mubr.bf16.gmra.mxu0 %v1031
        %v1120 = vpop.f32.mrf.mxu0
        %v1121 = vadd.f32 0.0, %v1120
        %v1122 = vpop.f32.mrf.mxu0
        %v1123 = vadd.f32 0.0, %v1122
        %v1124 = vpop.f32.mrf.mxu0
        %v1125 = vadd.f32 0.0, %v1124
        %v1126 = vpop.f32.mrf.mxu0
        %v1127 = vadd.f32 0.0, %v1126
        %1128 = vmatprep.mubr.bf16.mxu0 0
        %1129 = vmatmul.mubr.bf16.gmra.mxu0 %v1034
        %v1130 = vpop.f32.mrf.mxu0
        %v1131 = vadd.f32 0.0, %v1130
        %v1132 = vpop.f32.mrf.mxu0
        %v1133 = vadd.f32 0.0, %v1132
        %v1134 = vpop.f32.mrf.mxu0
        %v1135 = vadd.f32 0.0, %v1134
        %v1136 = vpop.f32.mrf.mxu0
        %v1137 = vadd.f32 0.0, %v1136
        %1138 = vmatprep.mubr.bf16.mxu0 0
        %1139 = vmatmul.mubr.bf16.gmra.mxu0 %v1037
        %v1140 = vpop.f32.mrf.mxu0
        %v1141 = vadd.f32 0.0, %v1140
        %v1142 = vpop.f32.mrf.mxu0
        %v1143 = vadd.f32 0.0, %v1142
        %v1144 = vpop.f32.mrf.mxu0
        %v1145 = vadd.f32 0.0, %v1144
        %v1146 = vpop.f32.mrf.mxu0
        %v1147 = vadd.f32 0.0, %v1146
        %1148 = vmatprep.mubr.bf16.mxu0 0
        %1149 = vmatmul.mubr.bf16.gmra.mxu0 %v1040
        %v1150 = vpop.f32.mrf.mxu0
        %v1151 = vadd.f32 0.0, %v1150
        %v1152 = vpop.f32.mrf.mxu0
        %v1153 = vadd.f32 0.0, %v1152
        %v1154 = vpop.f32.mrf.mxu0
        %v1155 = vadd.f32 0.0, %v1154
        %v1156 = vpop.f32.mrf.mxu0
        %v1157 = vadd.f32 0.0, %v1156
        %1158 = vmatprep.mubr.bf16.mxu0 0
        %1159 = vmatmul.mubr.bf16.gmra.mxu0 %v1043
        %v1160 = vpop.f32.mrf.mxu0
        %v1161 = vadd.f32 0.0, %v1160
        %v1162 = vpop.f32.mrf.mxu0
        %v1163 = vadd.f32 0.0, %v1162
        %v1164 = vpop.f32.mrf.mxu0
        %v1165 = vadd.f32 0.0, %v1164
        %v1166 = vpop.f32.mrf.mxu0
        %v1167 = vadd.f32 0.0, %v1166
        %1168 = vmatprep.mubr.bf16.mxu0 0
        %1169 = vmatmul.mubr.bf16.gmra.mxu0 %v1046
        %v1170 = vpop.f32.mrf.mxu0
        %v1171 = vadd.f32 0.0, %v1170
        %v1172 = vpop.f32.mrf.mxu0
        %v1173 = vadd.f32 0.0, %v1172
        %v1174 = vpop.f32.mrf.mxu0
        %v1175 = vadd.f32 0.0, %v1174
        %v1176 = vpop.f32.mrf.mxu0
        %v1177 = vadd.f32 0.0, %v1176
        %1178 = vmatprep.mubr.bf16.mxu0 0
        %1179 = vmatmul.mubr.bf16.gmra.mxu0 %v1049
        %v1180 = vpop.f32.mrf.mxu0
        %v1181 = vadd.f32 0.0, %v1180
        %v1182 = vpop.f32.mrf.mxu0
        %v1183 = vadd.f32 0.0, %v1182
        %v1184 = vpop.f32.mrf.mxu0
        %v1185 = vadd.f32 0.0, %v1184
        %v1186 = vpop.f32.mrf.mxu0
        %v1187 = vadd.f32 0.0, %v1186
        %1188 = vmatprep.mubr.bf16.mxu0 0
        %1189 = vmatmul.mubr.bf16.gmra.mxu0 %v1052
        %v1190 = vpop.f32.mrf.mxu0
        %v1191 = vadd.f32 0.0, %v1190
        %v1192 = vpop.f32.mrf.mxu0
        %v1193 = vadd.f32 0.0, %v1192
        %v1194 = vpop.f32.mrf.mxu0
        %v1195 = vadd.f32 0.0, %v1194
        %v1196 = vpop.f32.mrf.mxu0
        %v1197 = vadd.f32 0.0, %v1196
        %1198 = vmatprep.mubr.bf16.mxu0 0
        %1199 = vmatmul.mubr.bf16.gmra.mxu0 %v1055
        %v1200 = vpop.f32.mrf.mxu0
        %v1201 = vadd.f32 0.0, %v1200
        %v1202 = vpop.f32.mrf.mxu0
        %v1203 = vadd.f32 0.0, %v1202
        %v1204 = vpop.f32.mrf.mxu0
        %v1205 = vadd.f32 0.0, %v1204
        %v1206 = vpop.f32.mrf.mxu0
        %v1207 = vadd.f32 0.0, %v1206
        %1208 = vmatprep.mubr.bf16.mxu0 0
        %1209 = vmatmul.mubr.bf16.gmra.mxu0 %v1058
        %v1210 = vpop.f32.mrf.mxu0
        %v1211 = vadd.f32 0.0, %v1210
        %v1212 = vpop.f32.mrf.mxu0
        %v1213 = vadd.f32 0.0, %v1212
        %v1214 = vpop.f32.mrf.mxu0
        %v1215 = vadd.f32 0.0, %v1214
        %v1216 = vpop.f32.mrf.mxu0
        %v1217 = vadd.f32 0.0, %v1216
        %1218 = vdwg.mxu0
        %v1219 = vadd.f32 %v828, %v1101
        %v1220 = vadd.f32 %v829, %v1103
        %v1221 = vadd.f32 %v830, %v1105
        %v1222 = vadd.f32 %v831, %v1107
        %v1223 = vadd.f32 %v832, %v1111
        %v1224 = vadd.f32 %v833, %v1113
        %v1225 = vadd.f32 %v834, %v1115
        %v1226 = vadd.f32 %v835, %v1117
        %v1227 = vadd.f32 %v836, %v1121
        %v1228 = vadd.f32 %v837, %v1123
        %v1229 = vadd.f32 %v838, %v1125
        %v1230 = vadd.f32 %v839, %v1127
        %v1231 = vadd.f32 %v840, %v1131
        %v1232 = vadd.f32 %v841, %v1133
        %v1233 = vadd.f32 %v842, %v1135
        %v1234 = vadd.f32 %v843, %v1137
        %v1235 = vadd.f32 %v844, %v1141
        %v1236 = vadd.f32 %v845, %v1143
        %v1237 = vadd.f32 %v846, %v1145
        %v1238 = vadd.f32 %v847, %v1147
        %v1239 = vadd.f32 %v848, %v1151
        %v1240 = vadd.f32 %v849, %v1153
        %v1241 = vadd.f32 %v850, %v1155
        %v1242 = vadd.f32 %v851, %v1157
        %v1243 = vadd.f32 %v852, %v1161
        %v1244 = vadd.f32 %v853, %v1163
        %v1245 = vadd.f32 %v854, %v1165
        %v1246 = vadd.f32 %v855, %v1167
        %v1247 = vadd.f32 %v856, %v1171
        %v1248 = vadd.f32 %v857, %v1173
        %v1249 = vadd.f32 %v858, %v1175
        %v1250 = vadd.f32 %v859, %v1177
        %v1251 = vadd.f32 %v860, %v1181
        %v1252 = vadd.f32 %v861, %v1183
        %v1253 = vadd.f32 %v862, %v1185
        %v1254 = vadd.f32 %v863, %v1187
        %v1255 = vadd.f32 %v864, %v1191
        %v1256 = vadd.f32 %v865, %v1193
        %v1257 = vadd.f32 %v866, %v1195
        %v1258 = vadd.f32 %v867, %v1197
        %v1259 = vadd.f32 %v868, %v1201
        %v1260 = vadd.f32 %v869, %v1203
        %v1261 = vadd.f32 %v870, %v1205
        %v1262 = vadd.f32 %v871, %v1207
        %v1263 = vadd.f32 %v872, %v1211
        %v1264 = vadd.f32 %v873, %v1213
        %v1265 = vadd.f32 %v874, %v1215
        %v1266 = vadd.f32 %v875, %v1217
        %v1267 = vrot.slane %v553, 2
        %v1268 = vrot.slane %v554, 2
        %v1269 = vsel %vm657, %v1267, %v1268
        %v1270 = vrot.slane %v555, 2
        %v1271 = vsel %vm657, %v1268, %v1270
        %v1272 = vrot.slane %v556, 2
        %v1273 = vsel %vm657, %v1270, %v1272
        %v1274 = vrot.slane %v557, 2
        %v1275 = vrot.slane %v558, 2
        %v1276 = vsel %vm657, %v1274, %v1275
        %v1277 = vrot.slane %v559, 2
        %v1278 = vsel %vm657, %v1275, %v1277
        %v1279 = vrot.slane %v560, 2
        %v1280 = vsel %vm657, %v1277, %v1279
        %v1281 = vrot.slane %v561, 2
        %v1282 = vrot.slane %v562, 2
        %v1283 = vsel %vm657, %v1281, %v1282
        %v1284 = vrot.slane %v563, 2
        %v1285 = vsel %vm657, %v1282, %v1284
        %v1286 = vrot.slane %v564, 2
        %v1287 = vsel %vm657, %v1284, %v1286
        %v1288 = vrot.slane %v565, 2
        %v1289 = vrot.slane %v566, 2
        %v1290 = vsel %vm657, %v1288, %v1289
        %v1291 = vrot.slane %v567, 2
        %v1292 = vsel %vm657, %v1289, %v1291
        %v1293 = vrot.slane %v568, 2
        %v1294 = vsel %vm657, %v1291, %v1293
        %v1295 = vrot.slane %v569, 2
        %v1296 = vrot.slane %v570, 2
        %v1297 = vsel %vm657, %v1295, %v1296
        %v1298 = vrot.slane %v571, 2
        %v1299 = vsel %vm657, %v1296, %v1298
        %v1300 = vrot.slane %v572, 2
        %v1301 = vsel %vm657, %v1298, %v1300
        %v1302 = vrot.slane %v573, 2
        %v1303 = vrot.slane %v574, 2
        %v1304 = vsel %vm657, %v1302, %v1303
        %v1305 = vrot.slane %v575, 2
        %v1306 = vsel %vm657, %v1303, %v1305
        %v1307 = vrot.slane %v576, 2
        %v1308 = vsel %vm657, %v1305, %v1307
        %v1309 = vrot.slane %v577, 2
        %v1310 = vrot.slane %v578, 2
        %v1311 = vsel %vm657, %v1309, %v1310
        %v1312 = vrot.slane %v579, 2
        %v1313 = vsel %vm657, %v1310, %v1312
        %v1314 = vrot.slane %v580, 2
        %v1315 = vsel %vm657, %v1312, %v1314
        %v1316 = vrot.slane %v581, 2
        %v1317 = vrot.slane %v582, 2
        %v1318 = vsel %vm657, %v1316, %v1317
        %v1319 = vrot.slane %v583, 2
        %v1320 = vsel %vm657, %v1317, %v1319
        %v1321 = vrot.slane %v584, 2
        %v1322 = vsel %vm657, %v1319, %v1321
        %v1347 = vpack.c.bf16 %v1271, %v1269
        %v1348 = vpack.c.bf16 %v1276, %v1273
        %v1349 = vpack.c.bf16 %v1280, %v1278
        %v1350 = vpack.c.bf16 %v1285, %v1283
        %v1351 = vpack.c.bf16 %v1290, %v1287
        %v1352 = vpack.c.bf16 %v1294, %v1292
        %v1353 = vpack.c.bf16 %v1299, %v1297
        %v1354 = vpack.c.bf16 %v1304, %v1301
        %v1355 = vpack.c.bf16 %v1308, %v1306
        %v1356 = vpack.c.bf16 %v1313, %v1311
        %v1357 = vpack.c.bf16 %v1318, %v1315
        %v1358 = vpack.c.bf16 %v1322, %v1320
        %s1359 = scalar_lea.vmem %s1, 64
        %v1360 = vld [vmem:[%s1359] sm:$0xff]
        %v1361 = vld [vmem:[%s1359 + $0x8] sm:$0xff]
        %v1362 = vld [vmem:[%s1359 + $0x10] sm:$0xff]
        %v1363 = vld [vmem:[%s1359 + $0x18] sm:$0x33]
        %v1368 = vunpack.c.l.b16 %v1360
        %v1369 = vunpack.c.h.b16 %v1360
        %v1370 = vunpack.c.l.b16 %v1361
        %v1371 = vunpack.c.h.b16 %v1361
        %v1372 = vunpack.c.l.b16 %v1362
        %v1373 = vunpack.c.h.b16 %v1362
        %v1374 = vunpack.c.l.b16 %v1363
        %v1375 = vunpack.c.h.b16 %v1363
        %v1376 = vpack.c.b16 %v1370, %v1368
        %v1377 = vpack.c.b16 %v1371, %v1369
        %v1378 = vpack.c.b16 %v1374, %v1372
        %v1379 = vpack.c.b16 %v1375, %v1373
        %v1383 = vsel %vm620, %v1347, 0
        %v1386 = vsel %vm620, %v1348, 0
        %v1389 = vsel %vm620, %v1349, 0
        %v1392 = vsel %vm620, %v1350, 0
        %v1395 = vsel %vm620, %v1351, 0
        %v1398 = vsel %vm620, %v1352, 0
        %v1401 = vsel %vm620, %v1353, 0
        %v1404 = vsel %vm620, %v1354, 0
        %v1407 = vsel %vm620, %v1355, 0
        %v1410 = vsel %vm620, %v1356, 0
        %v1413 = vsel %vm620, %v1357, 0
        %v1416 = vsel %vm620, %v1358, 0
        %v1419 = vsel %vm657, %v1378, 0
        %v1422 = vsel %vm657, %v1379, 0
        %1424 = vmatprep.subr.bf16.mxu0 0
        %1425 = vmatpush1.bf16.msra.mxu0 0
        %1426 = vmatprep.subr.bf16.mxu0 0
        %1427 = vmatpush1.bf16.msra.mxu0 0
        %1428 = vmatprep.subr.bf16.mxu0 0
        %1429 = vmatpush1.bf16.msra.mxu0 0
        %1430 = vmatprep.subr.bf16.mxu0 0
        %1431 = vmatpush1.bf16.msra.mxu0 0
        %1432 = vmatprep.subr.bf16.mxu0 0
        %1433 = vmatpush1.bf16.msra.mxu0 0
        %1434 = vmatprep.subr.bf16.mxu0 0
        %1435 = vmatpush1.bf16.msra.mxu0 0
        %1436 = vmatprep.subr.bf16.mxu0 %v1422
        %1437 = vmatpush1.bf16.msra.mxu0 %v1419
        %1438 = vmatprep.subr.bf16.mxu0 %v1377
        %1439 = vmatpush1.bf16.msra.mxu0 %v1376
        %1440 = vmatprep.subr.bf16.mxu0 0
        %1441 = vmatpush2.bf16.msra.mxu0 0
        %1442 = vmatprep.subr.bf16.mxu0 0
        %1443 = vmatpush2.bf16.msra.mxu0 0
        %1444 = vmatprep.subr.bf16.mxu0 0
        %1445 = vmatpush2.bf16.msra.mxu0 0
        %1446 = vmatprep.subr.bf16.mxu0 0
        %1447 = vmatpush2.bf16.msra.mxu0 0
        %1448 = vmatprep.subr.bf16.mxu0 0
        %1449 = vmatpush2.bf16.msra.mxu0 0
        %1450 = vmatprep.subr.bf16.mxu0 0
        %1451 = vmatpush2.bf16.msra.mxu0 0
        %1452 = vmatprep.subr.bf16.mxu0 0
        %1453 = vmatpush2.bf16.msra.mxu0 0
        %1454 = vmatprep.subr.bf16.mxu0 0
        %1455 = vmatpush2.bf16.msra.mxu0 0
        %1456 = vmatprep.mubr.bf16.mxu0 0
        %1457 = vmatmul.mubr.bf16.gmra.mxu0 %v1383
        %v1458 = vpop.f32.mrf.mxu0
        %v1459 = vadd.f32 0.0, %v1458
        %v1460 = vpop.f32.mrf.mxu0
        %v1461 = vadd.f32 0.0, %v1460
        %v1462 = vpop.f32.mrf.mxu0
        %v1463 = vadd.f32 0.0, %v1462
        %v1464 = vpop.f32.mrf.mxu0
        %v1465 = vadd.f32 0.0, %v1464
        %1466 = vmatprep.mubr.bf16.mxu0 0
        %1467 = vmatmul.mubr.bf16.gmra.mxu0 %v1386
        %v1468 = vpop.f32.mrf.mxu0
        %v1469 = vadd.f32 0.0, %v1468
        %v1470 = vpop.f32.mrf.mxu0
        %v1471 = vadd.f32 0.0, %v1470
        %v1472 = vpop.f32.mrf.mxu0
        %v1473 = vadd.f32 0.0, %v1472
        %v1474 = vpop.f32.mrf.mxu0
        %v1475 = vadd.f32 0.0, %v1474
        %1476 = vmatprep.mubr.bf16.mxu0 0
        %1477 = vmatmul.mubr.bf16.gmra.mxu0 %v1389
        %v1478 = vpop.f32.mrf.mxu0
        %v1479 = vadd.f32 0.0, %v1478
        %v1480 = vpop.f32.mrf.mxu0
        %v1481 = vadd.f32 0.0, %v1480
        %v1482 = vpop.f32.mrf.mxu0
        %v1483 = vadd.f32 0.0, %v1482
        %v1484 = vpop.f32.mrf.mxu0
        %v1485 = vadd.f32 0.0, %v1484
        %1486 = vmatprep.mubr.bf16.mxu0 0
        %1487 = vmatmul.mubr.bf16.gmra.mxu0 %v1392
        %v1488 = vpop.f32.mrf.mxu0
        %v1489 = vadd.f32 0.0, %v1488
        %v1490 = vpop.f32.mrf.mxu0
        %v1491 = vadd.f32 0.0, %v1490
        %v1492 = vpop.f32.mrf.mxu0
        %v1493 = vadd.f32 0.0, %v1492
        %v1494 = vpop.f32.mrf.mxu0
        %v1495 = vadd.f32 0.0, %v1494
        %1496 = vmatprep.mubr.bf16.mxu0 0
        %1497 = vmatmul.mubr.bf16.gmra.mxu0 %v1395
        %v1498 = vpop.f32.mrf.mxu0
        %v1499 = vadd.f32 0.0, %v1498
        %v1500 = vpop.f32.mrf.mxu0
        %v1501 = vadd.f32 0.0, %v1500
        %v1502 = vpop.f32.mrf.mxu0
        %v1503 = vadd.f32 0.0, %v1502
        %v1504 = vpop.f32.mrf.mxu0
        %v1505 = vadd.f32 0.0, %v1504
        %1506 = vmatprep.mubr.bf16.mxu0 0
        %1507 = vmatmul.mubr.bf16.gmra.mxu0 %v1398
        %v1508 = vpop.f32.mrf.mxu0
        %v1509 = vadd.f32 0.0, %v1508
        %v1510 = vpop.f32.mrf.mxu0
        %v1511 = vadd.f32 0.0, %v1510
        %v1512 = vpop.f32.mrf.mxu0
        %v1513 = vadd.f32 0.0, %v1512
        %v1514 = vpop.f32.mrf.mxu0
        %v1515 = vadd.f32 0.0, %v1514
        %1516 = vmatprep.mubr.bf16.mxu0 0
        %1517 = vmatmul.mubr.bf16.gmra.mxu0 %v1401
        %v1518 = vpop.f32.mrf.mxu0
        %v1519 = vadd.f32 0.0, %v1518
        %v1520 = vpop.f32.mrf.mxu0
        %v1521 = vadd.f32 0.0, %v1520
        %v1522 = vpop.f32.mrf.mxu0
        %v1523 = vadd.f32 0.0, %v1522
        %v1524 = vpop.f32.mrf.mxu0
        %v1525 = vadd.f32 0.0, %v1524
        %1526 = vmatprep.mubr.bf16.mxu0 0
        %1527 = vmatmul.mubr.bf16.gmra.mxu0 %v1404
        %v1528 = vpop.f32.mrf.mxu0
        %v1529 = vadd.f32 0.0, %v1528
        %v1530 = vpop.f32.mrf.mxu0
        %v1531 = vadd.f32 0.0, %v1530
        %v1532 = vpop.f32.mrf.mxu0
        %v1533 = vadd.f32 0.0, %v1532
        %v1534 = vpop.f32.mrf.mxu0
        %v1535 = vadd.f32 0.0, %v1534
        %1536 = vmatprep.mubr.bf16.mxu0 0
        %1537 = vmatmul.mubr.bf16.gmra.mxu0 %v1407
        %v1538 = vpop.f32.mrf.mxu0
        %v1539 = vadd.f32 0.0, %v1538
        %v1540 = vpop.f32.mrf.mxu0
        %v1541 = vadd.f32 0.0, %v1540
        %v1542 = vpop.f32.mrf.mxu0
        %v1543 = vadd.f32 0.0, %v1542
        %v1544 = vpop.f32.mrf.mxu0
        %v1545 = vadd.f32 0.0, %v1544
        %1546 = vmatprep.mubr.bf16.mxu0 0
        %1547 = vmatmul.mubr.bf16.gmra.mxu0 %v1410
        %v1548 = vpop.f32.mrf.mxu0
        %v1549 = vadd.f32 0.0, %v1548
        %v1550 = vpop.f32.mrf.mxu0
        %v1551 = vadd.f32 0.0, %v1550
        %v1552 = vpop.f32.mrf.mxu0
        %v1553 = vadd.f32 0.0, %v1552
        %v1554 = vpop.f32.mrf.mxu0
        %v1555 = vadd.f32 0.0, %v1554
        %1556 = vmatprep.mubr.bf16.mxu0 0
        %1557 = vmatmul.mubr.bf16.gmra.mxu0 %v1413
        %v1558 = vpop.f32.mrf.mxu0
        %v1559 = vadd.f32 0.0, %v1558
        %v1560 = vpop.f32.mrf.mxu0
        %v1561 = vadd.f32 0.0, %v1560
        %v1562 = vpop.f32.mrf.mxu0
        %v1563 = vadd.f32 0.0, %v1562
        %v1564 = vpop.f32.mrf.mxu0
        %v1565 = vadd.f32 0.0, %v1564
        %1566 = vmatprep.mubr.bf16.mxu0 0
        %1567 = vmatmul.mubr.bf16.gmra.mxu0 %v1416
        %v1568 = vpop.f32.mrf.mxu0
        %v1569 = vadd.f32 0.0, %v1568
        %v1570 = vpop.f32.mrf.mxu0
        %v1571 = vadd.f32 0.0, %v1570
        %v1572 = vpop.f32.mrf.mxu0
        %v1573 = vadd.f32 0.0, %v1572
        %v1574 = vpop.f32.mrf.mxu0
        %v1575 = vadd.f32 0.0, %v1574
        %1576 = vdwg.mxu0
        %v1577 = vadd.f32 %v1219, %v1459
        %v1578 = vadd.f32 %v1220, %v1461
        %v1579 = vadd.f32 %v1221, %v1463
        %v1580 = vadd.f32 %v1222, %v1465
        %v1581 = vadd.f32 %v1223, %v1469
        %v1582 = vadd.f32 %v1224, %v1471
        %v1583 = vadd.f32 %v1225, %v1473
        %v1584 = vadd.f32 %v1226, %v1475
        %v1585 = vadd.f32 %v1227, %v1479
        %v1586 = vadd.f32 %v1228, %v1481
        %v1587 = vadd.f32 %v1229, %v1483
        %v1588 = vadd.f32 %v1230, %v1485
        %v1589 = vadd.f32 %v1231, %v1489
        %v1590 = vadd.f32 %v1232, %v1491
        %v1591 = vadd.f32 %v1233, %v1493
        %v1592 = vadd.f32 %v1234, %v1495
        %v1593 = vadd.f32 %v1235, %v1499
        %v1594 = vadd.f32 %v1236, %v1501
        %v1595 = vadd.f32 %v1237, %v1503
        %v1596 = vadd.f32 %v1238, %v1505
        %v1597 = vadd.f32 %v1239, %v1509
        %v1598 = vadd.f32 %v1240, %v1511
        %v1599 = vadd.f32 %v1241, %v1513
        %v1600 = vadd.f32 %v1242, %v1515
        %v1601 = vadd.f32 %v1243, %v1519
        %v1602 = vadd.f32 %v1244, %v1521
        %v1603 = vadd.f32 %v1245, %v1523
        %v1604 = vadd.f32 %v1246, %v1525
        %v1605 = vadd.f32 %v1247, %v1529
        %v1606 = vadd.f32 %v1248, %v1531
        %v1607 = vadd.f32 %v1249, %v1533
        %v1608 = vadd.f32 %v1250, %v1535
        %v1609 = vadd.f32 %v1251, %v1539
        %v1610 = vadd.f32 %v1252, %v1541
        %v1611 = vadd.f32 %v1253, %v1543
        %v1612 = vadd.f32 %v1254, %v1545
        %v1613 = vadd.f32 %v1255, %v1549
        %v1614 = vadd.f32 %v1256, %v1551
        %v1615 = vadd.f32 %v1257, %v1553
        %v1616 = vadd.f32 %v1258, %v1555
        %v1617 = vadd.f32 %v1259, %v1559
        %v1618 = vadd.f32 %v1260, %v1561
        %v1619 = vadd.f32 %v1261, %v1563
        %v1620 = vadd.f32 %v1262, %v1565
        %v1621 = vadd.f32 %v1263, %v1569
        %v1622 = vadd.f32 %v1264, %v1571
        %v1623 = vadd.f32 %v1265, %v1573
        %v1624 = vadd.f32 %v1266, %v1575
        %vm1625 = vcmask 1044480
        %v1626 = vrot.slane %v553, 3
        %v1627 = vrot.slane %v554, 3
        %v1628 = vsel %vm1625, %v1626, %v1627
        %v1629 = vrot.slane %v555, 3
        %v1630 = vsel %vm1625, %v1627, %v1629
        %v1631 = vrot.slane %v556, 3
        %v1632 = vsel %vm1625, %v1629, %v1631
        %v1633 = vrot.slane %v557, 3
        %v1634 = vrot.slane %v558, 3
        %v1635 = vsel %vm1625, %v1633, %v1634
        %v1636 = vrot.slane %v559, 3
        %v1637 = vsel %vm1625, %v1634, %v1636
        %v1638 = vrot.slane %v560, 3
        %v1639 = vsel %vm1625, %v1636, %v1638
        %v1640 = vrot.slane %v561, 3
        %v1641 = vrot.slane %v562, 3
        %v1642 = vsel %vm1625, %v1640, %v1641
        %v1643 = vrot.slane %v563, 3
        %v1644 = vsel %vm1625, %v1641, %v1643
        %v1645 = vrot.slane %v564, 3
        %v1646 = vsel %vm1625, %v1643, %v1645
        %v1647 = vrot.slane %v565, 3
        %v1648 = vrot.slane %v566, 3
        %v1649 = vsel %vm1625, %v1647, %v1648
        %v1650 = vrot.slane %v567, 3
        %v1651 = vsel %vm1625, %v1648, %v1650
        %v1652 = vrot.slane %v568, 3
        %v1653 = vsel %vm1625, %v1650, %v1652
        %v1654 = vrot.slane %v569, 3
        %v1655 = vrot.slane %v570, 3
        %v1656 = vsel %vm1625, %v1654, %v1655
        %v1657 = vrot.slane %v571, 3
        %v1658 = vsel %vm1625, %v1655, %v1657
        %v1659 = vrot.slane %v572, 3
        %v1660 = vsel %vm1625, %v1657, %v1659
        %v1661 = vrot.slane %v573, 3
        %v1662 = vrot.slane %v574, 3
        %v1663 = vsel %vm1625, %v1661, %v1662
        %v1664 = vrot.slane %v575, 3
        %v1665 = vsel %vm1625, %v1662, %v1664
        %v1666 = vrot.slane %v576, 3
        %v1667 = vsel %vm1625, %v1664, %v1666
        %v1668 = vrot.slane %v577, 3
        %v1669 = vrot.slane %v578, 3
        %v1670 = vsel %vm1625, %v1668, %v1669
        %v1671 = vrot.slane %v579, 3
        %v1672 = vsel %vm1625, %v1669, %v1671
        %v1673 = vrot.slane %v580, 3
        %v1674 = vsel %vm1625, %v1671, %v1673
        %v1675 = vrot.slane %v581, 3
        %v1676 = vrot.slane %v582, 3
        %v1677 = vsel %vm1625, %v1675, %v1676
        %v1678 = vrot.slane %v583, 3
        %v1679 = vsel %vm1625, %v1676, %v1678
        %v1680 = vrot.slane %v584, 3
        %v1681 = vsel %vm1625, %v1678, %v1680
        %v1706 = vpack.c.bf16 %v1630, %v1628
        %v1707 = vpack.c.bf16 %v1635, %v1632
        %v1708 = vpack.c.bf16 %v1639, %v1637
        %v1709 = vpack.c.bf16 %v1644, %v1642
        %v1710 = vpack.c.bf16 %v1649, %v1646
        %v1711 = vpack.c.bf16 %v1653, %v1651
        %v1712 = vpack.c.bf16 %v1658, %v1656
        %v1713 = vpack.c.bf16 %v1663, %v1660
        %v1714 = vpack.c.bf16 %v1667, %v1665
        %v1715 = vpack.c.bf16 %v1672, %v1670
        %v1716 = vpack.c.bf16 %v1677, %v1674
        %v1717 = vpack.c.bf16 %v1681, %v1679
        %s1718 = scalar_lea.vmem %s1, 96
        %v1719 = vld [vmem:[%s1718] sm:$0xff]
        %v1720 = vld [vmem:[%s1718 + $0x8] sm:$0xff]
        %v1721 = vld [vmem:[%s1718 + $0x10] sm:$0xff]
        %v1722 = vld [vmem:[%s1718 + $0x18] sm:$0x33]
        %v1727 = vunpack.c.l.b16 %v1719
        %v1728 = vunpack.c.h.b16 %v1719
        %v1729 = vunpack.c.l.b16 %v1720
        %v1730 = vunpack.c.h.b16 %v1720
        %v1731 = vunpack.c.l.b16 %v1721
        %v1732 = vunpack.c.h.b16 %v1721
        %v1733 = vunpack.c.l.b16 %v1722
        %v1734 = vunpack.c.h.b16 %v1722
        %v1735 = vpack.c.b16 %v1729, %v1727
        %v1736 = vpack.c.b16 %v1730, %v1728
        %v1737 = vpack.c.b16 %v1733, %v1731
        %v1738 = vpack.c.b16 %v1734, %v1732
        %v1742 = vsel %vm620, %v1706, 0
        %v1745 = vsel %vm620, %v1707, 0
        %v1748 = vsel %vm620, %v1708, 0
        %v1751 = vsel %vm620, %v1709, 0
        %v1754 = vsel %vm620, %v1710, 0
        %v1757 = vsel %vm620, %v1711, 0
        %v1760 = vsel %vm620, %v1712, 0
        %v1763 = vsel %vm620, %v1713, 0
        %v1766 = vsel %vm620, %v1714, 0
        %v1769 = vsel %vm620, %v1715, 0
        %v1772 = vsel %vm620, %v1716, 0
        %v1775 = vsel %vm620, %v1717, 0
        %v1778 = vsel %vm657, %v1737, 0
        %v1781 = vsel %vm657, %v1738, 0
        %1783 = vmatprep.subr.bf16.mxu0 0
        %1784 = vmatpush1.bf16.msra.mxu0 0
        %1785 = vmatprep.subr.bf16.mxu0 0
        %1786 = vmatpush1.bf16.msra.mxu0 0
        %1787 = vmatprep.subr.bf16.mxu0 0
        %1788 = vmatpush1.bf16.msra.mxu0 0
        %1789 = vmatprep.subr.bf16.mxu0 0
        %1790 = vmatpush1.bf16.msra.mxu0 0
        %1791 = vmatprep.subr.bf16.mxu0 0
        %1792 = vmatpush1.bf16.msra.mxu0 0
        %1793 = vmatprep.subr.bf16.mxu0 0
        %1794 = vmatpush1.bf16.msra.mxu0 0
        %1795 = vmatprep.subr.bf16.mxu0 %v1781
        %1796 = vmatpush1.bf16.msra.mxu0 %v1778
        %1797 = vmatprep.subr.bf16.mxu0 %v1736
        %1798 = vmatpush1.bf16.msra.mxu0 %v1735
        %1799 = vmatprep.subr.bf16.mxu0 0
        %1800 = vmatpush2.bf16.msra.mxu0 0
        %1801 = vmatprep.subr.bf16.mxu0 0
        %1802 = vmatpush2.bf16.msra.mxu0 0
        %1803 = vmatprep.subr.bf16.mxu0 0
        %1804 = vmatpush2.bf16.msra.mxu0 0
        %1805 = vmatprep.subr.bf16.mxu0 0
        %1806 = vmatpush2.bf16.msra.mxu0 0
        %1807 = vmatprep.subr.bf16.mxu0 0
        %1808 = vmatpush2.bf16.msra.mxu0 0
        %1809 = vmatprep.subr.bf16.mxu0 0
        %1810 = vmatpush2.bf16.msra.mxu0 0
        %1811 = vmatprep.subr.bf16.mxu0 0
        %1812 = vmatpush2.bf16.msra.mxu0 0
        %1813 = vmatprep.subr.bf16.mxu0 0
        %1814 = vmatpush2.bf16.msra.mxu0 0
        %1815 = vmatprep.mubr.bf16.mxu0 0
        %1816 = vmatmul.mubr.bf16.gmra.mxu0 %v1742
        %v1817 = vpop.f32.mrf.mxu0
        %v1818 = vadd.f32 0.0, %v1817
        %v1819 = vpop.f32.mrf.mxu0
        %v1820 = vadd.f32 0.0, %v1819
        %v1821 = vpop.f32.mrf.mxu0
        %v1822 = vadd.f32 0.0, %v1821
        %v1823 = vpop.f32.mrf.mxu0
        %v1824 = vadd.f32 0.0, %v1823
        %1825 = vmatprep.mubr.bf16.mxu0 0
        %1826 = vmatmul.mubr.bf16.gmra.mxu0 %v1745
        %v1827 = vpop.f32.mrf.mxu0
        %v1828 = vadd.f32 0.0, %v1827
        %v1829 = vpop.f32.mrf.mxu0
        %v1830 = vadd.f32 0.0, %v1829
        %v1831 = vpop.f32.mrf.mxu0
        %v1832 = vadd.f32 0.0, %v1831
        %v1833 = vpop.f32.mrf.mxu0
        %v1834 = vadd.f32 0.0, %v1833
        %1835 = vmatprep.mubr.bf16.mxu0 0
        %1836 = vmatmul.mubr.bf16.gmra.mxu0 %v1748
        %v1837 = vpop.f32.mrf.mxu0
        %v1838 = vadd.f32 0.0, %v1837
        %v1839 = vpop.f32.mrf.mxu0
        %v1840 = vadd.f32 0.0, %v1839
        %v1841 = vpop.f32.mrf.mxu0
        %v1842 = vadd.f32 0.0, %v1841
        %v1843 = vpop.f32.mrf.mxu0
        %v1844 = vadd.f32 0.0, %v1843
        %1845 = vmatprep.mubr.bf16.mxu0 0
        %1846 = vmatmul.mubr.bf16.gmra.mxu0 %v1751
        %v1847 = vpop.f32.mrf.mxu0
        %v1848 = vadd.f32 0.0, %v1847
        %v1849 = vpop.f32.mrf.mxu0
        %v1850 = vadd.f32 0.0, %v1849
        %v1851 = vpop.f32.mrf.mxu0
        %v1852 = vadd.f32 0.0, %v1851
        %v1853 = vpop.f32.mrf.mxu0
        %v1854 = vadd.f32 0.0, %v1853
        %1855 = vmatprep.mubr.bf16.mxu0 0
        %1856 = vmatmul.mubr.bf16.gmra.mxu0 %v1754
        %v1857 = vpop.f32.mrf.mxu0
        %v1858 = vadd.f32 0.0, %v1857
        %v1859 = vpop.f32.mrf.mxu0
        %v1860 = vadd.f32 0.0, %v1859
        %v1861 = vpop.f32.mrf.mxu0
        %v1862 = vadd.f32 0.0, %v1861
        %v1863 = vpop.f32.mrf.mxu0
        %v1864 = vadd.f32 0.0, %v1863
        %1865 = vmatprep.mubr.bf16.mxu0 0
        %1866 = vmatmul.mubr.bf16.gmra.mxu0 %v1757
        %v1867 = vpop.f32.mrf.mxu0
        %v1868 = vadd.f32 0.0, %v1867
        %v1869 = vpop.f32.mrf.mxu0
        %v1870 = vadd.f32 0.0, %v1869
        %v1871 = vpop.f32.mrf.mxu0
        %v1872 = vadd.f32 0.0, %v1871
        %v1873 = vpop.f32.mrf.mxu0
        %v1874 = vadd.f32 0.0, %v1873
        %1875 = vmatprep.mubr.bf16.mxu0 0
        %1876 = vmatmul.mubr.bf16.gmra.mxu0 %v1760
        %v1877 = vpop.f32.mrf.mxu0
        %v1878 = vadd.f32 0.0, %v1877
        %v1879 = vpop.f32.mrf.mxu0
        %v1880 = vadd.f32 0.0, %v1879
        %v1881 = vpop.f32.mrf.mxu0
        %v1882 = vadd.f32 0.0, %v1881
        %v1883 = vpop.f32.mrf.mxu0
        %v1884 = vadd.f32 0.0, %v1883
        %1885 = vmatprep.mubr.bf16.mxu0 0
        %1886 = vmatmul.mubr.bf16.gmra.mxu0 %v1763
        %v1887 = vpop.f32.mrf.mxu0
        %v1888 = vadd.f32 0.0, %v1887
        %v1889 = vpop.f32.mrf.mxu0
        %v1890 = vadd.f32 0.0, %v1889
        %v1891 = vpop.f32.mrf.mxu0
        %v1892 = vadd.f32 0.0, %v1891
        %v1893 = vpop.f32.mrf.mxu0
        %v1894 = vadd.f32 0.0, %v1893
        %1895 = vmatprep.mubr.bf16.mxu0 0
        %1896 = vmatmul.mubr.bf16.gmra.mxu0 %v1766
        %v1897 = vpop.f32.mrf.mxu0
        %v1898 = vadd.f32 0.0, %v1897
        %v1899 = vpop.f32.mrf.mxu0
        %v1900 = vadd.f32 0.0, %v1899
        %v1901 = vpop.f32.mrf.mxu0
        %v1902 = vadd.f32 0.0, %v1901
        %v1903 = vpop.f32.mrf.mxu0
        %v1904 = vadd.f32 0.0, %v1903
        %1905 = vmatprep.mubr.bf16.mxu0 0
        %1906 = vmatmul.mubr.bf16.gmra.mxu0 %v1769
        %v1907 = vpop.f32.mrf.mxu0
        %v1908 = vadd.f32 0.0, %v1907
        %v1909 = vpop.f32.mrf.mxu0
        %v1910 = vadd.f32 0.0, %v1909
        %v1911 = vpop.f32.mrf.mxu0
        %v1912 = vadd.f32 0.0, %v1911
        %v1913 = vpop.f32.mrf.mxu0
        %v1914 = vadd.f32 0.0, %v1913
        %1915 = vmatprep.mubr.bf16.mxu0 0
        %1916 = vmatmul.mubr.bf16.gmra.mxu0 %v1772
        %v1917 = vpop.f32.mrf.mxu0
        %v1918 = vadd.f32 0.0, %v1917
        %v1919 = vpop.f32.mrf.mxu0
        %v1920 = vadd.f32 0.0, %v1919
        %v1921 = vpop.f32.mrf.mxu0
        %v1922 = vadd.f32 0.0, %v1921
        %v1923 = vpop.f32.mrf.mxu0
        %v1924 = vadd.f32 0.0, %v1923
        %1925 = vmatprep.mubr.bf16.mxu0 0
        %1926 = vmatmul.mubr.bf16.gmra.mxu0 %v1775
        %v1927 = vpop.f32.mrf.mxu0
        %v1928 = vadd.f32 0.0, %v1927
        %v1929 = vpop.f32.mrf.mxu0
        %v1930 = vadd.f32 0.0, %v1929
        %v1931 = vpop.f32.mrf.mxu0
        %v1932 = vadd.f32 0.0, %v1931
        %v1933 = vpop.f32.mrf.mxu0
        %v1934 = vadd.f32 0.0, %v1933
        %1935 = vdwg.mxu0
        %v1936 = vadd.f32 %v1577, %v1818
        %v1937 = vadd.f32 %v1578, %v1820
        %v1938 = vadd.f32 %v1579, %v1822
        %v1939 = vadd.f32 %v1580, %v1824
        %v1940 = vadd.f32 %v1581, %v1828
        %v1941 = vadd.f32 %v1582, %v1830
        %v1942 = vadd.f32 %v1583, %v1832
        %v1943 = vadd.f32 %v1584, %v1834
        %v1944 = vadd.f32 %v1585, %v1838
        %v1945 = vadd.f32 %v1586, %v1840
        %v1946 = vadd.f32 %v1587, %v1842
        %v1947 = vadd.f32 %v1588, %v1844
        %v1948 = vadd.f32 %v1589, %v1848
        %v1949 = vadd.f32 %v1590, %v1850
        %v1950 = vadd.f32 %v1591, %v1852
        %v1951 = vadd.f32 %v1592, %v1854
        %v1952 = vadd.f32 %v1593, %v1858
        %v1953 = vadd.f32 %v1594, %v1860
        %v1954 = vadd.f32 %v1595, %v1862
        %v1955 = vadd.f32 %v1596, %v1864
        %v1956 = vadd.f32 %v1597, %v1868
        %v1957 = vadd.f32 %v1598, %v1870
        %v1958 = vadd.f32 %v1599, %v1872
        %v1959 = vadd.f32 %v1600, %v1874
        %v1960 = vadd.f32 %v1601, %v1878
        %v1961 = vadd.f32 %v1602, %v1880
        %v1962 = vadd.f32 %v1603, %v1882
        %v1963 = vadd.f32 %v1604, %v1884
        %v1964 = vadd.f32 %v1605, %v1888
        %v1965 = vadd.f32 %v1606, %v1890
        %v1966 = vadd.f32 %v1607, %v1892
        %v1967 = vadd.f32 %v1608, %v1894
        %v1968 = vadd.f32 %v1609, %v1898
        %v1969 = vadd.f32 %v1610, %v1900
        %v1970 = vadd.f32 %v1611, %v1902
        %v1971 = vadd.f32 %v1612, %v1904
        %v1972 = vadd.f32 %v1613, %v1908
        %v1973 = vadd.f32 %v1614, %v1910
        %v1974 = vadd.f32 %v1615, %v1912
        %v1975 = vadd.f32 %v1616, %v1914
        %v1976 = vadd.f32 %v1617, %v1918
        %v1977 = vadd.f32 %v1618, %v1920
        %v1978 = vadd.f32 %v1619, %v1922
        %v1979 = vadd.f32 %v1620, %v1924
        %v1980 = vadd.f32 %v1621, %v1928
        %v1981 = vadd.f32 %v1622, %v1930
        %v1982 = vadd.f32 %v1623, %v1932
        %v1983 = vadd.f32 %v1624, %v1934
        %vm1984 = vcmask 1043456
        %v1985 = vrot.slane %v553, 4
        %v1986 = vrot.slane %v554, 4
        %v1987 = vsel %vm1984, %v1985, %v1986
        %v1988 = vrot.slane %v555, 4
        %v1989 = vsel %vm1984, %v1986, %v1988
        %v1990 = vrot.slane %v556, 4
        %v1991 = vsel %vm1984, %v1988, %v1990
        %v1992 = vrot.slane %v557, 4
        %v1993 = vrot.slane %v558, 4
        %v1994 = vsel %vm1984, %v1992, %v1993
        %v1995 = vrot.slane %v559, 4
        %v1996 = vsel %vm1984, %v1993, %v1995
        %v1997 = vrot.slane %v560, 4
        %v1998 = vsel %vm1984, %v1995, %v1997
        %v1999 = vrot.slane %v561, 4
        %v2000 = vrot.slane %v562, 4
        %v2001 = vsel %vm1984, %v1999, %v2000
        %v2002 = vrot.slane %v563, 4
        %v2003 = vsel %vm1984, %v2000, %v2002
        %v2004 = vrot.slane %v564, 4
        %v2005 = vsel %vm1984, %v2002, %v2004
        %v2006 = vrot.slane %v565, 4
        %v2007 = vrot.slane %v566, 4
        %v2008 = vsel %vm1984, %v2006, %v2007
        %v2009 = vrot.slane %v567, 4
        %v2010 = vsel %vm1984, %v2007, %v2009
        %v2011 = vrot.slane %v568, 4
        %v2012 = vsel %vm1984, %v2009, %v2011
        %v2013 = vrot.slane %v569, 4
        %v2014 = vrot.slane %v570, 4
        %v2015 = vsel %vm1984, %v2013, %v2014
        %v2016 = vrot.slane %v571, 4
        %v2017 = vsel %vm1984, %v2014, %v2016
        %v2018 = vrot.slane %v572, 4
        %v2019 = vsel %vm1984, %v2016, %v2018
        %v2020 = vrot.slane %v573, 4
        %v2021 = vrot.slane %v574, 4
        %v2022 = vsel %vm1984, %v2020, %v2021
        %v2023 = vrot.slane %v575, 4
        %v2024 = vsel %vm1984, %v2021, %v2023
        %v2025 = vrot.slane %v576, 4
        %v2026 = vsel %vm1984, %v2023, %v2025
        %v2027 = vrot.slane %v577, 4
        %v2028 = vrot.slane %v578, 4
        %v2029 = vsel %vm1984, %v2027, %v2028
        %v2030 = vrot.slane %v579, 4
        %v2031 = vsel %vm1984, %v2028, %v2030
        %v2032 = vrot.slane %v580, 4
        %v2033 = vsel %vm1984, %v2030, %v2032
        %v2034 = vrot.slane %v581, 4
        %v2035 = vrot.slane %v582, 4
        %v2036 = vsel %vm1984, %v2034, %v2035
        %v2037 = vrot.slane %v583, 4
        %v2038 = vsel %vm1984, %v2035, %v2037
        %v2039 = vrot.slane %v584, 4
        %v2040 = vsel %vm1984, %v2037, %v2039
        %v2065 = vpack.c.bf16 %v1989, %v1987
        %v2066 = vpack.c.bf16 %v1994, %v1991
        %v2067 = vpack.c.bf16 %v1998, %v1996
        %v2068 = vpack.c.bf16 %v2003, %v2001
        %v2069 = vpack.c.bf16 %v2008, %v2005
        %v2070 = vpack.c.bf16 %v2012, %v2010
        %v2071 = vpack.c.bf16 %v2017, %v2015
        %v2072 = vpack.c.bf16 %v2022, %v2019
        %v2073 = vpack.c.bf16 %v2026, %v2024
        %v2074 = vpack.c.bf16 %v2031, %v2029
        %v2075 = vpack.c.bf16 %v2036, %v2033
        %v2076 = vpack.c.bf16 %v2040, %v2038
        %s2077 = scalar_lea.vmem %s1, 128
        %v2078 = vld [vmem:[%s2077] sm:$0xff]
        %v2079 = vld [vmem:[%s2077 + $0x8] sm:$0xff]
        %v2080 = vld [vmem:[%s2077 + $0x10] sm:$0xff]
        %v2081 = vld [vmem:[%s2077 + $0x18] sm:$0x33]
        %v2086 = vunpack.c.l.b16 %v2078
        %v2087 = vunpack.c.h.b16 %v2078
        %v2088 = vunpack.c.l.b16 %v2079
        %v2089 = vunpack.c.h.b16 %v2079
        %v2090 = vunpack.c.l.b16 %v2080
        %v2091 = vunpack.c.h.b16 %v2080
        %v2092 = vunpack.c.l.b16 %v2081
        %v2093 = vunpack.c.h.b16 %v2081
        %v2094 = vpack.c.b16 %v2088, %v2086
        %v2095 = vpack.c.b16 %v2089, %v2087
        %v2096 = vpack.c.b16 %v2092, %v2090
        %v2097 = vpack.c.b16 %v2093, %v2091
        %v2101 = vsel %vm620, %v2065, 0
        %v2104 = vsel %vm620, %v2066, 0
        %v2107 = vsel %vm620, %v2067, 0
        %v2110 = vsel %vm620, %v2068, 0
        %v2113 = vsel %vm620, %v2069, 0
        %v2116 = vsel %vm620, %v2070, 0
        %v2119 = vsel %vm620, %v2071, 0
        %v2122 = vsel %vm620, %v2072, 0
        %v2125 = vsel %vm620, %v2073, 0
        %v2128 = vsel %vm620, %v2074, 0
        %v2131 = vsel %vm620, %v2075, 0
        %v2134 = vsel %vm620, %v2076, 0
        %v2137 = vsel %vm657, %v2096, 0
        %v2140 = vsel %vm657, %v2097, 0
        %2142 = vmatprep.subr.bf16.mxu0 0
        %2143 = vmatpush1.bf16.msra.mxu0 0
        %2144 = vmatprep.subr.bf16.mxu0 0
        %2145 = vmatpush1.bf16.msra.mxu0 0
        %2146 = vmatprep.subr.bf16.mxu0 0
        %2147 = vmatpush1.bf16.msra.mxu0 0
        %2148 = vmatprep.subr.bf16.mxu0 0
        %2149 = vmatpush1.bf16.msra.mxu0 0
        %2150 = vmatprep.subr.bf16.mxu0 0
        %2151 = vmatpush1.bf16.msra.mxu0 0
        %2152 = vmatprep.subr.bf16.mxu0 0
        %2153 = vmatpush1.bf16.msra.mxu0 0
        %2154 = vmatprep.subr.bf16.mxu0 %v2140
        %2155 = vmatpush1.bf16.msra.mxu0 %v2137
        %2156 = vmatprep.subr.bf16.mxu0 %v2095
        %2157 = vmatpush1.bf16.msra.mxu0 %v2094
        %2158 = vmatprep.subr.bf16.mxu0 0
        %2159 = vmatpush2.bf16.msra.mxu0 0
        %2160 = vmatprep.subr.bf16.mxu0 0
        %2161 = vmatpush2.bf16.msra.mxu0 0
        %2162 = vmatprep.subr.bf16.mxu0 0
        %2163 = vmatpush2.bf16.msra.mxu0 0
        %2164 = vmatprep.subr.bf16.mxu0 0
        %2165 = vmatpush2.bf16.msra.mxu0 0
        %2166 = vmatprep.subr.bf16.mxu0 0
        %2167 = vmatpush2.bf16.msra.mxu0 0
        %2168 = vmatprep.subr.bf16.mxu0 0
        %2169 = vmatpush2.bf16.msra.mxu0 0
        %2170 = vmatprep.subr.bf16.mxu0 0
        %2171 = vmatpush2.bf16.msra.mxu0 0
        %2172 = vmatprep.subr.bf16.mxu0 0
        %2173 = vmatpush2.bf16.msra.mxu0 0
        %2174 = vmatprep.mubr.bf16.mxu0 0
        %2175 = vmatmul.mubr.bf16.gmra.mxu0 %v2101
        %v2176 = vpop.f32.mrf.mxu0
        %v2177 = vadd.f32 0.0, %v2176
        %v2178 = vpop.f32.mrf.mxu0
        %v2179 = vadd.f32 0.0, %v2178
        %v2180 = vpop.f32.mrf.mxu0
        %v2181 = vadd.f32 0.0, %v2180
        %v2182 = vpop.f32.mrf.mxu0
        %v2183 = vadd.f32 0.0, %v2182
        %2184 = vmatprep.mubr.bf16.mxu0 0
        %2185 = vmatmul.mubr.bf16.gmra.mxu0 %v2104
        %v2186 = vpop.f32.mrf.mxu0
        %v2187 = vadd.f32 0.0, %v2186
        %v2188 = vpop.f32.mrf.mxu0
        %v2189 = vadd.f32 0.0, %v2188
        %v2190 = vpop.f32.mrf.mxu0
        %v2191 = vadd.f32 0.0, %v2190
        %v2192 = vpop.f32.mrf.mxu0
        %v2193 = vadd.f32 0.0, %v2192
        %2194 = vmatprep.mubr.bf16.mxu0 0
        %2195 = vmatmul.mubr.bf16.gmra.mxu0 %v2107
        %v2196 = vpop.f32.mrf.mxu0
        %v2197 = vadd.f32 0.0, %v2196
        %v2198 = vpop.f32.mrf.mxu0
        %v2199 = vadd.f32 0.0, %v2198
        %v2200 = vpop.f32.mrf.mxu0
        %v2201 = vadd.f32 0.0, %v2200
        %v2202 = vpop.f32.mrf.mxu0
        %v2203 = vadd.f32 0.0, %v2202
        %2204 = vmatprep.mubr.bf16.mxu0 0
        %2205 = vmatmul.mubr.bf16.gmra.mxu0 %v2110
        %v2206 = vpop.f32.mrf.mxu0
        %v2207 = vadd.f32 0.0, %v2206
        %v2208 = vpop.f32.mrf.mxu0
        %v2209 = vadd.f32 0.0, %v2208
        %v2210 = vpop.f32.mrf.mxu0
        %v2211 = vadd.f32 0.0, %v2210
        %v2212 = vpop.f32.mrf.mxu0
        %v2213 = vadd.f32 0.0, %v2212
        %2214 = vmatprep.mubr.bf16.mxu0 0
        %2215 = vmatmul.mubr.bf16.gmra.mxu0 %v2113
        %v2216 = vpop.f32.mrf.mxu0
        %v2217 = vadd.f32 0.0, %v2216
        %v2218 = vpop.f32.mrf.mxu0
        %v2219 = vadd.f32 0.0, %v2218
        %v2220 = vpop.f32.mrf.mxu0
        %v2221 = vadd.f32 0.0, %v2220
        %v2222 = vpop.f32.mrf.mxu0
        %v2223 = vadd.f32 0.0, %v2222
        %2224 = vmatprep.mubr.bf16.mxu0 0
        %2225 = vmatmul.mubr.bf16.gmra.mxu0 %v2116
        %v2226 = vpop.f32.mrf.mxu0
        %v2227 = vadd.f32 0.0, %v2226
        %v2228 = vpop.f32.mrf.mxu0
        %v2229 = vadd.f32 0.0, %v2228
        %v2230 = vpop.f32.mrf.mxu0
        %v2231 = vadd.f32 0.0, %v2230
        %v2232 = vpop.f32.mrf.mxu0
        %v2233 = vadd.f32 0.0, %v2232
        %2234 = vmatprep.mubr.bf16.mxu0 0
        %2235 = vmatmul.mubr.bf16.gmra.mxu0 %v2119
        %v2236 = vpop.f32.mrf.mxu0
        %v2237 = vadd.f32 0.0, %v2236
        %v2238 = vpop.f32.mrf.mxu0
        %v2239 = vadd.f32 0.0, %v2238
        %v2240 = vpop.f32.mrf.mxu0
        %v2241 = vadd.f32 0.0, %v2240
        %v2242 = vpop.f32.mrf.mxu0
        %v2243 = vadd.f32 0.0, %v2242
        %2244 = vmatprep.mubr.bf16.mxu0 0
        %2245 = vmatmul.mubr.bf16.gmra.mxu0 %v2122
        %v2246 = vpop.f32.mrf.mxu0
        %v2247 = vadd.f32 0.0, %v2246
        %v2248 = vpop.f32.mrf.mxu0
        %v2249 = vadd.f32 0.0, %v2248
        %v2250 = vpop.f32.mrf.mxu0
        %v2251 = vadd.f32 0.0, %v2250
        %v2252 = vpop.f32.mrf.mxu0
        %v2253 = vadd.f32 0.0, %v2252
        %2254 = vmatprep.mubr.bf16.mxu0 0
        %2255 = vmatmul.mubr.bf16.gmra.mxu0 %v2125
        %v2256 = vpop.f32.mrf.mxu0
        %v2257 = vadd.f32 0.0, %v2256
        %v2258 = vpop.f32.mrf.mxu0
        %v2259 = vadd.f32 0.0, %v2258
        %v2260 = vpop.f32.mrf.mxu0
        %v2261 = vadd.f32 0.0, %v2260
        %v2262 = vpop.f32.mrf.mxu0
        %v2263 = vadd.f32 0.0, %v2262
        %2264 = vmatprep.mubr.bf16.mxu0 0
        %2265 = vmatmul.mubr.bf16.gmra.mxu0 %v2128
        %v2266 = vpop.f32.mrf.mxu0
        %v2267 = vadd.f32 0.0, %v2266
        %v2268 = vpop.f32.mrf.mxu0
        %v2269 = vadd.f32 0.0, %v2268
        %v2270 = vpop.f32.mrf.mxu0
        %v2271 = vadd.f32 0.0, %v2270
        %v2272 = vpop.f32.mrf.mxu0
        %v2273 = vadd.f32 0.0, %v2272
        %2274 = vmatprep.mubr.bf16.mxu0 0
        %2275 = vmatmul.mubr.bf16.gmra.mxu0 %v2131
        %v2276 = vpop.f32.mrf.mxu0
        %v2277 = vadd.f32 0.0, %v2276
        %v2278 = vpop.f32.mrf.mxu0
        %v2279 = vadd.f32 0.0, %v2278
        %v2280 = vpop.f32.mrf.mxu0
        %v2281 = vadd.f32 0.0, %v2280
        %v2282 = vpop.f32.mrf.mxu0
        %v2283 = vadd.f32 0.0, %v2282
        %2284 = vmatprep.mubr.bf16.mxu0 0
        %2285 = vmatmul.mubr.bf16.gmra.mxu0 %v2134
        %v2286 = vpop.f32.mrf.mxu0
        %v2287 = vadd.f32 0.0, %v2286
        %v2288 = vpop.f32.mrf.mxu0
        %v2289 = vadd.f32 0.0, %v2288
        %v2290 = vpop.f32.mrf.mxu0
        %v2291 = vadd.f32 0.0, %v2290
        %v2292 = vpop.f32.mrf.mxu0
        %v2293 = vadd.f32 0.0, %v2292
        %2294 = vdwg.mxu0
        %v2295 = vadd.f32 %v1936, %v2177
        %v2296 = vadd.f32 %v1937, %v2179
        %v2297 = vadd.f32 %v1938, %v2181
        %v2298 = vadd.f32 %v1939, %v2183
        %v2299 = vadd.f32 %v1940, %v2187
        %v2300 = vadd.f32 %v1941, %v2189
        %v2301 = vadd.f32 %v1942, %v2191
        %v2302 = vadd.f32 %v1943, %v2193
        %v2303 = vadd.f32 %v1944, %v2197
        %v2304 = vadd.f32 %v1945, %v2199
        %v2305 = vadd.f32 %v1946, %v2201
        %v2306 = vadd.f32 %v1947, %v2203
        %v2307 = vadd.f32 %v1948, %v2207
        %v2308 = vadd.f32 %v1949, %v2209
        %v2309 = vadd.f32 %v1950, %v2211
        %v2310 = vadd.f32 %v1951, %v2213
        %v2311 = vadd.f32 %v1952, %v2217
        %v2312 = vadd.f32 %v1953, %v2219
        %v2313 = vadd.f32 %v1954, %v2221
        %v2314 = vadd.f32 %v1955, %v2223
        %v2315 = vadd.f32 %v1956, %v2227
        %v2316 = vadd.f32 %v1957, %v2229
        %v2317 = vadd.f32 %v1958, %v2231
        %v2318 = vadd.f32 %v1959, %v2233
        %v2319 = vadd.f32 %v1960, %v2237
        %v2320 = vadd.f32 %v1961, %v2239
        %v2321 = vadd.f32 %v1962, %v2241
        %v2322 = vadd.f32 %v1963, %v2243
        %v2323 = vadd.f32 %v1964, %v2247
        %v2324 = vadd.f32 %v1965, %v2249
        %v2325 = vadd.f32 %v1966, %v2251
        %v2326 = vadd.f32 %v1967, %v2253
        %v2327 = vadd.f32 %v1968, %v2257
        %v2328 = vadd.f32 %v1969, %v2259
        %v2329 = vadd.f32 %v1970, %v2261
        %v2330 = vadd.f32 %v1971, %v2263
        %v2331 = vadd.f32 %v1972, %v2267
        %v2332 = vadd.f32 %v1973, %v2269
        %v2333 = vadd.f32 %v1974, %v2271
        %v2334 = vadd.f32 %v1975, %v2273
        %v2335 = vadd.f32 %v1976, %v2277
        %v2336 = vadd.f32 %v1977, %v2279
        %v2337 = vadd.f32 %v1978, %v2281
        %v2338 = vadd.f32 %v1979, %v2283
        %v2339 = vadd.f32 %v1980, %v2287
        %v2340 = vadd.f32 %v1981, %v2289
        %v2341 = vadd.f32 %v1982, %v2291
        %v2342 = vadd.f32 %v1983, %v2293
        %v2343 = vpack.c.bf16 %v2297, %v2295
        %v2344 = vpack.c.bf16 %v2298, %v2296
        %v2345 = vpack.c.bf16 %v2301, %v2299
        %v2346 = vpack.c.bf16 %v2302, %v2300
        %v2347 = vpack.c.bf16 %v2305, %v2303
        %v2348 = vpack.c.bf16 %v2306, %v2304
        %v2349 = vpack.c.bf16 %v2309, %v2307
        %v2350 = vpack.c.bf16 %v2310, %v2308
        %v2351 = vpack.c.bf16 %v2313, %v2311
        %v2352 = vpack.c.bf16 %v2314, %v2312
        %v2353 = vpack.c.bf16 %v2317, %v2315
        %v2354 = vpack.c.bf16 %v2318, %v2316
        %v2355 = vpack.c.bf16 %v2321, %v2319
        %v2356 = vpack.c.bf16 %v2322, %v2320
        %v2357 = vpack.c.bf16 %v2325, %v2323
        %v2358 = vpack.c.bf16 %v2326, %v2324
        %v2359 = vpack.c.bf16 %v2329, %v2327
        %v2360 = vpack.c.bf16 %v2330, %v2328
        %v2361 = vpack.c.bf16 %v2333, %v2331
        %v2362 = vpack.c.bf16 %v2334, %v2332
        %v2363 = vpack.c.bf16 %v2337, %v2335
        %v2364 = vpack.c.bf16 %v2338, %v2336
        %v2365 = vpack.c.bf16 %v2341, %v2339
        %v2366 = vpack.c.bf16 %v2342, %v2340
        %v2367 = vld [vmem:[%s3] sm:$0xff]
        %v2368 = vld [vmem:[%s3 + $0x8] sm:$0xff]
        %v2369 = vld [vmem:[%s3 + $0x10] sm:$0xff]
        %v2370 = vld [vmem:[%s3 + $0x18] sm:$0xff]
        %v2371 = vld [vmem:[%s3 + $0x20] sm:$0xff]
        %v2372 = vld [vmem:[%s3 + $0x28] sm:$0xff]
        %v2373 = vld [vmem:[%s3 + $0x30] sm:$0xff]
        %v2374 = vld [vmem:[%s3 + $0x38] sm:$0xff]
        %v2375 = vld [vmem:[%s3 + $0x40] sm:$0xff]
        %v2376 = vld [vmem:[%s3 + $0x48] sm:$0xff]
        %v2377 = vld [vmem:[%s3 + $0x50] sm:$0xff]
        %v2378 = vld [vmem:[%s3 + $0x58] sm:$0xff]
        %v2391 = vunpack.c.l.b16 %v2367
        %v2392 = vunpack.c.h.b16 %v2367
        %v2393 = vunpack.c.l.b16 %v2368
        %v2394 = vunpack.c.h.b16 %v2368
        %v2395 = vunpack.c.l.b16 %v2369
        %v2396 = vunpack.c.h.b16 %v2369
        %v2397 = vunpack.c.l.b16 %v2370
        %v2398 = vunpack.c.h.b16 %v2370
        %v2399 = vunpack.c.l.b16 %v2371
        %v2400 = vunpack.c.h.b16 %v2371
        %v2401 = vunpack.c.l.b16 %v2372
        %v2402 = vunpack.c.h.b16 %v2372
        %v2403 = vunpack.c.l.b16 %v2373
        %v2404 = vunpack.c.h.b16 %v2373
        %v2405 = vunpack.c.l.b16 %v2374
        %v2406 = vunpack.c.h.b16 %v2374
        %v2407 = vunpack.c.l.b16 %v2375
        %v2408 = vunpack.c.h.b16 %v2375
        %v2409 = vunpack.c.l.b16 %v2376
        %v2410 = vunpack.c.h.b16 %v2376
        %v2411 = vunpack.c.l.b16 %v2377
        %v2412 = vunpack.c.h.b16 %v2377
        %v2413 = vunpack.c.l.b16 %v2378
        %v2414 = vunpack.c.h.b16 %v2378
        %v2415 = vpack.c.b16 %v2393, %v2391
        %v2416 = vpack.c.b16 %v2394, %v2392
        %v2417 = vpack.c.b16 %v2397, %v2395
        %v2418 = vpack.c.b16 %v2398, %v2396
        %v2419 = vpack.c.b16 %v2401, %v2399
        %v2420 = vpack.c.b16 %v2402, %v2400
        %v2421 = vpack.c.b16 %v2405, %v2403
        %v2422 = vpack.c.b16 %v2406, %v2404
        %v2423 = vpack.c.b16 %v2409, %v2407
        %v2424 = vpack.c.b16 %v2410, %v2408
        %v2425 = vpack.c.b16 %v2413, %v2411
        %v2426 = vpack.c.b16 %v2414, %v2412
        %vm2433 = vcmask 523264
        %v2435 = vsel %vm2433, %v2416, 0
        %v2438 = vsel %vm2433, %v2418, 0
        %v2441 = vsel %vm2433, %v2420, 0
        %v2444 = vsel %vm2433, %v2422, 0
        %v2447 = vsel %vm2433, %v2424, 0
        %v2450 = vsel %vm2433, %v2426, 0
        %2452 = vmatprep.subr.bf16.mxu0 %v2358
        %2453 = vmatpush1.bf16.msra.mxu0 %v2357
        %2454 = vmatprep.subr.bf16.mxu0 %v2356
        %2455 = vmatpush1.bf16.msra.mxu0 %v2355
        %2456 = vmatprep.subr.bf16.mxu0 %v2354
        %2457 = vmatpush1.bf16.msra.mxu0 %v2353
        %2458 = vmatprep.subr.bf16.mxu0 %v2352
        %2459 = vmatpush1.bf16.msra.mxu0 %v2351
        %2460 = vmatprep.subr.bf16.mxu0 %v2350
        %2461 = vmatpush1.bf16.msra.mxu0 %v2349
        %2462 = vmatprep.subr.bf16.mxu0 %v2348
        %2463 = vmatpush1.bf16.msra.mxu0 %v2347
        %2464 = vmatprep.subr.bf16.mxu0 %v2346
        %2465 = vmatpush1.bf16.msra.mxu0 %v2345
        %2466 = vmatprep.subr.bf16.mxu0 %v2344
        %2467 = vmatpush1.bf16.msra.mxu0 %v2343
        %2468 = vmatprep.subr.bf16.mxu0 0
        %2469 = vmatpush2.bf16.msra.mxu0 0
        %2470 = vmatprep.subr.bf16.mxu0 0
        %2471 = vmatpush2.bf16.msra.mxu0 0
        %2472 = vmatprep.subr.bf16.mxu0 0
        %2473 = vmatpush2.bf16.msra.mxu0 0
        %2474 = vmatprep.subr.bf16.mxu0 0
        %2475 = vmatpush2.bf16.msra.mxu0 0
        %2476 = vmatprep.subr.bf16.mxu0 %v2366
        %2477 = vmatpush2.bf16.msra.mxu0 %v2365
        %2478 = vmatprep.subr.bf16.mxu0 %v2364
        %2479 = vmatpush2.bf16.msra.mxu0 %v2363
        %2480 = vmatprep.subr.bf16.mxu0 %v2362
        %2481 = vmatpush2.bf16.msra.mxu0 %v2361
        %2482 = vmatprep.subr.bf16.mxu0 %v2360
        %2483 = vmatpush2.bf16.msra.mxu0 %v2359
        %2484 = vmatprep.mubr.bf16.mxu0 %v2435
        %2485 = vmatmul.mubr.bf16.gmra.mxu0 %v2415
        %v2486 = vpop.f32.mrf.mxu0
        %v2487 = vadd.f32 0.0, %v2486
        %v2488 = vpop.f32.mrf.mxu0
        %v2489 = vadd.f32 0.0, %v2488
        %v2490 = vpop.f32.mrf.mxu0
        %v2491 = vadd.f32 0.0, %v2490
        %v2492 = vpop.f32.mrf.mxu0
        %v2493 = vadd.f32 0.0, %v2492
        %2494 = vmatprep.mubr.bf16.mxu0 %v2438
        %2495 = vmatmul.mubr.bf16.gmra.mxu0 %v2417
        %v2496 = vpop.f32.mrf.mxu0
        %v2497 = vadd.f32 0.0, %v2496
        %v2498 = vpop.f32.mrf.mxu0
        %v2499 = vadd.f32 0.0, %v2498
        %v2500 = vpop.f32.mrf.mxu0
        %v2501 = vadd.f32 0.0, %v2500
        %v2502 = vpop.f32.mrf.mxu0
        %v2503 = vadd.f32 0.0, %v2502
        %2504 = vmatprep.mubr.bf16.mxu0 %v2441
        %2505 = vmatmul.mubr.bf16.gmra.mxu0 %v2419
        %v2506 = vpop.f32.mrf.mxu0
        %v2507 = vadd.f32 0.0, %v2506
        %v2508 = vpop.f32.mrf.mxu0
        %v2509 = vadd.f32 0.0, %v2508
        %v2510 = vpop.f32.mrf.mxu0
        %v2511 = vadd.f32 0.0, %v2510
        %v2512 = vpop.f32.mrf.mxu0
        %v2513 = vadd.f32 0.0, %v2512
        %2514 = vmatprep.mubr.bf16.mxu0 %v2444
        %2515 = vmatmul.mubr.bf16.gmra.mxu0 %v2421
        %v2516 = vpop.f32.mrf.mxu0
        %v2517 = vadd.f32 0.0, %v2516
        %v2518 = vpop.f32.mrf.mxu0
        %v2519 = vadd.f32 0.0, %v2518
        %v2520 = vpop.f32.mrf.mxu0
        %v2521 = vadd.f32 0.0, %v2520
        %v2522 = vpop.f32.mrf.mxu0
        %v2523 = vadd.f32 0.0, %v2522
        %2524 = vmatprep.mubr.bf16.mxu0 %v2447
        %2525 = vmatmul.mubr.bf16.gmra.mxu0 %v2423
        %v2526 = vpop.f32.mrf.mxu0
        %v2527 = vadd.f32 0.0, %v2526
        %v2528 = vpop.f32.mrf.mxu0
        %v2529 = vadd.f32 0.0, %v2528
        %v2530 = vpop.f32.mrf.mxu0
        %v2531 = vadd.f32 0.0, %v2530
        %v2532 = vpop.f32.mrf.mxu0
        %v2533 = vadd.f32 0.0, %v2532
        %2534 = vmatprep.mubr.bf16.mxu0 %v2450
        %2535 = vmatmul.mubr.bf16.gmra.mxu0 %v2425
        %v2536 = vpop.f32.mrf.mxu0
        %v2537 = vadd.f32 0.0, %v2536
        %v2538 = vpop.f32.mrf.mxu0
        %v2539 = vadd.f32 0.0, %v2538
        %v2540 = vpop.f32.mrf.mxu0
        %v2541 = vadd.f32 0.0, %v2540
        %v2542 = vpop.f32.mrf.mxu0
        %v2543 = vadd.f32 0.0, %v2542
        %2544 = vdwg.mxu0
        %v2545 = vld [vmem:[%s4] sm:$0xff]
        %v2546 = vld [vmem:[%s4 + $0x8] sm:$0xff]
        %v2547 = vld [vmem:[%s4 + $0x10] sm:$0xff]
        %v2548 = vld [vmem:[%s4 + $0x18] sm:$0xff]
        %v2549 = vld [vmem:[%s4 + $0x20] sm:$0xff]
        %v2550 = vld [vmem:[%s4 + $0x28] sm:$0xff]
        %v2551 = vld [vmem:[%s4 + $0x30] sm:$0xff]
        %v2552 = vld [vmem:[%s4 + $0x38] sm:$0xff]
        %v2553 = vld [vmem:[%s4 + $0x40] sm:$0xff]
        %v2554 = vld [vmem:[%s4 + $0x48] sm:$0xff]
        %v2555 = vld [vmem:[%s4 + $0x50] sm:$0xff]
        %v2556 = vld [vmem:[%s4 + $0x58] sm:$0xff]
        %v2569 = vunpack.c.l.b16 %v2545
        %v2570 = vunpack.c.h.b16 %v2545
        %v2571 = vunpack.c.l.b16 %v2546
        %v2572 = vunpack.c.h.b16 %v2546
        %v2573 = vunpack.c.l.b16 %v2547
        %v2574 = vunpack.c.h.b16 %v2547
        %v2575 = vunpack.c.l.b16 %v2548
        %v2576 = vunpack.c.h.b16 %v2548
        %v2577 = vunpack.c.l.b16 %v2549
        %v2578 = vunpack.c.h.b16 %v2549
        %v2579 = vunpack.c.l.b16 %v2550
        %v2580 = vunpack.c.h.b16 %v2550
        %v2581 = vunpack.c.l.b16 %v2551
        %v2582 = vunpack.c.h.b16 %v2551
        %v2583 = vunpack.c.l.b16 %v2552
        %v2584 = vunpack.c.h.b16 %v2552
        %v2585 = vunpack.c.l.b16 %v2553
        %v2586 = vunpack.c.h.b16 %v2553
        %v2587 = vunpack.c.l.b16 %v2554
        %v2588 = vunpack.c.h.b16 %v2554
        %v2589 = vunpack.c.l.b16 %v2555
        %v2590 = vunpack.c.h.b16 %v2555
        %v2591 = vunpack.c.l.b16 %v2556
        %v2592 = vunpack.c.h.b16 %v2556
        %v2593 = vpack.c.b16 %v2571, %v2569
        %v2594 = vpack.c.b16 %v2572, %v2570
        %v2595 = vpack.c.b16 %v2575, %v2573
        %v2596 = vpack.c.b16 %v2576, %v2574
        %v2597 = vpack.c.b16 %v2579, %v2577
        %v2598 = vpack.c.b16 %v2580, %v2578
        %v2599 = vpack.c.b16 %v2583, %v2581
        %v2600 = vpack.c.b16 %v2584, %v2582
        %v2601 = vpack.c.b16 %v2587, %v2585
        %v2602 = vpack.c.b16 %v2588, %v2586
        %v2603 = vpack.c.b16 %v2591, %v2589
        %v2604 = vpack.c.b16 %v2592, %v2590
        %v2612 = vsel %vm2433, %v2594, 0
        %v2615 = vsel %vm2433, %v2596, 0
        %v2618 = vsel %vm2433, %v2598, 0
        %v2621 = vsel %vm2433, %v2600, 0
        %v2624 = vsel %vm2433, %v2602, 0
        %v2627 = vsel %vm2433, %v2604, 0
        %2629 = vmatprep.subr.bf16.mxu0 %v2358
        %2630 = vmatpush1.bf16.msra.mxu0 %v2357
        %2631 = vmatprep.subr.bf16.mxu0 %v2356
        %2632 = vmatpush1.bf16.msra.mxu0 %v2355
        %2633 = vmatprep.subr.bf16.mxu0 %v2354
        %2634 = vmatpush1.bf16.msra.mxu0 %v2353
        %2635 = vmatprep.subr.bf16.mxu0 %v2352
        %2636 = vmatpush1.bf16.msra.mxu0 %v2351
        %2637 = vmatprep.subr.bf16.mxu0 %v2350
        %2638 = vmatpush1.bf16.msra.mxu0 %v2349
        %2639 = vmatprep.subr.bf16.mxu0 %v2348
        %2640 = vmatpush1.bf16.msra.mxu0 %v2347
        %2641 = vmatprep.subr.bf16.mxu0 %v2346
        %2642 = vmatpush1.bf16.msra.mxu0 %v2345
        %2643 = vmatprep.subr.bf16.mxu0 %v2344
        %2644 = vmatpush1.bf16.msra.mxu0 %v2343
        %2645 = vmatprep.subr.bf16.mxu0 0
        %2646 = vmatpush2.bf16.msra.mxu0 0
        %2647 = vmatprep.subr.bf16.mxu0 0
        %2648 = vmatpush2.bf16.msra.mxu0 0
        %2649 = vmatprep.subr.bf16.mxu0 0
        %2650 = vmatpush2.bf16.msra.mxu0 0
        %2651 = vmatprep.subr.bf16.mxu0 0
        %2652 = vmatpush2.bf16.msra.mxu0 0
        %2653 = vmatprep.subr.bf16.mxu0 %v2366
        %2654 = vmatpush2.bf16.msra.mxu0 %v2365
        %2655 = vmatprep.subr.bf16.mxu0 %v2364
        %2656 = vmatpush2.bf16.msra.mxu0 %v2363
        %2657 = vmatprep.subr.bf16.mxu0 %v2362
        %2658 = vmatpush2.bf16.msra.mxu0 %v2361
        %2659 = vmatprep.subr.bf16.mxu0 %v2360
        %2660 = vmatpush2.bf16.msra.mxu0 %v2359
        %2661 = vmatprep.mubr.bf16.mxu0 %v2612
        %2662 = vmatmul.mubr.bf16.gmra.mxu0 %v2593
        %v2663 = vpop.f32.mrf.mxu0
        %v2664 = vadd.f32 0.0, %v2663
        %v2665 = vpop.f32.mrf.mxu0
        %v2666 = vadd.f32 0.0, %v2665
        %v2667 = vpop.f32.mrf.mxu0
        %v2668 = vadd.f32 0.0, %v2667
        %v2669 = vpop.f32.mrf.mxu0
        %v2670 = vadd.f32 0.0, %v2669
        %2671 = vmatprep.mubr.bf16.mxu0 %v2615
        %2672 = vmatmul.mubr.bf16.gmra.mxu0 %v2595
        %v2673 = vpop.f32.mrf.mxu0
        %v2674 = vadd.f32 0.0, %v2673
        %v2675 = vpop.f32.mrf.mxu0
        %v2676 = vadd.f32 0.0, %v2675
        %v2677 = vpop.f32.mrf.mxu0
        %v2678 = vadd.f32 0.0, %v2677
        %v2679 = vpop.f32.mrf.mxu0
        %v2680 = vadd.f32 0.0, %v2679
        %2681 = vmatprep.mubr.bf16.mxu0 %v2618
        %2682 = vmatmul.mubr.bf16.gmra.mxu0 %v2597
        %v2683 = vpop.f32.mrf.mxu0
        %v2684 = vadd.f32 0.0, %v2683
        %v2685 = vpop.f32.mrf.mxu0
        %v2686 = vadd.f32 0.0, %v2685
        %v2687 = vpop.f32.mrf.mxu0
        %v2688 = vadd.f32 0.0, %v2687
        %v2689 = vpop.f32.mrf.mxu0
        %v2690 = vadd.f32 0.0, %v2689
        %2691 = vmatprep.mubr.bf16.mxu0 %v2621
        %2692 = vmatmul.mubr.bf16.gmra.mxu0 %v2599
        %v2693 = vpop.f32.mrf.mxu0
        %v2694 = vadd.f32 0.0, %v2693
        %v2695 = vpop.f32.mrf.mxu0
        %v2696 = vadd.f32 0.0, %v2695
        %v2697 = vpop.f32.mrf.mxu0
        %v2698 = vadd.f32 0.0, %v2697
        %v2699 = vpop.f32.mrf.mxu0
        %v2700 = vadd.f32 0.0, %v2699
        %2701 = vmatprep.mubr.bf16.mxu0 %v2624
        %2702 = vmatmul.mubr.bf16.gmra.mxu0 %v2601
        %v2703 = vpop.f32.mrf.mxu0
        %v2704 = vadd.f32 0.0, %v2703
        %v2705 = vpop.f32.mrf.mxu0
        %v2706 = vadd.f32 0.0, %v2705
        %v2707 = vpop.f32.mrf.mxu0
        %v2708 = vadd.f32 0.0, %v2707
        %v2709 = vpop.f32.mrf.mxu0
        %v2710 = vadd.f32 0.0, %v2709
        %2711 = vmatprep.mubr.bf16.mxu0 %v2627
        %2712 = vmatmul.mubr.bf16.gmra.mxu0 %v2603
        %v2713 = vpop.f32.mrf.mxu0
        %v2714 = vadd.f32 0.0, %v2713
        %v2715 = vpop.f32.mrf.mxu0
        %v2716 = vadd.f32 0.0, %v2715
        %v2717 = vpop.f32.mrf.mxu0
        %v2718 = vadd.f32 0.0, %v2717
        %v2719 = vpop.f32.mrf.mxu0
        %v2720 = vadd.f32 0.0, %v2719
        %2721 = vdwg.mxu0
        %v2722 = vmax.f32 %v2487, %v2664
        %v2723 = vmax.f32 %v2489, %v2666
        %v2724 = vmax.f32 %v2491, %v2668
        %v2725 = vmax.f32 %v2493, %v2670
        %v2726 = vmax.f32 %v2497, %v2674
        %v2727 = vmax.f32 %v2499, %v2676
        %v2728 = vmax.f32 %v2501, %v2678
        %v2729 = vmax.f32 %v2503, %v2680
        %v2730 = vmax.f32 %v2507, %v2684
        %v2731 = vmax.f32 %v2509, %v2686
        %v2732 = vmax.f32 %v2511, %v2688
        %v2733 = vmax.f32 %v2513, %v2690
        %v2734 = vmax.f32 %v2517, %v2694
        %v2735 = vmax.f32 %v2519, %v2696
        %v2736 = vmax.f32 %v2521, %v2698
        %v2737 = vmax.f32 %v2523, %v2700
        %v2738 = vmax.f32 %v2527, %v2704
        %v2739 = vmax.f32 %v2529, %v2706
        %v2740 = vmax.f32 %v2531, %v2708
        %v2741 = vmax.f32 %v2533, %v2710
        %v2742 = vmax.f32 %v2537, %v2714
        %v2743 = vmax.f32 %v2539, %v2716
        %v2744 = vmax.f32 %v2541, %v2718
        %v2745 = vmax.f32 %v2543, %v2720
        %v2746 = vpack.c.bf16 %v2724, %v2722
        %v2747 = vpack.c.bf16 %v2725, %v2723
        %v2748 = vpack.c.bf16 %v2728, %v2726
        %v2749 = vpack.c.bf16 %v2729, %v2727
        %v2750 = vpack.c.bf16 %v2732, %v2730
        %v2751 = vpack.c.bf16 %v2733, %v2731
        %v2752 = vpack.c.bf16 %v2736, %v2734
        %v2753 = vpack.c.bf16 %v2737, %v2735
        %v2754 = vpack.c.bf16 %v2740, %v2738
        %v2755 = vpack.c.bf16 %v2741, %v2739
        %v2756 = vpack.c.bf16 %v2744, %v2742
        %v2757 = vpack.c.bf16 %v2745, %v2743
        %v2758 = vld [vmem:[%s5] sm:$0xf]
        %v2759 = vld [vmem:[%s5 + $0x4] sm:$0xf]
        %v2760 = vld [vmem:[%s5 + $0x8] sm:$0xf]
        %v2761 = vld [vmem:[%s5 + $0xc] sm:$0xf]
        %v2762 = vld [vmem:[%s5 + $0x10] sm:$0xf]
        %v2763 = vld [vmem:[%s5 + $0x14] sm:$0xf]
        %v2764 = vld [vmem:[%s5 + $0x18] sm:$0xf]
        %v2765 = vld [vmem:[%s5 + $0x1c] sm:$0xf]
        %v2766 = vld [vmem:[%s5 + $0x20] sm:$0xf]
        %v2767 = vld [vmem:[%s5 + $0x24] sm:$0xf]
        %v2768 = vld [vmem:[%s5 + $0x28] sm:$0xf]
        %v2769 = vld [vmem:[%s5 + $0x2c] sm:$0xf]
        %v2770 = vld [vmem:[%s5 + $0x30] sm:$0xf]
        %v2771 = vld [vmem:[%s5 + $0x34] sm:$0xf]
        %v2772 = vld [vmem:[%s5 + $0x38] sm:$0xf]
        %v2773 = vld [vmem:[%s5 + $0x3c] sm:$0xf]
        %v2774 = vld [vmem:[%s5 + $0x40] sm:$0xf]
        %v2775 = vld [vmem:[%s5 + $0x44] sm:$0xf]
        %v2776 = vld [vmem:[%s5 + $0x48] sm:$0xf]
        %v2777 = vld [vmem:[%s5 + $0x4c] sm:$0xf]
        %v2778 = vld [vmem:[%s5 + $0x50] sm:$0xf]
        %v2779 = vld [vmem:[%s5 + $0x54] sm:$0xf]
        %v2780 = vld [vmem:[%s5 + $0x58] sm:$0xf]
        %v2781 = vld [vmem:[%s5 + $0x5c] sm:$0xf]
        %v2782 = vld [vmem:[%s5 + $0x60] sm:$0xf]
        %v2783 = vld [vmem:[%s5 + $0x64] sm:$0xf]
        %v2784 = vld [vmem:[%s5 + $0x68] sm:$0xf]
        %v2785 = vld [vmem:[%s5 + $0x6c] sm:$0xf]
        %v2786 = vld [vmem:[%s5 + $0x70] sm:$0xf]
        %v2787 = vld [vmem:[%s5 + $0x74] sm:$0xf]
        %v2818 = vunpack.c.l.b16 %v2758
        %v2819 = vunpack.c.l.b16 %v2759
        %v2820 = vunpack.c.l.b16 %v2760
        %v2821 = vunpack.c.l.b16 %v2761
        %v2822 = vunpack.c.l.b16 %v2762
        %v2823 = vunpack.c.l.b16 %v2763
        %v2824 = vunpack.c.l.b16 %v2764
        %v2825 = vunpack.c.l.b16 %v2765
        %v2826 = vunpack.c.l.b16 %v2766
        %v2827 = vunpack.c.l.b16 %v2767
        %v2828 = vunpack.c.l.b16 %v2768
        %v2829 = vunpack.c.l.b16 %v2769
        %v2830 = vunpack.c.l.b16 %v2770
        %v2831 = vunpack.c.l.b16 %v2771
        %v2832 = vunpack.c.l.b16 %v2772
        %v2833 = vunpack.c.l.b16 %v2773
        %v2834 = vunpack.c.l.b16 %v2774
        %v2835 = vunpack.c.l.b16 %v2775
        %v2836 = vunpack.c.l.b16 %v2776
        %v2837 = vunpack.c.l.b16 %v2777
        %v2838 = vunpack.c.l.b16 %v2778
        %v2839 = vunpack.c.l.b16 %v2779
        %v2840 = vunpack.c.l.b16 %v2780
        %v2841 = vunpack.c.l.b16 %v2781
        %v2842 = vunpack.c.l.b16 %v2782
        %v2843 = vunpack.c.l.b16 %v2783
        %v2844 = vunpack.c.l.b16 %v2784
        %v2845 = vunpack.c.l.b16 %v2785
        %v2846 = vunpack.c.l.b16 %v2786
        %v2847 = vunpack.c.l.b16 %v2787
        %v2848 = vpack.c.b16 %v2819, %v2818
        %v2849 = vpack.c.b16 %v2821, %v2820
        %v2850 = vpack.c.b16 %v2823, %v2822
        %v2851 = vpack.c.b16 %v2825, %v2824
        %v2852 = vpack.c.b16 %v2827, %v2826
        %v2853 = vpack.c.b16 %v2829, %v2828
        %v2854 = vpack.c.b16 %v2831, %v2830
        %v2855 = vpack.c.b16 %v2833, %v2832
        %v2856 = vpack.c.b16 %v2835, %v2834
        %v2857 = vpack.c.b16 %v2837, %v2836
        %v2858 = vpack.c.b16 %v2839, %v2838
        %v2859 = vpack.c.b16 %v2841, %v2840
        %v2860 = vpack.c.b16 %v2843, %v2842
        %v2861 = vpack.c.b16 %v2845, %v2844
        %v2862 = vpack.c.b16 %v2847, %v2846
        %vm2878 = vcmask 916480
        %v2880 = vsel %vm2878, %v2747, 0
        %v2883 = vsel %vm2878, %v2749, 0
        %v2886 = vsel %vm2878, %v2751, 0
        %v2889 = vsel %vm2878, %v2753, 0
        %v2892 = vsel %vm2878, %v2755, 0
        %v2895 = vsel %vm2878, %v2757, 0
        %2897 = vmatprep.subr.bf16.mxu0 0
        %2898 = vmatpush1.bf16.msra.mxu0 %v2855
        %2899 = vmatprep.subr.bf16.mxu0 0
        %2900 = vmatpush1.bf16.msra.mxu0 %v2854
        %2901 = vmatprep.subr.bf16.mxu0 0
        %2902 = vmatpush1.bf16.msra.mxu0 %v2853
        %2903 = vmatprep.subr.bf16.mxu0 0
        %2904 = vmatpush1.bf16.msra.mxu0 %v2852
        %2905 = vmatprep.subr.bf16.mxu0 0
        %2906 = vmatpush1.bf16.msra.mxu0 %v2851
        %2907 = vmatprep.subr.bf16.mxu0 0
        %2908 = vmatpush1.bf16.msra.mxu0 %v2850
        %2909 = vmatprep.subr.bf16.mxu0 0
        %2910 = vmatpush1.bf16.msra.mxu0 %v2849
        %2911 = vmatprep.subr.bf16.mxu0 0
        %2912 = vmatpush1.bf16.msra.mxu0 %v2848
        %2913 = vmatprep.subr.bf16.mxu0 0
        %2914 = vmatpush2.bf16.msra.mxu0 0
        %2915 = vmatprep.subr.bf16.mxu0 0
        %2916 = vmatpush2.bf16.msra.mxu0 %v2862
        %2917 = vmatprep.subr.bf16.mxu0 0
        %2918 = vmatpush2.bf16.msra.mxu0 %v2861
        %2919 = vmatprep.subr.bf16.mxu0 0
        %2920 = vmatpush2.bf16.msra.mxu0 %v2860
        %2921 = vmatprep.subr.bf16.mxu0 0
        %2922 = vmatpush2.bf16.msra.mxu0 %v2859
        %2923 = vmatprep.subr.bf16.mxu0 0
        %2924 = vmatpush2.bf16.msra.mxu0 %v2858
        %2925 = vmatprep.subr.bf16.mxu0 0
        %2926 = vmatpush2.bf16.msra.mxu0 %v2857
        %2927 = vmatprep.subr.bf16.mxu0 0
        %2928 = vmatpush2.bf16.msra.mxu0 %v2856
        %2929 = vmatprep.mubr.bf16.mxu0 %v2880
        %2930 = vmatmul.mubr.bf16.gmra.mxu0 %v2746
        %v2931 = vpop.f32.mrf.mxu0
        %v2932 = vadd.f32 0.0, %v2931
        %v2933 = vpop.f32.mrf.mxu0
        %v2934 = vpop.f32.mrf.mxu0
        %v2935 = vadd.f32 0.0, %v2934
        %v2936 = vpop.f32.mrf.mxu0
        %2937 = vmatprep.mubr.bf16.mxu0 %v2883
        %2938 = vmatmul.mubr.bf16.gmra.mxu0 %v2748
        %v2939 = vpop.f32.mrf.mxu0
        %v2940 = vadd.f32 0.0, %v2939
        %v2941 = vpop.f32.mrf.mxu0
        %v2942 = vpop.f32.mrf.mxu0
        %v2943 = vadd.f32 0.0, %v2942
        %v2944 = vpop.f32.mrf.mxu0
        %2945 = vmatprep.mubr.bf16.mxu0 %v2886
        %2946 = vmatmul.mubr.bf16.gmra.mxu0 %v2750
        %v2947 = vpop.f32.mrf.mxu0
        %v2948 = vadd.f32 0.0, %v2947
        %v2949 = vpop.f32.mrf.mxu0
        %v2950 = vpop.f32.mrf.mxu0
        %v2951 = vadd.f32 0.0, %v2950
        %v2952 = vpop.f32.mrf.mxu0
        %2953 = vmatprep.mubr.bf16.mxu0 %v2889
        %2954 = vmatmul.mubr.bf16.gmra.mxu0 %v2752
        %v2955 = vpop.f32.mrf.mxu0
        %v2956 = vadd.f32 0.0, %v2955
        %v2957 = vpop.f32.mrf.mxu0
        %v2958 = vpop.f32.mrf.mxu0
        %v2959 = vadd.f32 0.0, %v2958
        %v2960 = vpop.f32.mrf.mxu0
        %2961 = vmatprep.mubr.bf16.mxu0 %v2892
        %2962 = vmatmul.mubr.bf16.gmra.mxu0 %v2754
        %v2963 = vpop.f32.mrf.mxu0
        %v2964 = vadd.f32 0.0, %v2963
        %v2965 = vpop.f32.mrf.mxu0
        %v2966 = vpop.f32.mrf.mxu0
        %v2967 = vadd.f32 0.0, %v2966
        %v2968 = vpop.f32.mrf.mxu0
        %2969 = vmatprep.mubr.bf16.mxu0 %v2895
        %2970 = vmatmul.mubr.bf16.gmra.mxu0 %v2756
        %v2971 = vpop.f32.mrf.mxu0
        %v2972 = vadd.f32 0.0, %v2971
        %v2973 = vpop.f32.mrf.mxu0
        %v2974 = vpop.f32.mrf.mxu0
        %v2975 = vadd.f32 0.0, %v2974
        %v2976 = vpop.f32.mrf.mxu0
        %2977 = vdwg.mxu0
        %v2978 = vld [vmem:[%s6] sm:$0xf]
        %v2979 = vld [vmem:[%s6 + $0x4] sm:$0xf]
        %v2980 = vld [vmem:[%s6 + $0x8] sm:$0xf]
        %v2981 = vld [vmem:[%s6 + $0xc] sm:$0xf]
        %v2982 = vld [vmem:[%s6 + $0x10] sm:$0xf]
        %v2983 = vld [vmem:[%s6 + $0x14] sm:$0xf]
        %v2984 = vld [vmem:[%s6 + $0x18] sm:$0xf]
        %v2985 = vld [vmem:[%s6 + $0x1c] sm:$0xf]
        %v2986 = vld [vmem:[%s6 + $0x20] sm:$0xf]
        %v2987 = vld [vmem:[%s6 + $0x24] sm:$0xf]
        %v2988 = vld [vmem:[%s6 + $0x28] sm:$0xf]
        %v2989 = vld [vmem:[%s6 + $0x2c] sm:$0xf]
        %v2990 = vld [vmem:[%s6 + $0x30] sm:$0xf]
        %v2991 = vld [vmem:[%s6 + $0x34] sm:$0xf]
        %v2992 = vld [vmem:[%s6 + $0x38] sm:$0xf]
        %v2993 = vld [vmem:[%s6 + $0x3c] sm:$0xf]
        %v2994 = vld [vmem:[%s6 + $0x40] sm:$0xf]
        %v2995 = vld [vmem:[%s6 + $0x44] sm:$0xf]
        %v2996 = vld [vmem:[%s6 + $0x48] sm:$0xf]
        %v2997 = vld [vmem:[%s6 + $0x4c] sm:$0xf]
        %v2998 = vld [vmem:[%s6 + $0x50] sm:$0xf]
        %v2999 = vld [vmem:[%s6 + $0x54] sm:$0xf]
        %v3000 = vld [vmem:[%s6 + $0x58] sm:$0xf]
        %v3001 = vld [vmem:[%s6 + $0x5c] sm:$0xf]
        %v3002 = vld [vmem:[%s6 + $0x60] sm:$0xf]
        %v3003 = vld [vmem:[%s6 + $0x64] sm:$0xf]
        %v3004 = vld [vmem:[%s6 + $0x68] sm:$0xf]
        %v3005 = vld [vmem:[%s6 + $0x6c] sm:$0xf]
        %v3006 = vld [vmem:[%s6 + $0x70] sm:$0xf]
        %v3007 = vld [vmem:[%s6 + $0x74] sm:$0xf]
        %v3038 = vunpack.c.l.b16 %v2978
        %v3039 = vunpack.c.l.b16 %v2979
        %v3040 = vunpack.c.l.b16 %v2980
        %v3041 = vunpack.c.l.b16 %v2981
        %v3042 = vunpack.c.l.b16 %v2982
        %v3043 = vunpack.c.l.b16 %v2983
        %v3044 = vunpack.c.l.b16 %v2984
        %v3045 = vunpack.c.l.b16 %v2985
        %v3046 = vunpack.c.l.b16 %v2986
        %v3047 = vunpack.c.l.b16 %v2987
        %v3048 = vunpack.c.l.b16 %v2988
        %v3049 = vunpack.c.l.b16 %v2989
        %v3050 = vunpack.c.l.b16 %v2990
        %v3051 = vunpack.c.l.b16 %v2991
        %v3052 = vunpack.c.l.b16 %v2992
        %v3053 = vunpack.c.l.b16 %v2993
        %v3054 = vunpack.c.l.b16 %v2994
        %v3055 = vunpack.c.l.b16 %v2995
        %v3056 = vunpack.c.l.b16 %v2996
        %v3057 = vunpack.c.l.b16 %v2997
        %v3058 = vunpack.c.l.b16 %v2998
        %v3059 = vunpack.c.l.b16 %v2999
        %v3060 = vunpack.c.l.b16 %v3000
        %v3061 = vunpack.c.l.b16 %v3001
        %v3062 = vunpack.c.l.b16 %v3002
        %v3063 = vunpack.c.l.b16 %v3003
        %v3064 = vunpack.c.l.b16 %v3004
        %v3065 = vunpack.c.l.b16 %v3005
        %v3066 = vunpack.c.l.b16 %v3006
        %v3067 = vunpack.c.l.b16 %v3007
        %v3068 = vpack.c.b16 %v3039, %v3038
        %v3069 = vpack.c.b16 %v3041, %v3040
        %v3070 = vpack.c.b16 %v3043, %v3042
        %v3071 = vpack.c.b16 %v3045, %v3044
        %v3072 = vpack.c.b16 %v3047, %v3046
        %v3073 = vpack.c.b16 %v3049, %v3048
        %v3074 = vpack.c.b16 %v3051, %v3050
        %v3075 = vpack.c.b16 %v3053, %v3052
        %v3076 = vpack.c.b16 %v3055, %v3054
        %v3077 = vpack.c.b16 %v3057, %v3056
        %v3078 = vpack.c.b16 %v3059, %v3058
        %v3079 = vpack.c.b16 %v3061, %v3060
        %v3080 = vpack.c.b16 %v3063, %v3062
        %v3081 = vpack.c.b16 %v3065, %v3064
        %v3082 = vpack.c.b16 %v3067, %v3066
        %3098 = vmatprep.subr.bf16.mxu0 0
        %3099 = vmatpush1.bf16.msra.mxu0 %v3075
        %3100 = vmatprep.subr.bf16.mxu0 0
        %3101 = vmatpush1.bf16.msra.mxu0 %v3074
        %3102 = vmatprep.subr.bf16.mxu0 0
        %3103 = vmatpush1.bf16.msra.mxu0 %v3073
        %3104 = vmatprep.subr.bf16.mxu0 0
        %3105 = vmatpush1.bf16.msra.mxu0 %v3072
        %3106 = vmatprep.subr.bf16.mxu0 0
        %3107 = vmatpush1.bf16.msra.mxu0 %v3071
        %3108 = vmatprep.subr.bf16.mxu0 0
        %3109 = vmatpush1.bf16.msra.mxu0 %v3070
        %3110 = vmatprep.subr.bf16.mxu0 0
        %3111 = vmatpush1.bf16.msra.mxu0 %v3069
        %3112 = vmatprep.subr.bf16.mxu0 0
        %3113 = vmatpush1.bf16.msra.mxu0 %v3068
        %3114 = vmatprep.subr.bf16.mxu0 0
        %3115 = vmatpush2.bf16.msra.mxu0 0
        %3116 = vmatprep.subr.bf16.mxu0 0
        %3117 = vmatpush2.bf16.msra.mxu0 %v3082
        %3118 = vmatprep.subr.bf16.mxu0 0
        %3119 = vmatpush2.bf16.msra.mxu0 %v3081
        %3120 = vmatprep.subr.bf16.mxu0 0
        %3121 = vmatpush2.bf16.msra.mxu0 %v3080
        %3122 = vmatprep.subr.bf16.mxu0 0
        %3123 = vmatpush2.bf16.msra.mxu0 %v3079
        %3124 = vmatprep.subr.bf16.mxu0 0
        %3125 = vmatpush2.bf16.msra.mxu0 %v3078
        %3126 = vmatprep.subr.bf16.mxu0 0
        %3127 = vmatpush2.bf16.msra.mxu0 %v3077
        %3128 = vmatprep.subr.bf16.mxu0 0
        %3129 = vmatpush2.bf16.msra.mxu0 %v3076
        %3130 = vmatprep.mubr.bf16.mxu0 %v2880
        %3131 = vmatmul.mubr.bf16.gmra.mxu0 %v2746
        %v3132 = vpop.f32.mrf.mxu0
        %v3133 = vadd.f32 0.0, %v3132
        %v3134 = vpop.f32.mrf.mxu0
        %v3135 = vpop.f32.mrf.mxu0
        %v3136 = vadd.f32 0.0, %v3135
        %v3137 = vpop.f32.mrf.mxu0
        %3138 = vmatprep.mubr.bf16.mxu0 %v2883
        %3139 = vmatmul.mubr.bf16.gmra.mxu0 %v2748
        %v3140 = vpop.f32.mrf.mxu0
        %v3141 = vadd.f32 0.0, %v3140
        %v3142 = vpop.f32.mrf.mxu0
        %v3143 = vpop.f32.mrf.mxu0
        %v3144 = vadd.f32 0.0, %v3143
        %v3145 = vpop.f32.mrf.mxu0
        %3146 = vmatprep.mubr.bf16.mxu0 %v2886
        %3147 = vmatmul.mubr.bf16.gmra.mxu0 %v2750
        %v3148 = vpop.f32.mrf.mxu0
        %v3149 = vadd.f32 0.0, %v3148
        %v3150 = vpop.f32.mrf.mxu0
        %v3151 = vpop.f32.mrf.mxu0
        %v3152 = vadd.f32 0.0, %v3151
        %v3153 = vpop.f32.mrf.mxu0
        %3154 = vmatprep.mubr.bf16.mxu0 %v2889
        %3155 = vmatmul.mubr.bf16.gmra.mxu0 %v2752
        %v3156 = vpop.f32.mrf.mxu0
        %v3157 = vadd.f32 0.0, %v3156
        %v3158 = vpop.f32.mrf.mxu0
        %v3159 = vpop.f32.mrf.mxu0
        %v3160 = vadd.f32 0.0, %v3159
        %v3161 = vpop.f32.mrf.mxu0
        %3162 = vmatprep.mubr.bf16.mxu0 %v2892
        %3163 = vmatmul.mubr.bf16.gmra.mxu0 %v2754
        %v3164 = vpop.f32.mrf.mxu0
        %v3165 = vadd.f32 0.0, %v3164
        %v3166 = vpop.f32.mrf.mxu0
        %v3167 = vpop.f32.mrf.mxu0
        %v3168 = vadd.f32 0.0, %v3167
        %v3169 = vpop.f32.mrf.mxu0
        %3170 = vmatprep.mubr.bf16.mxu0 %v2895
        %3171 = vmatmul.mubr.bf16.gmra.mxu0 %v2756
        %v3172 = vpop.f32.mrf.mxu0
        %v3173 = vadd.f32 0.0, %v3172
        %v3174 = vpop.f32.mrf.mxu0
        %v3175 = vpop.f32.mrf.mxu0
        %v3176 = vadd.f32 0.0, %v3175
        %v3177 = vpop.f32.mrf.mxu0
        %3178 = vdwg.mxu0
        %v3179 = vmax.f32 %v2932, %v3133
        %v3180 = vmax.f32 %v2935, %v3136
        %v3181 = vmax.f32 %v2940, %v3141
        %v3182 = vmax.f32 %v2943, %v3144
        %v3183 = vmax.f32 %v2948, %v3149
        %v3184 = vmax.f32 %v2951, %v3152
        %v3185 = vmax.f32 %v2956, %v3157
        %v3186 = vmax.f32 %v2959, %v3160
        %v3187 = vmax.f32 %v2964, %v3165
        %v3188 = vmax.f32 %v2967, %v3168
        %v3189 = vmax.f32 %v2972, %v3173
        %v3190 = vmax.f32 %v2975, %v3176
        %v3191 = vmax.f32 %v3179, 0.0
        %v3192 = vmax.f32 %v3180, 0.0
        %v3193 = vmax.f32 %v3181, 0.0
        %v3194 = vmax.f32 %v3182, 0.0
        %v3195 = vmax.f32 %v3183, 0.0
        %v3196 = vmax.f32 %v3184, 0.0
        %v3197 = vmax.f32 %v3185, 0.0
        %v3198 = vmax.f32 %v3186, 0.0
        %v3199 = vmax.f32 %v3187, 0.0
        %v3200 = vmax.f32 %v3188, 0.0
        %v3201 = vmax.f32 %v3189, 0.0
        %v3202 = vmax.f32 %v3190, 0.0
        %v3203 = vpack.c.bf16 %v3192, %v3191
        %v3204 = vpack.c.bf16 %v3194, %v3193
        %v3205 = vpack.c.bf16 %v3196, %v3195
        %v3206 = vpack.c.bf16 %v3198, %v3197
        %v3207 = vpack.c.bf16 %v3200, %v3199
        %v3208 = vpack.c.bf16 %v3202, %v3201
        %v3209 = vld [vmem:[%s8] sm:$0x3]
        %v3210 = vld [vmem:[%s7] sm:$0xff]
        %v3211 = vld [vmem:[%s7 + $0x8] sm:$0xff]
        %v3212 = vld [vmem:[%s7 + $0x10] sm:$0xff]
        %v3213 = vld [vmem:[%s7 + $0x18] sm:$0xff]
        %v3214 = vld [vmem:[%s7 + $0x20] sm:$0xff]
        %v3215 = vld [vmem:[%s7 + $0x28] sm:$0xff]
        %v3216 = vld [vmem:[%s7 + $0x30] sm:$0xff]
        %v3217 = vld [vmem:[%s7 + $0x38] sm:$0xff]
        %v3218 = vld [vmem:[%s7 + $0x40] sm:$0xff]
        %v3219 = vld [vmem:[%s7 + $0x48] sm:$0xff]
        %v3220 = vld [vmem:[%s7 + $0x50] sm:$0xff]
        %v3221 = vld [vmem:[%s7 + $0x58] sm:$0xff]
        %v3222 = vld [vmem:[%s7 + $0x60] sm:$0xff]
        %v3223 = vld [vmem:[%s7 + $0x68] sm:$0xff]
        %v3224 = vld [vmem:[%s7 + $0x70] sm:$0xff]
        %v3240 = vunpack.c.l.b16 %v3210
        %v3241 = vunpack.c.h.b16 %v3210
        %v3242 = vunpack.c.l.b16 %v3211
        %v3243 = vunpack.c.h.b16 %v3211
        %v3244 = vunpack.c.l.b16 %v3212
        %v3245 = vunpack.c.h.b16 %v3212
        %v3246 = vunpack.c.l.b16 %v3213
        %v3247 = vunpack.c.h.b16 %v3213
        %v3248 = vunpack.c.l.b16 %v3214
        %v3249 = vunpack.c.h.b16 %v3214
        %v3250 = vunpack.c.l.b16 %v3215
        %v3251 = vunpack.c.h.b16 %v3215
        %v3252 = vunpack.c.l.b16 %v3216
        %v3253 = vunpack.c.h.b16 %v3216
        %v3254 = vunpack.c.l.b16 %v3217
        %v3255 = vunpack.c.h.b16 %v3217
        %v3256 = vunpack.c.l.b16 %v3218
        %v3257 = vunpack.c.h.b16 %v3218
        %v3258 = vunpack.c.l.b16 %v3219
        %v3259 = vunpack.c.h.b16 %v3219
        %v3260 = vunpack.c.l.b16 %v3220
        %v3261 = vunpack.c.h.b16 %v3220
        %v3262 = vunpack.c.l.b16 %v3221
        %v3263 = vunpack.c.h.b16 %v3221
        %v3264 = vunpack.c.l.b16 %v3222
        %v3265 = vunpack.c.h.b16 %v3222
        %v3266 = vunpack.c.l.b16 %v3223
        %v3267 = vunpack.c.h.b16 %v3223
        %v3268 = vunpack.c.l.b16 %v3224
        %v3269 = vunpack.c.h.b16 %v3224
        %v3270 = vpack.c.b16 %v3242, %v3240
        %v3271 = vpack.c.b16 %v3243, %v3241
        %v3272 = vpack.c.b16 %v3246, %v3244
        %v3273 = vpack.c.b16 %v3247, %v3245
        %v3274 = vpack.c.b16 %v3250, %v3248
        %v3275 = vpack.c.b16 %v3251, %v3249
        %v3276 = vpack.c.b16 %v3254, %v3252
        %v3277 = vpack.c.b16 %v3255, %v3253
        %v3278 = vpack.c.b16 %v3258, %v3256
        %v3279 = vpack.c.b16 %v3259, %v3257
        %v3280 = vpack.c.b16 %v3262, %v3260
        %v3281 = vpack.c.b16 %v3263, %v3261
        %v3282 = vpack.c.b16 %v3266, %v3264
        %v3283 = vpack.c.b16 %v3267, %v3265
        %v3284 = vpack.c.b16 %v3268, %v3268
        %v3285 = vpack.c.b16 %v3269, %v3269
        %vm3300 = vcmask 982016
        %v3302 = vsel %vm3300, %v3203, 0
        %v3305 = vsel %vm3300, %v3204, 0
        %v3308 = vsel %vm3300, %v3205, 0
        %v3311 = vsel %vm3300, %v3206, 0
        %v3314 = vsel %vm1984, %v3284, 0
        %v3317 = vsel %vm1984, %v3285, 0
        %3319 = vmatprep.subr.bf16.mxu0 %v3317
        %3320 = vmatpush1.bf16.msra.mxu0 %v3314
        %3321 = vmatprep.subr.bf16.mxu0 %v3283
        %3322 = vmatpush1.bf16.msra.mxu0 %v3282
        %3323 = vmatprep.subr.bf16.mxu0 %v3281
        %3324 = vmatpush1.bf16.msra.mxu0 %v3280
        %3325 = vmatprep.subr.bf16.mxu0 %v3279
        %3326 = vmatpush1.bf16.msra.mxu0 %v3278
        %3327 = vmatprep.subr.bf16.mxu0 %v3277
        %3328 = vmatpush1.bf16.msra.mxu0 %v3276
        %3329 = vmatprep.subr.bf16.mxu0 %v3275
        %3330 = vmatpush1.bf16.msra.mxu0 %v3274
        %3331 = vmatprep.subr.bf16.mxu0 %v3273
        %3332 = vmatpush1.bf16.msra.mxu0 %v3272
        %3333 = vmatprep.subr.bf16.mxu0 %v3271
        %3334 = vmatpush1.bf16.msra.mxu0 %v3270
        %3335 = vmatprep.subr.bf16.mxu0 0
        %3336 = vmatpush2.bf16.msra.mxu0 0
        %3337 = vmatprep.subr.bf16.mxu0 0
        %3338 = vmatpush2.bf16.msra.mxu0 0
        %3339 = vmatprep.subr.bf16.mxu0 0
        %3340 = vmatpush2.bf16.msra.mxu0 0
        %3341 = vmatprep.subr.bf16.mxu0 0
        %3342 = vmatpush2.bf16.msra.mxu0 0
        %3343 = vmatprep.subr.bf16.mxu0 0
        %3344 = vmatpush2.bf16.msra.mxu0 0
        %3345 = vmatprep.subr.bf16.mxu0 0
        %3346 = vmatpush2.bf16.msra.mxu0 0
        %3347 = vmatprep.subr.bf16.mxu0 0
        %3348 = vmatpush2.bf16.msra.mxu0 0
        %3349 = vmatprep.subr.bf16.mxu0 0
        %3350 = vmatpush2.bf16.msra.mxu0 0
        %3351 = vmatprep.mubr.bf16.mxu0 0
        %3352 = vmatmul.mubr.bf16.gmra.mxu0 %v3302
        %v3353 = vpop.f32.mrf.mxu0
        %v3354 = vadd.f32 0.0, %v3353
        %v3355 = vpop.f32.mrf.mxu0
        %v3356 = vadd.f32 0.0, %v3355
        %v3357 = vpop.f32.mrf.mxu0
        %v3358 = vadd.f32 0.0, %v3357
        %v3359 = vpop.f32.mrf.mxu0
        %v3360 = vadd.f32 0.0, %v3359
        %3361 = vmatprep.mubr.bf16.mxu0 0
        %3362 = vmatmul.mubr.bf16.gmra.mxu0 %v3305
        %v3363 = vpop.f32.mrf.mxu0
        %v3364 = vadd.f32 0.0, %v3363
        %v3365 = vpop.f32.mrf.mxu0
        %v3366 = vadd.f32 0.0, %v3365
        %v3367 = vpop.f32.mrf.mxu0
        %v3368 = vadd.f32 0.0, %v3367
        %v3369 = vpop.f32.mrf.mxu0
        %v3370 = vadd.f32 0.0, %v3369
        %3371 = vmatprep.mubr.bf16.mxu0 0
        %3372 = vmatmul.mubr.bf16.gmra.mxu0 %v3308
        %v3373 = vpop.f32.mrf.mxu0
        %v3374 = vadd.f32 0.0, %v3373
        %v3375 = vpop.f32.mrf.mxu0
        %v3376 = vadd.f32 0.0, %v3375
        %v3377 = vpop.f32.mrf.mxu0
        %v3378 = vadd.f32 0.0, %v3377
        %v3379 = vpop.f32.mrf.mxu0
        %v3380 = vadd.f32 0.0, %v3379
        %3381 = vmatprep.mubr.bf16.mxu0 0
        %3382 = vmatmul.mubr.bf16.gmra.mxu0 %v3311
        %v3383 = vpop.f32.mrf.mxu0
        %v3384 = vadd.f32 0.0, %v3383
        %v3385 = vpop.f32.mrf.mxu0
        %v3386 = vadd.f32 0.0, %v3385
        %v3387 = vpop.f32.mrf.mxu0
        %v3388 = vadd.f32 0.0, %v3387
        %v3389 = vpop.f32.mrf.mxu0
        %v3390 = vadd.f32 0.0, %v3389
        %3391 = vdwg.mxu0
        %v3393 = vlaneseq
        %v3394 = vshrl.u32 %v3393, 7
        %v3395 = vsub.s32 0, %v3394
        %v3396 = vrot.slane %v3209, %v3395
        %v3397 = vlaneseq
        %v3398 = vshrl.u32 %v3397, 7
        %v3399 = vsub.s32 1, %v3398
        %v3400 = vrot.slane %v3209, %v3399
        %v3403 = vadd.f32 %v3396, %v3354
        %v3404 = vadd.f32 %v3400, %v3356
        %v3405 = vadd.f32 %v3396, %v3358
        %v3406 = vadd.f32 %v3400, %v3360
        %v3407 = vadd.f32 %v3396, %v3364
        %v3408 = vadd.f32 %v3400, %v3366
        %v3409 = vadd.f32 %v3396, %v3368
        %v3410 = vadd.f32 %v3400, %v3370
        %v3411 = vadd.f32 %v3396, %v3374
        %v3412 = vadd.f32 %v3400, %v3376
        %v3413 = vadd.f32 %v3396, %v3378
        %v3414 = vadd.f32 %v3400, %v3380
        %v3415 = vadd.f32 %v3396, %v3384
        %v3416 = vadd.f32 %v3400, %v3386
        %v3417 = vadd.f32 %v3396, %v3388
        %v3418 = vadd.f32 %v3400, %v3390
        %s3419 = scalar_lea.vmem %s7, 120
        %v3420 = vld [vmem:[%s3419] sm:$0xff]
        %v3421 = vld [vmem:[%s3419 + $0x8] sm:$0xff]
        %v3422 = vld [vmem:[%s3419 + $0x10] sm:$0xff]
        %v3423 = vld [vmem:[%s3419 + $0x18] sm:$0xff]
        %v3424 = vld [vmem:[%s3419 + $0x20] sm:$0xff]
        %v3425 = vld [vmem:[%s3419 + $0x28] sm:$0xff]
        %v3426 = vld [vmem:[%s3419 + $0x30] sm:$0xff]
        %v3427 = vld [vmem:[%s3419 + $0x38] sm:$0xff]
        %v3428 = vld [vmem:[%s3419 + $0x40] sm:$0xff]
        %v3429 = vld [vmem:[%s3419 + $0x48] sm:$0xff]
        %v3430 = vld [vmem:[%s3419 + $0x50] sm:$0xff]
        %v3431 = vld [vmem:[%s3419 + $0x58] sm:$0xff]
        %v3432 = vld [vmem:[%s3419 + $0x60] sm:$0xff]
        %v3433 = vld [vmem:[%s3419 + $0x68] sm:$0xff]
        %v3434 = vld [vmem:[%s3419 + $0x70] sm:$0xff]
        %vm3440 = vcmask 1043456
        %v3441 = vrot.slane %v3203, 4
        %v3442 = vrot.slane %v3204, 4
        %v3443 = vsel %vm3440, %v3441, %v3442
        %v3444 = vrot.slane %v3205, 4
        %v3445 = vsel %vm3440, %v3442, %v3444
        %v3446 = vrot.slane %v3206, 4
        %v3447 = vsel %vm3440, %v3444, %v3446
        %v3448 = vrot.slane %v3207, 4
        %v3449 = vsel %vm3440, %v3446, %v3448
        %v3465 = vunpack.c.l.b16 %v3420
        %v3466 = vunpack.c.h.b16 %v3420
        %v3467 = vunpack.c.l.b16 %v3421
        %v3468 = vunpack.c.h.b16 %v3421
        %v3469 = vunpack.c.l.b16 %v3422
        %v3470 = vunpack.c.h.b16 %v3422
        %v3471 = vunpack.c.l.b16 %v3423
        %v3472 = vunpack.c.h.b16 %v3423
        %v3473 = vunpack.c.l.b16 %v3424
        %v3474 = vunpack.c.h.b16 %v3424
        %v3475 = vunpack.c.l.b16 %v3425
        %v3476 = vunpack.c.h.b16 %v3425
        %v3477 = vunpack.c.l.b16 %v3426
        %v3478 = vunpack.c.h.b16 %v3426
        %v3479 = vunpack.c.l.b16 %v3427
        %v3480 = vunpack.c.h.b16 %v3427
        %v3481 = vunpack.c.l.b16 %v3428
        %v3482 = vunpack.c.h.b16 %v3428
        %v3483 = vunpack.c.l.b16 %v3429
        %v3484 = vunpack.c.h.b16 %v3429
        %v3485 = vunpack.c.l.b16 %v3430
        %v3486 = vunpack.c.h.b16 %v3430
        %v3487 = vunpack.c.l.b16 %v3431
        %v3488 = vunpack.c.h.b16 %v3431
        %v3489 = vunpack.c.l.b16 %v3432
        %v3490 = vunpack.c.h.b16 %v3432
        %v3491 = vunpack.c.l.b16 %v3433
        %v3492 = vunpack.c.h.b16 %v3433
        %v3493 = vunpack.c.l.b16 %v3434
        %v3494 = vunpack.c.h.b16 %v3434
        %v3495 = vpack.c.b16 %v3467, %v3465
        %v3496 = vpack.c.b16 %v3468, %v3466
        %v3497 = vpack.c.b16 %v3471, %v3469
        %v3498 = vpack.c.b16 %v3472, %v3470
        %v3499 = vpack.c.b16 %v3475, %v3473
        %v3500 = vpack.c.b16 %v3476, %v3474
        %v3501 = vpack.c.b16 %v3479, %v3477
        %v3502 = vpack.c.b16 %v3480, %v3478
        %v3503 = vpack.c.b16 %v3483, %v3481
        %v3504 = vpack.c.b16 %v3484, %v3482
        %v3505 = vpack.c.b16 %v3487, %v3485
        %v3506 = vpack.c.b16 %v3488, %v3486
        %v3507 = vpack.c.b16 %v3491, %v3489
        %v3508 = vpack.c.b16 %v3492, %v3490
        %v3509 = vpack.c.b16 %v3493, %v3493
        %v3510 = vpack.c.b16 %v3494, %v3494
        %v3526 = vsel %vm3300, %v3443, 0
        %v3529 = vsel %vm3300, %v3445, 0
        %v3532 = vsel %vm3300, %v3447, 0
        %v3535 = vsel %vm3300, %v3449, 0
        %v3538 = vsel %vm1984, %v3509, 0
        %v3541 = vsel %vm1984, %v3510, 0
        %3543 = vmatprep.subr.bf16.mxu0 %v3541
        %3544 = vmatpush1.bf16.msra.mxu0 %v3538
        %3545 = vmatprep.subr.bf16.mxu0 %v3508
        %3546 = vmatpush1.bf16.msra.mxu0 %v3507
        %3547 = vmatprep.subr.bf16.mxu0 %v3506
        %3548 = vmatpush1.bf16.msra.mxu0 %v3505
        %3549 = vmatprep.subr.bf16.mxu0 %v3504
        %3550 = vmatpush1.bf16.msra.mxu0 %v3503
        %3551 = vmatprep.subr.bf16.mxu0 %v3502
        %3552 = vmatpush1.bf16.msra.mxu0 %v3501
        %3553 = vmatprep.subr.bf16.mxu0 %v3500
        %3554 = vmatpush1.bf16.msra.mxu0 %v3499
        %3555 = vmatprep.subr.bf16.mxu0 %v3498
        %3556 = vmatpush1.bf16.msra.mxu0 %v3497
        %3557 = vmatprep.subr.bf16.mxu0 %v3496
        %3558 = vmatpush1.bf16.msra.mxu0 %v3495
        %3559 = vmatprep.subr.bf16.mxu0 0
        %3560 = vmatpush2.bf16.msra.mxu0 0
        %3561 = vmatprep.subr.bf16.mxu0 0
        %3562 = vmatpush2.bf16.msra.mxu0 0
        %3563 = vmatprep.subr.bf16.mxu0 0
        %3564 = vmatpush2.bf16.msra.mxu0 0
        %3565 = vmatprep.subr.bf16.mxu0 0
        %3566 = vmatpush2.bf16.msra.mxu0 0
        %3567 = vmatprep.subr.bf16.mxu0 0
        %3568 = vmatpush2.bf16.msra.mxu0 0
        %3569 = vmatprep.subr.bf16.mxu0 0
        %3570 = vmatpush2.bf16.msra.mxu0 0
        %3571 = vmatprep.subr.bf16.mxu0 0
        %3572 = vmatpush2.bf16.msra.mxu0 0
        %3573 = vmatprep.subr.bf16.mxu0 0
        %3574 = vmatpush2.bf16.msra.mxu0 0
        %3575 = vmatprep.mubr.bf16.mxu0 0
        %3576 = vmatmul.mubr.bf16.gmra.mxu0 %v3526
        %v3577 = vpop.f32.mrf.mxu0
        %v3578 = vadd.f32 0.0, %v3577
        %v3579 = vpop.f32.mrf.mxu0
        %v3580 = vadd.f32 0.0, %v3579
        %v3581 = vpop.f32.mrf.mxu0
        %v3582 = vadd.f32 0.0, %v3581
        %v3583 = vpop.f32.mrf.mxu0
        %v3584 = vadd.f32 0.0, %v3583
        %3585 = vmatprep.mubr.bf16.mxu0 0
        %3586 = vmatmul.mubr.bf16.gmra.mxu0 %v3529
        %v3587 = vpop.f32.mrf.mxu0
        %v3588 = vadd.f32 0.0, %v3587
        %v3589 = vpop.f32.mrf.mxu0
        %v3590 = vadd.f32 0.0, %v3589
        %v3591 = vpop.f32.mrf.mxu0
        %v3592 = vadd.f32 0.0, %v3591
        %v3593 = vpop.f32.mrf.mxu0
        %v3594 = vadd.f32 0.0, %v3593
        %3595 = vmatprep.mubr.bf16.mxu0 0
        %3596 = vmatmul.mubr.bf16.gmra.mxu0 %v3532
        %v3597 = vpop.f32.mrf.mxu0
        %v3598 = vadd.f32 0.0, %v3597
        %v3599 = vpop.f32.mrf.mxu0
        %v3600 = vadd.f32 0.0, %v3599
        %v3601 = vpop.f32.mrf.mxu0
        %v3602 = vadd.f32 0.0, %v3601
        %v3603 = vpop.f32.mrf.mxu0
        %v3604 = vadd.f32 0.0, %v3603
        %3605 = vmatprep.mubr.bf16.mxu0 0
        %3606 = vmatmul.mubr.bf16.gmra.mxu0 %v3535
        %v3607 = vpop.f32.mrf.mxu0
        %v3608 = vadd.f32 0.0, %v3607
        %v3609 = vpop.f32.mrf.mxu0
        %v3610 = vadd.f32 0.0, %v3609
        %v3611 = vpop.f32.mrf.mxu0
        %v3612 = vadd.f32 0.0, %v3611
        %v3613 = vpop.f32.mrf.mxu0
        %v3614 = vadd.f32 0.0, %v3613
        %3615 = vdwg.mxu0
        %v3616 = vadd.f32 %v3403, %v3578
        %v3617 = vadd.f32 %v3404, %v3580
        %v3618 = vadd.f32 %v3405, %v3582
        %v3619 = vadd.f32 %v3406, %v3584
        %v3620 = vadd.f32 %v3407, %v3588
        %v3621 = vadd.f32 %v3408, %v3590
        %v3622 = vadd.f32 %v3409, %v3592
        %v3623 = vadd.f32 %v3410, %v3594
        %v3624 = vadd.f32 %v3411, %v3598
        %v3625 = vadd.f32 %v3412, %v3600
        %v3626 = vadd.f32 %v3413, %v3602
        %v3627 = vadd.f32 %v3414, %v3604
        %v3628 = vadd.f32 %v3415, %v3608
        %v3629 = vadd.f32 %v3416, %v3610
        %v3630 = vadd.f32 %v3417, %v3612
        %v3631 = vadd.f32 %v3418, %v3614
        %s3632 = scalar_lea.vmem %s7, 240
        %v3633 = vld [vmem:[%s3632] sm:$0xff]
        %v3634 = vld [vmem:[%s3632 + $0x8] sm:$0xff]
        %v3635 = vld [vmem:[%s3632 + $0x10] sm:$0xff]
        %v3636 = vld [vmem:[%s3632 + $0x18] sm:$0xff]
        %v3637 = vld [vmem:[%s3632 + $0x20] sm:$0xff]
        %v3638 = vld [vmem:[%s3632 + $0x28] sm:$0xff]
        %v3639 = vld [vmem:[%s3632 + $0x30] sm:$0xff]
        %v3640 = vld [vmem:[%s3632 + $0x38] sm:$0xff]
        %v3641 = vld [vmem:[%s3632 + $0x40] sm:$0xff]
        %v3642 = vld [vmem:[%s3632 + $0x48] sm:$0xff]
        %v3643 = vld [vmem:[%s3632 + $0x50] sm:$0xff]
        %v3644 = vld [vmem:[%s3632 + $0x58] sm:$0xff]
        %v3645 = vld [vmem:[%s3632 + $0x60] sm:$0xff]
        %v3646 = vld [vmem:[%s3632 + $0x68] sm:$0xff]
        %v3647 = vld [vmem:[%s3632 + $0x70] sm:$0xff]
        %v3663 = vunpack.c.l.b16 %v3633
        %v3664 = vunpack.c.h.b16 %v3633
        %v3665 = vunpack.c.l.b16 %v3634
        %v3666 = vunpack.c.h.b16 %v3634
        %v3667 = vunpack.c.l.b16 %v3635
        %v3668 = vunpack.c.h.b16 %v3635
        %v3669 = vunpack.c.l.b16 %v3636
        %v3670 = vunpack.c.h.b16 %v3636
        %v3671 = vunpack.c.l.b16 %v3637
        %v3672 = vunpack.c.h.b16 %v3637
        %v3673 = vunpack.c.l.b16 %v3638
        %v3674 = vunpack.c.h.b16 %v3638
        %v3675 = vunpack.c.l.b16 %v3639
        %v3676 = vunpack.c.h.b16 %v3639
        %v3677 = vunpack.c.l.b16 %v3640
        %v3678 = vunpack.c.h.b16 %v3640
        %v3679 = vunpack.c.l.b16 %v3641
        %v3680 = vunpack.c.h.b16 %v3641
        %v3681 = vunpack.c.l.b16 %v3642
        %v3682 = vunpack.c.h.b16 %v3642
        %v3683 = vunpack.c.l.b16 %v3643
        %v3684 = vunpack.c.h.b16 %v3643
        %v3685 = vunpack.c.l.b16 %v3644
        %v3686 = vunpack.c.h.b16 %v3644
        %v3687 = vunpack.c.l.b16 %v3645
        %v3688 = vunpack.c.h.b16 %v3645
        %v3689 = vunpack.c.l.b16 %v3646
        %v3690 = vunpack.c.h.b16 %v3646
        %v3691 = vunpack.c.l.b16 %v3647
        %v3692 = vunpack.c.h.b16 %v3647
        %v3693 = vpack.c.b16 %v3665, %v3663
        %v3694 = vpack.c.b16 %v3666, %v3664
        %v3695 = vpack.c.b16 %v3669, %v3667
        %v3696 = vpack.c.b16 %v3670, %v3668
        %v3697 = vpack.c.b16 %v3673, %v3671
        %v3698 = vpack.c.b16 %v3674, %v3672
        %v3699 = vpack.c.b16 %v3677, %v3675
        %v3700 = vpack.c.b16 %v3678, %v3676
        %v3701 = vpack.c.b16 %v3681, %v3679
        %v3702 = vpack.c.b16 %v3682, %v3680
        %v3703 = vpack.c.b16 %v3685, %v3683
        %v3704 = vpack.c.b16 %v3686, %v3684
        %v3705 = vpack.c.b16 %v3689, %v3687
        %v3706 = vpack.c.b16 %v3690, %v3688
        %v3707 = vpack.c.b16 %v3691, %v3691
        %v3708 = vpack.c.b16 %v3692, %v3692
        %v3724 = vsel %vm3300, %v3207, 0
        %v3727 = vsel %vm1984, %v3707, 0
        %v3730 = vsel %vm1984, %v3708, 0
        %3732 = vmatprep.subr.bf16.mxu0 %v3730
        %3733 = vmatpush1.bf16.msra.mxu0 %v3727
        %3734 = vmatprep.subr.bf16.mxu0 %v3706
        %3735 = vmatpush1.bf16.msra.mxu0 %v3705
        %3736 = vmatprep.subr.bf16.mxu0 %v3704
        %3737 = vmatpush1.bf16.msra.mxu0 %v3703
        %3738 = vmatprep.subr.bf16.mxu0 %v3702
        %3739 = vmatpush1.bf16.msra.mxu0 %v3701
        %3740 = vmatprep.subr.bf16.mxu0 %v3700
        %3741 = vmatpush1.bf16.msra.mxu0 %v3699
        %3742 = vmatprep.subr.bf16.mxu0 %v3698
        %3743 = vmatpush1.bf16.msra.mxu0 %v3697
        %3744 = vmatprep.subr.bf16.mxu0 %v3696
        %3745 = vmatpush1.bf16.msra.mxu0 %v3695
        %3746 = vmatprep.subr.bf16.mxu0 %v3694
        %3747 = vmatpush1.bf16.msra.mxu0 %v3693
        %3748 = vmatprep.subr.bf16.mxu0 0
        %3749 = vmatpush2.bf16.msra.mxu0 0
        %3750 = vmatprep.subr.bf16.mxu0 0
        %3751 = vmatpush2.bf16.msra.mxu0 0
        %3752 = vmatprep.subr.bf16.mxu0 0
        %3753 = vmatpush2.bf16.msra.mxu0 0
        %3754 = vmatprep.subr.bf16.mxu0 0
        %3755 = vmatpush2.bf16.msra.mxu0 0
        %3756 = vmatprep.subr.bf16.mxu0 0
        %3757 = vmatpush2.bf16.msra.mxu0 0
        %3758 = vmatprep.subr.bf16.mxu0 0
        %3759 = vmatpush2.bf16.msra.mxu0 0
        %3760 = vmatprep.subr.bf16.mxu0 0
        %3761 = vmatpush2.bf16.msra.mxu0 0
        %3762 = vmatprep.subr.bf16.mxu0 0
        %3763 = vmatpush2.bf16.msra.mxu0 0
        %3764 = vmatprep.mubr.bf16.mxu0 0
        %3765 = vmatmul.mubr.bf16.gmra.mxu0 %v3305
        %v3766 = vpop.f32.mrf.mxu0
        %v3767 = vadd.f32 0.0, %v3766
        %v3768 = vpop.f32.mrf.mxu0
        %v3769 = vadd.f32 0.0, %v3768
        %v3770 = vpop.f32.mrf.mxu0
        %v3771 = vadd.f32 0.0, %v3770
        %v3772 = vpop.f32.mrf.mxu0
        %v3773 = vadd.f32 0.0, %v3772
        %3774 = vmatprep.mubr.bf16.mxu0 0
        %3775 = vmatmul.mubr.bf16.gmra.mxu0 %v3308
        %v3776 = vpop.f32.mrf.mxu0
        %v3777 = vadd.f32 0.0, %v3776
        %v3778 = vpop.f32.mrf.mxu0
        %v3779 = vadd.f32 0.0, %v3778
        %v3780 = vpop.f32.mrf.mxu0
        %v3781 = vadd.f32 0.0, %v3780
        %v3782 = vpop.f32.mrf.mxu0
        %v3783 = vadd.f32 0.0, %v3782
        %3784 = vmatprep.mubr.bf16.mxu0 0
        %3785 = vmatmul.mubr.bf16.gmra.mxu0 %v3311
        %v3786 = vpop.f32.mrf.mxu0
        %v3787 = vadd.f32 0.0, %v3786
        %v3788 = vpop.f32.mrf.mxu0
        %v3789 = vadd.f32 0.0, %v3788
        %v3790 = vpop.f32.mrf.mxu0
        %v3791 = vadd.f32 0.0, %v3790
        %v3792 = vpop.f32.mrf.mxu0
        %v3793 = vadd.f32 0.0, %v3792
        %3794 = vmatprep.mubr.bf16.mxu0 0
        %3795 = vmatmul.mubr.bf16.gmra.mxu0 %v3724
        %v3796 = vpop.f32.mrf.mxu0
        %v3797 = vadd.f32 0.0, %v3796
        %v3798 = vpop.f32.mrf.mxu0
        %v3799 = vadd.f32 0.0, %v3798
        %v3800 = vpop.f32.mrf.mxu0
        %v3801 = vadd.f32 0.0, %v3800
        %v3802 = vpop.f32.mrf.mxu0
        %v3803 = vadd.f32 0.0, %v3802
        %3804 = vdwg.mxu0
        %v3805 = vadd.f32 %v3616, %v3767
        %v3806 = vadd.f32 %v3617, %v3769
        %v3807 = vadd.f32 %v3618, %v3771
        %v3808 = vadd.f32 %v3619, %v3773
        %v3809 = vadd.f32 %v3620, %v3777
        %v3810 = vadd.f32 %v3621, %v3779
        %v3811 = vadd.f32 %v3622, %v3781
        %v3812 = vadd.f32 %v3623, %v3783
        %v3813 = vadd.f32 %v3624, %v3787
        %v3814 = vadd.f32 %v3625, %v3789
        %v3815 = vadd.f32 %v3626, %v3791
        %v3816 = vadd.f32 %v3627, %v3793
        %v3817 = vadd.f32 %v3628, %v3797
        %v3818 = vadd.f32 %v3629, %v3799
        %v3819 = vadd.f32 %v3630, %v3801
        %v3820 = vadd.f32 %v3631, %v3803
        %s3821 = scalar_lea.vmem %s7, 360
        %v3822 = vld [vmem:[%s3821] sm:$0xff]
        %v3823 = vld [vmem:[%s3821 + $0x8] sm:$0xff]
        %v3824 = vld [vmem:[%s3821 + $0x10] sm:$0xff]
        %v3825 = vld [vmem:[%s3821 + $0x18] sm:$0xff]
        %v3826 = vld [vmem:[%s3821 + $0x20] sm:$0xff]
        %v3827 = vld [vmem:[%s3821 + $0x28] sm:$0xff]
        %v3828 = vld [vmem:[%s3821 + $0x30] sm:$0xff]
        %v3829 = vld [vmem:[%s3821 + $0x38] sm:$0xff]
        %v3830 = vld [vmem:[%s3821 + $0x40] sm:$0xff]
        %v3831 = vld [vmem:[%s3821 + $0x48] sm:$0xff]
        %v3832 = vld [vmem:[%s3821 + $0x50] sm:$0xff]
        %v3833 = vld [vmem:[%s3821 + $0x58] sm:$0xff]
        %v3834 = vld [vmem:[%s3821 + $0x60] sm:$0xff]
        %v3835 = vld [vmem:[%s3821 + $0x68] sm:$0xff]
        %v3836 = vld [vmem:[%s3821 + $0x70] sm:$0xff]
        %v3838 = vrot.slane %v3208, 4
        %v3839 = vsel %vm3440, %v3448, %v3838
        %v3855 = vunpack.c.l.b16 %v3822
        %v3856 = vunpack.c.h.b16 %v3822
        %v3857 = vunpack.c.l.b16 %v3823
        %v3858 = vunpack.c.h.b16 %v3823
        %v3859 = vunpack.c.l.b16 %v3824
        %v3860 = vunpack.c.h.b16 %v3824
        %v3861 = vunpack.c.l.b16 %v3825
        %v3862 = vunpack.c.h.b16 %v3825
        %v3863 = vunpack.c.l.b16 %v3826
        %v3864 = vunpack.c.h.b16 %v3826
        %v3865 = vunpack.c.l.b16 %v3827
        %v3866 = vunpack.c.h.b16 %v3827
        %v3867 = vunpack.c.l.b16 %v3828
        %v3868 = vunpack.c.h.b16 %v3828
        %v3869 = vunpack.c.l.b16 %v3829
        %v3870 = vunpack.c.h.b16 %v3829
        %v3871 = vunpack.c.l.b16 %v3830
        %v3872 = vunpack.c.h.b16 %v3830
        %v3873 = vunpack.c.l.b16 %v3831
        %v3874 = vunpack.c.h.b16 %v3831
        %v3875 = vunpack.c.l.b16 %v3832
        %v3876 = vunpack.c.h.b16 %v3832
        %v3877 = vunpack.c.l.b16 %v3833
        %v3878 = vunpack.c.h.b16 %v3833
        %v3879 = vunpack.c.l.b16 %v3834
        %v3880 = vunpack.c.h.b16 %v3834
        %v3881 = vunpack.c.l.b16 %v3835
        %v3882 = vunpack.c.h.b16 %v3835
        %v3883 = vunpack.c.l.b16 %v3836
        %v3884 = vunpack.c.h.b16 %v3836
        %v3885 = vpack.c.b16 %v3857, %v3855
        %v3886 = vpack.c.b16 %v3858, %v3856
        %v3887 = vpack.c.b16 %v3861, %v3859
        %v3888 = vpack.c.b16 %v3862, %v3860
        %v3889 = vpack.c.b16 %v3865, %v3863
        %v3890 = vpack.c.b16 %v3866, %v3864
        %v3891 = vpack.c.b16 %v3869, %v3867
        %v3892 = vpack.c.b16 %v3870, %v3868
        %v3893 = vpack.c.b16 %v3873, %v3871
        %v3894 = vpack.c.b16 %v3874, %v3872
        %v3895 = vpack.c.b16 %v3877, %v3875
        %v3896 = vpack.c.b16 %v3878, %v3876
        %v3897 = vpack.c.b16 %v3881, %v3879
        %v3898 = vpack.c.b16 %v3882, %v3880
        %v3899 = vpack.c.b16 %v3883, %v3883
        %v3900 = vpack.c.b16 %v3884, %v3884
        %v3916 = vsel %vm3300, %v3839, 0
        %v3919 = vsel %vm1984, %v3899, 0
        %v3922 = vsel %vm1984, %v3900, 0
        %3924 = vmatprep.subr.bf16.mxu0 %v3922
        %3925 = vmatpush1.bf16.msra.mxu0 %v3919
        %3926 = vmatprep.subr.bf16.mxu0 %v3898
        %3927 = vmatpush1.bf16.msra.mxu0 %v3897
        %3928 = vmatprep.subr.bf16.mxu0 %v3896
        %3929 = vmatpush1.bf16.msra.mxu0 %v3895
        %3930 = vmatprep.subr.bf16.mxu0 %v3894
        %3931 = vmatpush1.bf16.msra.mxu0 %v3893
        %3932 = vmatprep.subr.bf16.mxu0 %v3892
        %3933 = vmatpush1.bf16.msra.mxu0 %v3891
        %3934 = vmatprep.subr.bf16.mxu0 %v3890
        %3935 = vmatpush1.bf16.msra.mxu0 %v3889
        %3936 = vmatprep.subr.bf16.mxu0 %v3888
        %3937 = vmatpush1.bf16.msra.mxu0 %v3887
        %3938 = vmatprep.subr.bf16.mxu0 %v3886
        %3939 = vmatpush1.bf16.msra.mxu0 %v3885
        %3940 = vmatprep.subr.bf16.mxu0 0
        %3941 = vmatpush2.bf16.msra.mxu0 0
        %3942 = vmatprep.subr.bf16.mxu0 0
        %3943 = vmatpush2.bf16.msra.mxu0 0
        %3944 = vmatprep.subr.bf16.mxu0 0
        %3945 = vmatpush2.bf16.msra.mxu0 0
        %3946 = vmatprep.subr.bf16.mxu0 0
        %3947 = vmatpush2.bf16.msra.mxu0 0
        %3948 = vmatprep.subr.bf16.mxu0 0
        %3949 = vmatpush2.bf16.msra.mxu0 0
        %3950 = vmatprep.subr.bf16.mxu0 0
        %3951 = vmatpush2.bf16.msra.mxu0 0
        %3952 = vmatprep.subr.bf16.mxu0 0
        %3953 = vmatpush2.bf16.msra.mxu0 0
        %3954 = vmatprep.subr.bf16.mxu0 0
        %3955 = vmatpush2.bf16.msra.mxu0 0
        %3956 = vmatprep.mubr.bf16.mxu0 0
        %3957 = vmatmul.mubr.bf16.gmra.mxu0 %v3529
        %v3958 = vpop.f32.mrf.mxu0
        %v3959 = vadd.f32 0.0, %v3958
        %v3960 = vpop.f32.mrf.mxu0
        %v3961 = vadd.f32 0.0, %v3960
        %v3962 = vpop.f32.mrf.mxu0
        %v3963 = vadd.f32 0.0, %v3962
        %v3964 = vpop.f32.mrf.mxu0
        %v3965 = vadd.f32 0.0, %v3964
        %3966 = vmatprep.mubr.bf16.mxu0 0
        %3967 = vmatmul.mubr.bf16.gmra.mxu0 %v3532
        %v3968 = vpop.f32.mrf.mxu0
        %v3969 = vadd.f32 0.0, %v3968
        %v3970 = vpop.f32.mrf.mxu0
        %v3971 = vadd.f32 0.0, %v3970
        %v3972 = vpop.f32.mrf.mxu0
        %v3973 = vadd.f32 0.0, %v3972
        %v3974 = vpop.f32.mrf.mxu0
        %v3975 = vadd.f32 0.0, %v3974
        %3976 = vmatprep.mubr.bf16.mxu0 0
        %3977 = vmatmul.mubr.bf16.gmra.mxu0 %v3535
        %v3978 = vpop.f32.mrf.mxu0
        %v3979 = vadd.f32 0.0, %v3978
        %v3980 = vpop.f32.mrf.mxu0
        %v3981 = vadd.f32 0.0, %v3980
        %v3982 = vpop.f32.mrf.mxu0
        %v3983 = vadd.f32 0.0, %v3982
        %v3984 = vpop.f32.mrf.mxu0
        %v3985 = vadd.f32 0.0, %v3984
        %3986 = vmatprep.mubr.bf16.mxu0 0
        %3987 = vmatmul.mubr.bf16.gmra.mxu0 %v3916
        %v3988 = vpop.f32.mrf.mxu0
        %v3989 = vadd.f32 0.0, %v3988
        %v3990 = vpop.f32.mrf.mxu0
        %v3991 = vadd.f32 0.0, %v3990
        %v3992 = vpop.f32.mrf.mxu0
        %v3993 = vadd.f32 0.0, %v3992
        %v3994 = vpop.f32.mrf.mxu0
        %v3995 = vadd.f32 0.0, %v3994
        %3996 = vdwg.mxu0
        %v3997 = vadd.f32 %v3805, %v3959
        %v3998 = vadd.f32 %v3806, %v3961
        %v3999 = vadd.f32 %v3807, %v3963
        %v4000 = vadd.f32 %v3808, %v3965
        %v4001 = vadd.f32 %v3809, %v3969
        %v4002 = vadd.f32 %v3810, %v3971
        %v4003 = vadd.f32 %v3811, %v3973
        %v4004 = vadd.f32 %v3812, %v3975
        %v4005 = vadd.f32 %v3813, %v3979
        %v4006 = vadd.f32 %v3814, %v3981
        %v4007 = vadd.f32 %v3815, %v3983
        %v4008 = vadd.f32 %v3816, %v3985
        %v4009 = vadd.f32 %v3817, %v3989
        %v4010 = vadd.f32 %v3818, %v3991
        %v4011 = vadd.f32 %v3819, %v3993
        %v4012 = vadd.f32 %v3820, %v3995
        %s4013 = scalar_lea.vmem %s7, 480
        %v4014 = vld [vmem:[%s4013] sm:$0xff]
        %v4015 = vld [vmem:[%s4013 + $0x8] sm:$0xff]
        %v4016 = vld [vmem:[%s4013 + $0x10] sm:$0xff]
        %v4017 = vld [vmem:[%s4013 + $0x18] sm:$0xff]
        %v4018 = vld [vmem:[%s4013 + $0x20] sm:$0xff]
        %v4019 = vld [vmem:[%s4013 + $0x28] sm:$0xff]
        %v4020 = vld [vmem:[%s4013 + $0x30] sm:$0xff]
        %v4021 = vld [vmem:[%s4013 + $0x38] sm:$0xff]
        %v4022 = vld [vmem:[%s4013 + $0x40] sm:$0xff]
        %v4023 = vld [vmem:[%s4013 + $0x48] sm:$0xff]
        %v4024 = vld [vmem:[%s4013 + $0x50] sm:$0xff]
        %v4025 = vld [vmem:[%s4013 + $0x58] sm:$0xff]
        %v4026 = vld [vmem:[%s4013 + $0x60] sm:$0xff]
        %v4027 = vld [vmem:[%s4013 + $0x68] sm:$0xff]
        %v4028 = vld [vmem:[%s4013 + $0x70] sm:$0xff]
        %v4044 = vunpack.c.l.b16 %v4014
        %v4045 = vunpack.c.h.b16 %v4014
        %v4046 = vunpack.c.l.b16 %v4015
        %v4047 = vunpack.c.h.b16 %v4015
        %v4048 = vunpack.c.l.b16 %v4016
        %v4049 = vunpack.c.h.b16 %v4016
        %v4050 = vunpack.c.l.b16 %v4017
        %v4051 = vunpack.c.h.b16 %v4017
        %v4052 = vunpack.c.l.b16 %v4018
        %v4053 = vunpack.c.h.b16 %v4018
        %v4054 = vunpack.c.l.b16 %v4019
        %v4055 = vunpack.c.h.b16 %v4019
        %v4056 = vunpack.c.l.b16 %v4020
        %v4057 = vunpack.c.h.b16 %v4020
        %v4058 = vunpack.c.l.b16 %v4021
        %v4059 = vunpack.c.h.b16 %v4021
        %v4060 = vunpack.c.l.b16 %v4022
        %v4061 = vunpack.c.h.b16 %v4022
        %v4062 = vunpack.c.l.b16 %v4023
        %v4063 = vunpack.c.h.b16 %v4023
        %v4064 = vunpack.c.l.b16 %v4024
        %v4065 = vunpack.c.h.b16 %v4024
        %v4066 = vunpack.c.l.b16 %v4025
        %v4067 = vunpack.c.h.b16 %v4025
        %v4068 = vunpack.c.l.b16 %v4026
        %v4069 = vunpack.c.h.b16 %v4026
        %v4070 = vunpack.c.l.b16 %v4027
        %v4071 = vunpack.c.h.b16 %v4027
        %v4072 = vunpack.c.l.b16 %v4028
        %v4073 = vunpack.c.h.b16 %v4028
        %v4074 = vpack.c.b16 %v4046, %v4044
        %v4075 = vpack.c.b16 %v4047, %v4045
        %v4076 = vpack.c.b16 %v4050, %v4048
        %v4077 = vpack.c.b16 %v4051, %v4049
        %v4078 = vpack.c.b16 %v4054, %v4052
        %v4079 = vpack.c.b16 %v4055, %v4053
        %v4080 = vpack.c.b16 %v4058, %v4056
        %v4081 = vpack.c.b16 %v4059, %v4057
        %v4082 = vpack.c.b16 %v4062, %v4060
        %v4083 = vpack.c.b16 %v4063, %v4061
        %v4084 = vpack.c.b16 %v4066, %v4064
        %v4085 = vpack.c.b16 %v4067, %v4065
        %v4086 = vpack.c.b16 %v4070, %v4068
        %v4087 = vpack.c.b16 %v4071, %v4069
        %v4088 = vpack.c.b16 %v4072, %v4072
        %v4089 = vpack.c.b16 %v4073, %v4073
        %v4105 = vsel %vm3300, %v3208, 0
        %v4108 = vsel %vm1984, %v4088, 0
        %v4111 = vsel %vm1984, %v4089, 0
        %4113 = vmatprep.subr.bf16.mxu0 %v4111
        %4114 = vmatpush1.bf16.msra.mxu0 %v4108
        %4115 = vmatprep.subr.bf16.mxu0 %v4087
        %4116 = vmatpush1.bf16.msra.mxu0 %v4086
        %4117 = vmatprep.subr.bf16.mxu0 %v4085
        %4118 = vmatpush1.bf16.msra.mxu0 %v4084
        %4119 = vmatprep.subr.bf16.mxu0 %v4083
        %4120 = vmatpush1.bf16.msra.mxu0 %v4082
        %4121 = vmatprep.subr.bf16.mxu0 %v4081
        %4122 = vmatpush1.bf16.msra.mxu0 %v4080
        %4123 = vmatprep.subr.bf16.mxu0 %v4079
        %4124 = vmatpush1.bf16.msra.mxu0 %v4078
        %4125 = vmatprep.subr.bf16.mxu0 %v4077
        %4126 = vmatpush1.bf16.msra.mxu0 %v4076
        %4127 = vmatprep.subr.bf16.mxu0 %v4075
        %4128 = vmatpush1.bf16.msra.mxu0 %v4074
        %4129 = vmatprep.subr.bf16.mxu0 0
        %4130 = vmatpush2.bf16.msra.mxu0 0
        %4131 = vmatprep.subr.bf16.mxu0 0
        %4132 = vmatpush2.bf16.msra.mxu0 0
        %4133 = vmatprep.subr.bf16.mxu0 0
        %4134 = vmatpush2.bf16.msra.mxu0 0
        %4135 = vmatprep.subr.bf16.mxu0 0
        %4136 = vmatpush2.bf16.msra.mxu0 0
        %4137 = vmatprep.subr.bf16.mxu0 0
        %4138 = vmatpush2.bf16.msra.mxu0 0
        %4139 = vmatprep.subr.bf16.mxu0 0
        %4140 = vmatpush2.bf16.msra.mxu0 0
        %4141 = vmatprep.subr.bf16.mxu0 0
        %4142 = vmatpush2.bf16.msra.mxu0 0
        %4143 = vmatprep.subr.bf16.mxu0 0
        %4144 = vmatpush2.bf16.msra.mxu0 0
        %4145 = vmatprep.mubr.bf16.mxu0 0
        %4146 = vmatmul.mubr.bf16.gmra.mxu0 %v3308
        %v4147 = vpop.f32.mrf.mxu0
        %v4148 = vadd.f32 0.0, %v4147
        %v4149 = vpop.f32.mrf.mxu0
        %v4150 = vadd.f32 0.0, %v4149
        %v4151 = vpop.f32.mrf.mxu0
        %v4152 = vadd.f32 0.0, %v4151
        %v4153 = vpop.f32.mrf.mxu0
        %v4154 = vadd.f32 0.0, %v4153
        %4155 = vmatprep.mubr.bf16.mxu0 0
        %4156 = vmatmul.mubr.bf16.gmra.mxu0 %v3311
        %v4157 = vpop.f32.mrf.mxu0
        %v4158 = vadd.f32 0.0, %v4157
        %v4159 = vpop.f32.mrf.mxu0
        %v4160 = vadd.f32 0.0, %v4159
        %v4161 = vpop.f32.mrf.mxu0
        %v4162 = vadd.f32 0.0, %v4161
        %v4163 = vpop.f32.mrf.mxu0
        %v4164 = vadd.f32 0.0, %v4163
        %4165 = vmatprep.mubr.bf16.mxu0 0
        %4166 = vmatmul.mubr.bf16.gmra.mxu0 %v3724
        %v4167 = vpop.f32.mrf.mxu0
        %v4168 = vadd.f32 0.0, %v4167
        %v4169 = vpop.f32.mrf.mxu0
        %v4170 = vadd.f32 0.0, %v4169
        %v4171 = vpop.f32.mrf.mxu0
        %v4172 = vadd.f32 0.0, %v4171
        %v4173 = vpop.f32.mrf.mxu0
        %v4174 = vadd.f32 0.0, %v4173
        %4175 = vmatprep.mubr.bf16.mxu0 0
        %4176 = vmatmul.mubr.bf16.gmra.mxu0 %v4105
        %v4177 = vpop.f32.mrf.mxu0
        %v4178 = vadd.f32 0.0, %v4177
        %v4179 = vpop.f32.mrf.mxu0
        %v4180 = vadd.f32 0.0, %v4179
        %v4181 = vpop.f32.mrf.mxu0
        %v4182 = vadd.f32 0.0, %v4181
        %v4183 = vpop.f32.mrf.mxu0
        %v4184 = vadd.f32 0.0, %v4183
        %4185 = vdwg.mxu0
        %v4186 = vadd.f32 %v3997, %v4148
        %v4187 = vadd.f32 %v3998, %v4150
        %v4188 = vadd.f32 %v3999, %v4152
        %v4189 = vadd.f32 %v4000, %v4154
        %v4190 = vadd.f32 %v4001, %v4158
        %v4191 = vadd.f32 %v4002, %v4160
        %v4192 = vadd.f32 %v4003, %v4162
        %v4193 = vadd.f32 %v4004, %v4164
        %v4194 = vadd.f32 %v4005, %v4168
        %v4195 = vadd.f32 %v4006, %v4170
        %v4196 = vadd.f32 %v4007, %v4172
        %v4197 = vadd.f32 %v4008, %v4174
        %v4198 = vadd.f32 %v4009, %v4178
        %v4199 = vadd.f32 %v4010, %v4180
        %v4200 = vadd.f32 %v4011, %v4182
        %v4201 = vadd.f32 %v4012, %v4184
        %v4202 = vpack.c.bf16 %v4188, %v4186
        %v4203 = vpack.c.bf16 %v4189, %v4187
        %v4204 = vpack.c.bf16 %v4192, %v4190
        %v4205 = vpack.c.bf16 %v4193, %v4191
        %v4206 = vpack.c.bf16 %v4196, %v4194
        %v4207 = vpack.c.bf16 %v4197, %v4195
        %v4208 = vpack.c.bf16 %v4200, %v4198
        %v4209 = vpack.c.bf16 %v4201, %v4199
        %v4210 = vld [vmem:[%s9] sm:$0xf]
        %v4211 = vld [vmem:[%s9 + $0x4] sm:$0xf]
        %v4212 = vld [vmem:[%s9 + $0x8] sm:$0xf]
        %v4213 = vld [vmem:[%s9 + $0xc] sm:$0xf]
        %v4218 = vunpack.c.l.b16 %v4210
        %v4219 = vunpack.c.l.b16 %v4211
        %v4220 = vunpack.c.l.b16 %v4212
        %v4221 = vunpack.c.l.b16 %v4213
        %v4222 = vpack.c.b16 %v4219, %v4218
        %v4223 = vpack.c.b16 %v4221, %v4220
        %v4225 = vsel %vm2433, %v4222, 0
        %v4228 = vsel %vm2433, %v4223, 0
        %4230 = vmatprep.subr.bf16.mxu0 0
        %4231 = vmatpush1.bf16.msra.mxu0 0
        %4232 = vmatprep.subr.bf16.mxu0 0
        %4233 = vmatpush1.bf16.msra.mxu0 0
        %4234 = vmatprep.subr.bf16.mxu0 0
        %4235 = vmatpush1.bf16.msra.mxu0 0
        %4236 = vmatprep.subr.bf16.mxu0 0
        %4237 = vmatpush1.bf16.msra.mxu0 0
        %4238 = vmatprep.subr.bf16.mxu0 %v4209
        %4239 = vmatpush1.bf16.msra.mxu0 %v4208
        %4240 = vmatprep.subr.bf16.mxu0 %v4207
        %4241 = vmatpush1.bf16.msra.mxu0 %v4206
        %4242 = vmatprep.subr.bf16.mxu0 %v4205
        %4243 = vmatpush1.bf16.msra.mxu0 %v4204
        %4244 = vmatprep.subr.bf16.mxu0 %v4203
        %4245 = vmatpush1.bf16.msra.mxu0 %v4202
        %4246 = vmatprep.subr.bf16.mxu0 0
        %4247 = vmatpush2.bf16.msra.mxu0 0
        %4248 = vmatprep.subr.bf16.mxu0 0
        %4249 = vmatpush2.bf16.msra.mxu0 0
        %4250 = vmatprep.subr.bf16.mxu0 0
        %4251 = vmatpush2.bf16.msra.mxu0 0
        %4252 = vmatprep.subr.bf16.mxu0 0
        %4253 = vmatpush2.bf16.msra.mxu0 0
        %4254 = vmatprep.subr.bf16.mxu0 0
        %4255 = vmatpush2.bf16.msra.mxu0 0
        %4256 = vmatprep.subr.bf16.mxu0 0
        %4257 = vmatpush2.bf16.msra.mxu0 0
        %4258 = vmatprep.subr.bf16.mxu0 0
        %4259 = vmatpush2.bf16.msra.mxu0 0
        %4260 = vmatprep.subr.bf16.mxu0 0
        %4261 = vmatpush2.bf16.msra.mxu0 0
        %4262 = vmatprep.mubr.bf16.mxu0 0
        %4263 = vmatmul.mubr.bf16.gmra.mxu0 %v4225
        %v4264 = vpop.f32.mrf.mxu0
        %v4265 = vadd.f32 0.0, %v4264
        %v4266 = vpop.f32.mrf.mxu0
        %v4267 = vadd.f32 0.0, %v4266
        %v4268 = vpop.f32.mrf.mxu0
        %v4269 = vadd.f32 0.0, %v4268
        %v4270 = vpop.f32.mrf.mxu0
        %v4271 = vadd.f32 0.0, %v4270
        %4272 = vmatprep.mubr.bf16.mxu0 0
        %4273 = vmatmul.mubr.bf16.gmra.mxu0 %v4228
        %v4274 = vpop.f32.mrf.mxu0
        %v4275 = vadd.f32 0.0, %v4274
        %v4276 = vpop.f32.mrf.mxu0
        %v4277 = vadd.f32 0.0, %v4276
        %v4278 = vpop.f32.mrf.mxu0
        %v4279 = vadd.f32 0.0, %v4278
        %v4280 = vpop.f32.mrf.mxu0
        %v4281 = vadd.f32 0.0, %v4280
        %4282 = vdwg.mxu0
        %v4283 = vld [vmem:[%s10] sm:$0xf]
        %v4284 = vld [vmem:[%s10 + $0x4] sm:$0xf]
        %v4285 = vld [vmem:[%s10 + $0x8] sm:$0xf]
        %v4286 = vld [vmem:[%s10 + $0xc] sm:$0xf]
        %v4291 = vunpack.c.l.b16 %v4283
        %v4292 = vunpack.c.l.b16 %v4284
        %v4293 = vunpack.c.l.b16 %v4285
        %v4294 = vunpack.c.l.b16 %v4286
        %v4295 = vpack.c.b16 %v4292, %v4291
        %v4296 = vpack.c.b16 %v4294, %v4293
        %v4298 = vsel %vm2433, %v4295, 0
        %v4301 = vsel %vm2433, %v4296, 0
        %4303 = vmatprep.subr.bf16.mxu0 0
        %4304 = vmatpush1.bf16.msra.mxu0 0
        %4305 = vmatprep.subr.bf16.mxu0 0
        %4306 = vmatpush1.bf16.msra.mxu0 0
        %4307 = vmatprep.subr.bf16.mxu0 0
        %4308 = vmatpush1.bf16.msra.mxu0 0
        %4309 = vmatprep.subr.bf16.mxu0 0
        %4310 = vmatpush1.bf16.msra.mxu0 0
        %4311 = vmatprep.subr.bf16.mxu0 %v4209
        %4312 = vmatpush1.bf16.msra.mxu0 %v4208
        %4313 = vmatprep.subr.bf16.mxu0 %v4207
        %4314 = vmatpush1.bf16.msra.mxu0 %v4206
        %4315 = vmatprep.subr.bf16.mxu0 %v4205
        %4316 = vmatpush1.bf16.msra.mxu0 %v4204
        %4317 = vmatprep.subr.bf16.mxu0 %v4203
        %4318 = vmatpush1.bf16.msra.mxu0 %v4202
        %4319 = vmatprep.subr.bf16.mxu0 0
        %4320 = vmatpush2.bf16.msra.mxu0 0
        %4321 = vmatprep.subr.bf16.mxu0 0
        %4322 = vmatpush2.bf16.msra.mxu0 0
        %4323 = vmatprep.subr.bf16.mxu0 0
        %4324 = vmatpush2.bf16.msra.mxu0 0
        %4325 = vmatprep.subr.bf16.mxu0 0
        %4326 = vmatpush2.bf16.msra.mxu0 0
        %4327 = vmatprep.subr.bf16.mxu0 0
        %4328 = vmatpush2.bf16.msra.mxu0 0
        %4329 = vmatprep.subr.bf16.mxu0 0
        %4330 = vmatpush2.bf16.msra.mxu0 0
        %4331 = vmatprep.subr.bf16.mxu0 0
        %4332 = vmatpush2.bf16.msra.mxu0 0
        %4333 = vmatprep.subr.bf16.mxu0 0
        %4334 = vmatpush2.bf16.msra.mxu0 0
        %4335 = vmatprep.mubr.bf16.mxu0 0
        %4336 = vmatmul.mubr.bf16.gmra.mxu0 %v4298
        %v4337 = vpop.f32.mrf.mxu0
        %v4338 = vadd.f32 0.0, %v4337
        %v4339 = vpop.f32.mrf.mxu0
        %v4340 = vadd.f32 0.0, %v4339
        %v4341 = vpop.f32.mrf.mxu0
        %v4342 = vadd.f32 0.0, %v4341
        %v4343 = vpop.f32.mrf.mxu0
        %v4344 = vadd.f32 0.0, %v4343
        %4345 = vmatprep.mubr.bf16.mxu0 0
        %4346 = vmatmul.mubr.bf16.gmra.mxu0 %v4301
        %v4347 = vpop.f32.mrf.mxu0
        %v4348 = vadd.f32 0.0, %v4347
        %v4349 = vpop.f32.mrf.mxu0
        %v4350 = vadd.f32 0.0, %v4349
        %v4351 = vpop.f32.mrf.mxu0
        %v4352 = vadd.f32 0.0, %v4351
        %v4353 = vpop.f32.mrf.mxu0
        %v4354 = vadd.f32 0.0, %v4353
        %4355 = vdwg.mxu0
        %v4356 = vmax.f32 %v4265, %v4338
        %v4357 = vmax.f32 %v4267, %v4340
        %v4358 = vmax.f32 %v4269, %v4342
        %v4359 = vmax.f32 %v4271, %v4344
        %v4360 = vmax.f32 %v4275, %v4348
        %v4361 = vmax.f32 %v4277, %v4350
        %v4362 = vmax.f32 %v4279, %v4352
        %v4363 = vmax.f32 %v4281, %v4354
        %v4364 = vpack.c.bf16 %v4358, %v4356
        %v4365 = vpack.c.bf16 %v4359, %v4357
        %v4366 = vpack.c.bf16 %v4362, %v4360
        %v4367 = vpack.c.bf16 %v4363, %v4361
        %v4368 = vld [vmem:[%s11] sm:$0xf]
        %v4369 = vld [vmem:[%s11 + $0x4] sm:$0xf]
        %v4370 = vld [vmem:[%s11 + $0x8] sm:$0xf]
        %v4371 = vld [vmem:[%s11 + $0xc] sm:$0xf]
        %v4372 = vld [vmem:[%s11 + $0x10] sm:$0xf]
        %v4373 = vld [vmem:[%s11 + $0x14] sm:$0xf]
        %v4374 = vld [vmem:[%s11 + $0x18] sm:$0xf]
        %v4375 = vld [vmem:[%s11 + $0x1c] sm:$0xf]
        %v4376 = vld [vmem:[%s11 + $0x20] sm:$0xf]
        %v4377 = vld [vmem:[%s11 + $0x24] sm:$0xf]
        %v4378 = vld [vmem:[%s11 + $0x28] sm:$0xf]
        %v4379 = vld [vmem:[%s11 + $0x2c] sm:$0xf]
        %v4380 = vld [vmem:[%s11 + $0x30] sm:$0xf]
        %v4381 = vld [vmem:[%s11 + $0x34] sm:$0xf]
        %v4382 = vld [vmem:[%s11 + $0x38] sm:$0xf]
        %v4383 = vld [vmem:[%s11 + $0x3c] sm:$0xf]
        %v4384 = vld [vmem:[%s11 + $0x40] sm:$0xf]
        %v4385 = vld [vmem:[%s11 + $0x44] sm:$0xf]
        %v4386 = vld [vmem:[%s11 + $0x48] sm:$0xf]
        %v4387 = vld [vmem:[%s11 + $0x4c] sm:$0xf]
        %v4408 = vunpack.c.l.b16 %v4368
        %v4409 = vunpack.c.l.b16 %v4369
        %v4410 = vunpack.c.l.b16 %v4370
        %v4411 = vunpack.c.l.b16 %v4371
        %v4412 = vunpack.c.l.b16 %v4372
        %v4413 = vunpack.c.l.b16 %v4373
        %v4414 = vunpack.c.l.b16 %v4374
        %v4415 = vunpack.c.l.b16 %v4375
        %v4416 = vunpack.c.l.b16 %v4376
        %v4417 = vunpack.c.l.b16 %v4377
        %v4418 = vunpack.c.l.b16 %v4378
        %v4419 = vunpack.c.l.b16 %v4379
        %v4420 = vunpack.c.l.b16 %v4380
        %v4421 = vunpack.c.l.b16 %v4381
        %v4422 = vunpack.c.l.b16 %v4382
        %v4423 = vunpack.c.l.b16 %v4383
        %v4424 = vunpack.c.l.b16 %v4384
        %v4425 = vunpack.c.l.b16 %v4385
        %v4426 = vunpack.c.l.b16 %v4386
        %v4427 = vunpack.c.l.b16 %v4387
        %v4428 = vpack.c.b16 %v4409, %v4408
        %v4429 = vpack.c.b16 %v4411, %v4410
        %v4430 = vpack.c.b16 %v4413, %v4412
        %v4431 = vpack.c.b16 %v4415, %v4414
        %v4432 = vpack.c.b16 %v4417, %v4416
        %v4433 = vpack.c.b16 %v4419, %v4418
        %v4434 = vpack.c.b16 %v4421, %v4420
        %v4435 = vpack.c.b16 %v4423, %v4422
        %v4436 = vpack.c.b16 %v4425, %v4424
        %v4437 = vpack.c.b16 %v4427, %v4426
        %vm4448 = vcmask 261120
        %v4450 = vsel %vm4448, %v4365, 0
        %v4453 = vsel %vm4448, %v4367, 0
        %4455 = vmatprep.subr.bf16.mxu0 0
        %4456 = vmatpush1.bf16.msra.mxu0 %v4435
        %4457 = vmatprep.subr.bf16.mxu0 0
        %4458 = vmatpush1.bf16.msra.mxu0 %v4434
        %4459 = vmatprep.subr.bf16.mxu0 0
        %4460 = vmatpush1.bf16.msra.mxu0 %v4433
        %4461 = vmatprep.subr.bf16.mxu0 0
        %4462 = vmatpush1.bf16.msra.mxu0 %v4432
        %4463 = vmatprep.subr.bf16.mxu0 0
        %4464 = vmatpush1.bf16.msra.mxu0 %v4431
        %4465 = vmatprep.subr.bf16.mxu0 0
        %4466 = vmatpush1.bf16.msra.mxu0 %v4430
        %4467 = vmatprep.subr.bf16.mxu0 0
        %4468 = vmatpush1.bf16.msra.mxu0 %v4429
        %4469 = vmatprep.subr.bf16.mxu0 0
        %4470 = vmatpush1.bf16.msra.mxu0 %v4428
        %4471 = vmatprep.subr.bf16.mxu0 0
        %4472 = vmatpush2.bf16.msra.mxu0 0
        %4473 = vmatprep.subr.bf16.mxu0 0
        %4474 = vmatpush2.bf16.msra.mxu0 0
        %4475 = vmatprep.subr.bf16.mxu0 0
        %4476 = vmatpush2.bf16.msra.mxu0 0
        %4477 = vmatprep.subr.bf16.mxu0 0
        %4478 = vmatpush2.bf16.msra.mxu0 0
        %4479 = vmatprep.subr.bf16.mxu0 0
        %4480 = vmatpush2.bf16.msra.mxu0 0
        %4481 = vmatprep.subr.bf16.mxu0 0
        %4482 = vmatpush2.bf16.msra.mxu0 0
        %4483 = vmatprep.subr.bf16.mxu0 0
        %4484 = vmatpush2.bf16.msra.mxu0 %v4437
        %4485 = vmatprep.subr.bf16.mxu0 0
        %4486 = vmatpush2.bf16.msra.mxu0 %v4436
        %4487 = vmatprep.mubr.bf16.mxu0 %v4450
        %4488 = vmatmul.mubr.bf16.gmra.mxu0 %v4364
        %v4489 = vpop.f32.mrf.mxu0
        %v4490 = vadd.f32 0.0, %v4489
        %v4491 = vpop.f32.mrf.mxu0
        %v4492 = vpop.f32.mrf.mxu0
        %v4493 = vadd.f32 0.0, %v4492
        %v4494 = vpop.f32.mrf.mxu0
        %4495 = vmatprep.mubr.bf16.mxu0 %v4453
        %4496 = vmatmul.mubr.bf16.gmra.mxu0 %v4366
        %v4497 = vpop.f32.mrf.mxu0
        %v4498 = vadd.f32 0.0, %v4497
        %v4499 = vpop.f32.mrf.mxu0
        %v4500 = vpop.f32.mrf.mxu0
        %v4501 = vadd.f32 0.0, %v4500
        %v4502 = vpop.f32.mrf.mxu0
        %4503 = vdwg.mxu0
        %v4504 = vld [vmem:[%s12] sm:$0xf]
        %v4505 = vld [vmem:[%s12 + $0x4] sm:$0xf]
        %v4506 = vld [vmem:[%s12 + $0x8] sm:$0xf]
        %v4507 = vld [vmem:[%s12 + $0xc] sm:$0xf]
        %v4508 = vld [vmem:[%s12 + $0x10] sm:$0xf]
        %v4509 = vld [vmem:[%s12 + $0x14] sm:$0xf]
        %v4510 = vld [vmem:[%s12 + $0x18] sm:$0xf]
        %v4511 = vld [vmem:[%s12 + $0x1c] sm:$0xf]
        %v4512 = vld [vmem:[%s12 + $0x20] sm:$0xf]
        %v4513 = vld [vmem:[%s12 + $0x24] sm:$0xf]
        %v4514 = vld [vmem:[%s12 + $0x28] sm:$0xf]
        %v4515 = vld [vmem:[%s12 + $0x2c] sm:$0xf]
        %v4516 = vld [vmem:[%s12 + $0x30] sm:$0xf]
        %v4517 = vld [vmem:[%s12 + $0x34] sm:$0xf]
        %v4518 = vld [vmem:[%s12 + $0x38] sm:$0xf]
        %v4519 = vld [vmem:[%s12 + $0x3c] sm:$0xf]
        %v4520 = vld [vmem:[%s12 + $0x40] sm:$0xf]
        %v4521 = vld [vmem:[%s12 + $0x44] sm:$0xf]
        %v4522 = vld [vmem:[%s12 + $0x48] sm:$0xf]
        %v4523 = vld [vmem:[%s12 + $0x4c] sm:$0xf]
        %v4544 = vunpack.c.l.b16 %v4504
        %v4545 = vunpack.c.l.b16 %v4505
        %v4546 = vunpack.c.l.b16 %v4506
        %v4547 = vunpack.c.l.b16 %v4507
        %v4548 = vunpack.c.l.b16 %v4508
        %v4549 = vunpack.c.l.b16 %v4509
        %v4550 = vunpack.c.l.b16 %v4510
        %v4551 = vunpack.c.l.b16 %v4511
        %v4552 = vunpack.c.l.b16 %v4512
        %v4553 = vunpack.c.l.b16 %v4513
        %v4554 = vunpack.c.l.b16 %v4514
        %v4555 = vunpack.c.l.b16 %v4515
        %v4556 = vunpack.c.l.b16 %v4516
        %v4557 = vunpack.c.l.b16 %v4517
        %v4558 = vunpack.c.l.b16 %v4518
        %v4559 = vunpack.c.l.b16 %v4519
        %v4560 = vunpack.c.l.b16 %v4520
        %v4561 = vunpack.c.l.b16 %v4521
        %v4562 = vunpack.c.l.b16 %v4522
        %v4563 = vunpack.c.l.b16 %v4523
        %v4564 = vpack.c.b16 %v4545, %v4544
        %v4565 = vpack.c.b16 %v4547, %v4546
        %v4566 = vpack.c.b16 %v4549, %v4548
        %v4567 = vpack.c.b16 %v4551, %v4550
        %v4568 = vpack.c.b16 %v4553, %v4552
        %v4569 = vpack.c.b16 %v4555, %v4554
        %v4570 = vpack.c.b16 %v4557, %v4556
        %v4571 = vpack.c.b16 %v4559, %v4558
        %v4572 = vpack.c.b16 %v4561, %v4560
        %v4573 = vpack.c.b16 %v4563, %v4562
        %4584 = vmatprep.subr.bf16.mxu0 0
        %4585 = vmatpush1.bf16.msra.mxu0 %v4571
        %4586 = vmatprep.subr.bf16.mxu0 0
        %4587 = vmatpush1.bf16.msra.mxu0 %v4570
        %4588 = vmatprep.subr.bf16.mxu0 0
        %4589 = vmatpush1.bf16.msra.mxu0 %v4569
        %4590 = vmatprep.subr.bf16.mxu0 0
        %4591 = vmatpush1.bf16.msra.mxu0 %v4568
        %4592 = vmatprep.subr.bf16.mxu0 0
        %4593 = vmatpush1.bf16.msra.mxu0 %v4567
        %4594 = vmatprep.subr.bf16.mxu0 0
        %4595 = vmatpush1.bf16.msra.mxu0 %v4566
        %4596 = vmatprep.subr.bf16.mxu0 0
        %4597 = vmatpush1.bf16.msra.mxu0 %v4565
        %4598 = vmatprep.subr.bf16.mxu0 0
        %4599 = vmatpush1.bf16.msra.mxu0 %v4564
        %4600 = vmatprep.subr.bf16.mxu0 0
        %4601 = vmatpush2.bf16.msra.mxu0 0
        %4602 = vmatprep.subr.bf16.mxu0 0
        %4603 = vmatpush2.bf16.msra.mxu0 0
        %4604 = vmatprep.subr.bf16.mxu0 0
        %4605 = vmatpush2.bf16.msra.mxu0 0
        %4606 = vmatprep.subr.bf16.mxu0 0
        %4607 = vmatpush2.bf16.msra.mxu0 0
        %4608 = vmatprep.subr.bf16.mxu0 0
        %4609 = vmatpush2.bf16.msra.mxu0 0
        %4610 = vmatprep.subr.bf16.mxu0 0
        %4611 = vmatpush2.bf16.msra.mxu0 0
        %4612 = vmatprep.subr.bf16.mxu0 0
        %4613 = vmatpush2.bf16.msra.mxu0 %v4573
        %4614 = vmatprep.subr.bf16.mxu0 0
        %4615 = vmatpush2.bf16.msra.mxu0 %v4572
        %4616 = vmatprep.mubr.bf16.mxu0 %v4450
        %4617 = vmatmul.mubr.bf16.gmra.mxu0 %v4364
        %v4618 = vpop.f32.mrf.mxu0
        %v4619 = vadd.f32 0.0, %v4618
        %v4620 = vpop.f32.mrf.mxu0
        %v4621 = vpop.f32.mrf.mxu0
        %v4622 = vadd.f32 0.0, %v4621
        %v4623 = vpop.f32.mrf.mxu0
        %4624 = vmatprep.mubr.bf16.mxu0 %v4453
        %4625 = vmatmul.mubr.bf16.gmra.mxu0 %v4366
        %v4626 = vpop.f32.mrf.mxu0
        %v4627 = vadd.f32 0.0, %v4626
        %v4628 = vpop.f32.mrf.mxu0
        %v4629 = vpop.f32.mrf.mxu0
        %v4630 = vadd.f32 0.0, %v4629
        %v4631 = vpop.f32.mrf.mxu0
        %4632 = vdwg.mxu0
        %v4633 = vmax.f32 %v4490, %v4619
        %v4634 = vmax.f32 %v4493, %v4622
        %v4635 = vmax.f32 %v4498, %v4627
        %v4636 = vmax.f32 %v4501, %v4630
        %v4637 = vmax.f32 %v4633, 0.0
        %v4638 = vmax.f32 %v4634, 0.0
        %v4639 = vmax.f32 %v4635, 0.0
        %v4640 = vmax.f32 %v4636, 0.0
        %v4641 = vpack.c.bf16 %v4638, %v4637
        %v4642 = vpack.c.bf16 %v4640, %v4639
        %v4643 = vld [vmem:[%s14] sm:$0x1]
        %v4644 = vld [vmem:[%s13] sm:$0xf]
        %v4645 = vld [vmem:[%s13 + $0x4] sm:$0xf]
        %v4646 = vld [vmem:[%s13 + $0x8] sm:$0xf]
        %v4647 = vld [vmem:[%s13 + $0xc] sm:$0xf]
        %v4648 = vld [vmem:[%s13 + $0x10] sm:$0xf]
        %v4649 = vld [vmem:[%s13 + $0x14] sm:$0xf]
        %v4650 = vld [vmem:[%s13 + $0x18] sm:$0xf]
        %v4651 = vld [vmem:[%s13 + $0x1c] sm:$0xf]
        %v4652 = vld [vmem:[%s13 + $0x20] sm:$0xf]
        %v4653 = vld [vmem:[%s13 + $0x24] sm:$0xf]
        %v4664 = vunpack.c.l.b16 %v4644
        %v4665 = vunpack.c.l.b16 %v4645
        %v4666 = vunpack.c.l.b16 %v4646
        %v4667 = vunpack.c.l.b16 %v4647
        %v4668 = vunpack.c.l.b16 %v4648
        %v4669 = vunpack.c.l.b16 %v4649
        %v4670 = vunpack.c.l.b16 %v4650
        %v4671 = vunpack.c.l.b16 %v4651
        %v4672 = vunpack.c.l.b16 %v4652
        %v4673 = vunpack.c.l.b16 %v4653
        %v4674 = vpack.c.b16 %v4665, %v4664
        %v4675 = vpack.c.b16 %v4667, %v4666
        %v4676 = vpack.c.b16 %v4669, %v4668
        %v4677 = vpack.c.b16 %v4671, %v4670
        %v4678 = vpack.c.b16 %v4673, %v4672
        %vm4684 = vcmask 654336
        %v4686 = vsel %vm4684, %v4641, 0
        %4688 = vmatprep.subr.bf16.mxu0 0
        %4689 = vmatpush1.bf16.msra.mxu0 0
        %4690 = vmatprep.subr.bf16.mxu0 0
        %4691 = vmatpush1.bf16.msra.mxu0 0
        %4692 = vmatprep.subr.bf16.mxu0 0
        %4693 = vmatpush1.bf16.msra.mxu0 0
        %4694 = vmatprep.subr.bf16.mxu0 0
        %4695 = vmatpush1.bf16.msra.mxu0 %v4678
        %4696 = vmatprep.subr.bf16.mxu0 0
        %4697 = vmatpush1.bf16.msra.mxu0 %v4677
        %4698 = vmatprep.subr.bf16.mxu0 0
        %4699 = vmatpush1.bf16.msra.mxu0 %v4676
        %4700 = vmatprep.subr.bf16.mxu0 0
        %4701 = vmatpush1.bf16.msra.mxu0 %v4675
        %4702 = vmatprep.subr.bf16.mxu0 0
        %4703 = vmatpush1.bf16.msra.mxu0 %v4674
        %4704 = vmatprep.subr.bf16.mxu0 0
        %4705 = vmatpush2.bf16.msra.mxu0 0
        %4706 = vmatprep.subr.bf16.mxu0 0
        %4707 = vmatpush2.bf16.msra.mxu0 0
        %4708 = vmatprep.subr.bf16.mxu0 0
        %4709 = vmatpush2.bf16.msra.mxu0 0
        %4710 = vmatprep.subr.bf16.mxu0 0
        %4711 = vmatpush2.bf16.msra.mxu0 0
        %4712 = vmatprep.subr.bf16.mxu0 0
        %4713 = vmatpush2.bf16.msra.mxu0 0
        %4714 = vmatprep.subr.bf16.mxu0 0
        %4715 = vmatpush2.bf16.msra.mxu0 0
        %4716 = vmatprep.subr.bf16.mxu0 0
        %4717 = vmatpush2.bf16.msra.mxu0 0
        %4718 = vmatprep.subr.bf16.mxu0 0
        %4719 = vmatpush2.bf16.msra.mxu0 0
        %4720 = vmatprep.mubr.bf16.mxu0 0
        %4721 = vmatmul.mubr.bf16.gmra.mxu0 %v4686
        %v4722 = vpop.f32.mrf.mxu0
        %v4723 = vadd.f32 0.0, %v4722
        %v4724 = vpop.f32.mrf.mxu0
        %v4725 = vpop.f32.mrf.mxu0
        %v4726 = vpop.f32.mrf.mxu0
        %4727 = vdwg.mxu0
        %v4729 = vlaneseq
        %v4730 = vshrl.u32 %v4729, 7
        %v4731 = vsub.s32 0, %v4730
        %v4732 = vrot.slane %v4643, %v4731
        %v4734 = vadd.f32 %v4732, %v4723
        %s4735 = scalar_lea.vmem %s13, 40
        %v4736 = vld [vmem:[%s4735] sm:$0xf]
        %v4737 = vld [vmem:[%s4735 + $0x4] sm:$0xf]
        %v4738 = vld [vmem:[%s4735 + $0x8] sm:$0xf]
        %v4739 = vld [vmem:[%s4735 + $0xc] sm:$0xf]
        %v4740 = vld [vmem:[%s4735 + $0x10] sm:$0xf]
        %v4741 = vld [vmem:[%s4735 + $0x14] sm:$0xf]
        %v4742 = vld [vmem:[%s4735 + $0x18] sm:$0xf]
        %v4743 = vld [vmem:[%s4735 + $0x1c] sm:$0xf]
        %v4744 = vld [vmem:[%s4735 + $0x20] sm:$0xf]
        %v4745 = vld [vmem:[%s4735 + $0x24] sm:$0xf]
        %v4747 = vrot.slane %v4641, 4
        %v4758 = vunpack.c.l.b16 %v4736
        %v4759 = vunpack.c.l.b16 %v4737
        %v4760 = vunpack.c.l.b16 %v4738
        %v4761 = vunpack.c.l.b16 %v4739
        %v4762 = vunpack.c.l.b16 %v4740
        %v4763 = vunpack.c.l.b16 %v4741
        %v4764 = vunpack.c.l.b16 %v4742
        %v4765 = vunpack.c.l.b16 %v4743
        %v4766 = vunpack.c.l.b16 %v4744
        %v4767 = vunpack.c.l.b16 %v4745
        %v4768 = vpack.c.b16 %v4759, %v4758
        %v4769 = vpack.c.b16 %v4761, %v4760
        %v4770 = vpack.c.b16 %v4763, %v4762
        %v4771 = vpack.c.b16 %v4765, %v4764
        %v4772 = vpack.c.b16 %v4767, %v4766
        %v4779 = vsel %vm4684, %v4747, 0
        %4781 = vmatprep.subr.bf16.mxu0 0
        %4782 = vmatpush1.bf16.msra.mxu0 0
        %4783 = vmatprep.subr.bf16.mxu0 0
        %4784 = vmatpush1.bf16.msra.mxu0 0
        %4785 = vmatprep.subr.bf16.mxu0 0
        %4786 = vmatpush1.bf16.msra.mxu0 0
        %4787 = vmatprep.subr.bf16.mxu0 0
        %4788 = vmatpush1.bf16.msra.mxu0 %v4772
        %4789 = vmatprep.subr.bf16.mxu0 0
        %4790 = vmatpush1.bf16.msra.mxu0 %v4771
        %4791 = vmatprep.subr.bf16.mxu0 0
        %4792 = vmatpush1.bf16.msra.mxu0 %v4770
        %4793 = vmatprep.subr.bf16.mxu0 0
        %4794 = vmatpush1.bf16.msra.mxu0 %v4769
        %4795 = vmatprep.subr.bf16.mxu0 0
        %4796 = vmatpush1.bf16.msra.mxu0 %v4768
        %4797 = vmatprep.subr.bf16.mxu0 0
        %4798 = vmatpush2.bf16.msra.mxu0 0
        %4799 = vmatprep.subr.bf16.mxu0 0
        %4800 = vmatpush2.bf16.msra.mxu0 0
        %4801 = vmatprep.subr.bf16.mxu0 0
        %4802 = vmatpush2.bf16.msra.mxu0 0
        %4803 = vmatprep.subr.bf16.mxu0 0
        %4804 = vmatpush2.bf16.msra.mxu0 0
        %4805 = vmatprep.subr.bf16.mxu0 0
        %4806 = vmatpush2.bf16.msra.mxu0 0
        %4807 = vmatprep.subr.bf16.mxu0 0
        %4808 = vmatpush2.bf16.msra.mxu0 0
        %4809 = vmatprep.subr.bf16.mxu0 0
        %4810 = vmatpush2.bf16.msra.mxu0 0
        %4811 = vmatprep.subr.bf16.mxu0 0
        %4812 = vmatpush2.bf16.msra.mxu0 0
        %4813 = vmatprep.mubr.bf16.mxu0 0
        %4814 = vmatmul.mubr.bf16.gmra.mxu0 %v4779
        %v4815 = vpop.f32.mrf.mxu0
        %v4816 = vadd.f32 0.0, %v4815
        %v4817 = vpop.f32.mrf.mxu0
        %v4818 = vpop.f32.mrf.mxu0
        %v4819 = vpop.f32.mrf.mxu0
        %4820 = vdwg.mxu0
        %v4821 = vadd.f32 %v4734, %v4816
        %s4822 = scalar_lea.vmem %s13, 80
        %v4823 = vld [vmem:[%s4822] sm:$0xf]
        %v4824 = vld [vmem:[%s4822 + $0x4] sm:$0xf]
        %v4825 = vld [vmem:[%s4822 + $0x8] sm:$0xf]
        %v4826 = vld [vmem:[%s4822 + $0xc] sm:$0xf]
        %v4827 = vld [vmem:[%s4822 + $0x10] sm:$0xf]
        %v4828 = vld [vmem:[%s4822 + $0x14] sm:$0xf]
        %v4829 = vld [vmem:[%s4822 + $0x18] sm:$0xf]
        %v4830 = vld [vmem:[%s4822 + $0x1c] sm:$0xf]
        %v4831 = vld [vmem:[%s4822 + $0x20] sm:$0xf]
        %v4832 = vld [vmem:[%s4822 + $0x24] sm:$0xf]
        %v4843 = vunpack.c.l.b16 %v4823
        %v4844 = vunpack.c.l.b16 %v4824
        %v4845 = vunpack.c.l.b16 %v4825
        %v4846 = vunpack.c.l.b16 %v4826
        %v4847 = vunpack.c.l.b16 %v4827
        %v4848 = vunpack.c.l.b16 %v4828
        %v4849 = vunpack.c.l.b16 %v4829
        %v4850 = vunpack.c.l.b16 %v4830
        %v4851 = vunpack.c.l.b16 %v4831
        %v4852 = vunpack.c.l.b16 %v4832
        %v4853 = vpack.c.b16 %v4844, %v4843
        %v4854 = vpack.c.b16 %v4846, %v4845
        %v4855 = vpack.c.b16 %v4848, %v4847
        %v4856 = vpack.c.b16 %v4850, %v4849
        %v4857 = vpack.c.b16 %v4852, %v4851
        %v4864 = vsel %vm4684, %v4642, 0
        %4866 = vmatprep.subr.bf16.mxu0 0
        %4867 = vmatpush1.bf16.msra.mxu0 0
        %4868 = vmatprep.subr.bf16.mxu0 0
        %4869 = vmatpush1.bf16.msra.mxu0 0
        %4870 = vmatprep.subr.bf16.mxu0 0
        %4871 = vmatpush1.bf16.msra.mxu0 0
        %4872 = vmatprep.subr.bf16.mxu0 0
        %4873 = vmatpush1.bf16.msra.mxu0 %v4857
        %4874 = vmatprep.subr.bf16.mxu0 0
        %4875 = vmatpush1.bf16.msra.mxu0 %v4856
        %4876 = vmatprep.subr.bf16.mxu0 0
        %4877 = vmatpush1.bf16.msra.mxu0 %v4855
        %4878 = vmatprep.subr.bf16.mxu0 0
        %4879 = vmatpush1.bf16.msra.mxu0 %v4854
        %4880 = vmatprep.subr.bf16.mxu0 0
        %4881 = vmatpush1.bf16.msra.mxu0 %v4853
        %4882 = vmatprep.subr.bf16.mxu0 0
        %4883 = vmatpush2.bf16.msra.mxu0 0
        %4884 = vmatprep.subr.bf16.mxu0 0
        %4885 = vmatpush2.bf16.msra.mxu0 0
        %4886 = vmatprep.subr.bf16.mxu0 0
        %4887 = vmatpush2.bf16.msra.mxu0 0
        %4888 = vmatprep.subr.bf16.mxu0 0
        %4889 = vmatpush2.bf16.msra.mxu0 0
        %4890 = vmatprep.subr.bf16.mxu0 0
        %4891 = vmatpush2.bf16.msra.mxu0 0
        %4892 = vmatprep.subr.bf16.mxu0 0
        %4893 = vmatpush2.bf16.msra.mxu0 0
        %4894 = vmatprep.subr.bf16.mxu0 0
        %4895 = vmatpush2.bf16.msra.mxu0 0
        %4896 = vmatprep.subr.bf16.mxu0 0
        %4897 = vmatpush2.bf16.msra.mxu0 0
        %4898 = vmatprep.mubr.bf16.mxu0 0
        %4899 = vmatmul.mubr.bf16.gmra.mxu0 %v4864
        %v4900 = vpop.f32.mrf.mxu0
        %v4901 = vadd.f32 0.0, %v4900
        %v4902 = vpop.f32.mrf.mxu0
        %v4903 = vpop.f32.mrf.mxu0
        %v4904 = vpop.f32.mrf.mxu0
        %4905 = vdwg.mxu0
        %v4906 = vadd.f32 %v4821, %v4901
        %s4907 = scalar_lea.vmem %s13, 120
        %v4908 = vld [vmem:[%s4907] sm:$0xf]
        %v4909 = vld [vmem:[%s4907 + $0x4] sm:$0xf]
        %v4910 = vld [vmem:[%s4907 + $0x8] sm:$0xf]
        %v4911 = vld [vmem:[%s4907 + $0xc] sm:$0xf]
        %v4912 = vld [vmem:[%s4907 + $0x10] sm:$0xf]
        %v4913 = vld [vmem:[%s4907 + $0x14] sm:$0xf]
        %v4914 = vld [vmem:[%s4907 + $0x18] sm:$0xf]
        %v4915 = vld [vmem:[%s4907 + $0x1c] sm:$0xf]
        %v4916 = vld [vmem:[%s4907 + $0x20] sm:$0xf]
        %v4917 = vld [vmem:[%s4907 + $0x24] sm:$0xf]
        %v4919 = vrot.slane %v4642, 4
        %v4930 = vunpack.c.l.b16 %v4908
        %v4931 = vunpack.c.l.b16 %v4909
        %v4932 = vunpack.c.l.b16 %v4910
        %v4933 = vunpack.c.l.b16 %v4911
        %v4934 = vunpack.c.l.b16 %v4912
        %v4935 = vunpack.c.l.b16 %v4913
        %v4936 = vunpack.c.l.b16 %v4914
        %v4937 = vunpack.c.l.b16 %v4915
        %v4938 = vunpack.c.l.b16 %v4916
        %v4939 = vunpack.c.l.b16 %v4917
        %v4940 = vpack.c.b16 %v4931, %v4930
        %v4941 = vpack.c.b16 %v4933, %v4932
        %v4942 = vpack.c.b16 %v4935, %v4934
        %v4943 = vpack.c.b16 %v4937, %v4936
        %v4944 = vpack.c.b16 %v4939, %v4938
        %v4951 = vsel %vm4684, %v4919, 0
        %4953 = vmatprep.subr.bf16.mxu0 0
        %4954 = vmatpush1.bf16.msra.mxu0 0
        %4955 = vmatprep.subr.bf16.mxu0 0
        %4956 = vmatpush1.bf16.msra.mxu0 0
        %4957 = vmatprep.subr.bf16.mxu0 0
        %4958 = vmatpush1.bf16.msra.mxu0 0
        %4959 = vmatprep.subr.bf16.mxu0 0
        %4960 = vmatpush1.bf16.msra.mxu0 %v4944
        %4961 = vmatprep.subr.bf16.mxu0 0
        %4962 = vmatpush1.bf16.msra.mxu0 %v4943
        %4963 = vmatprep.subr.bf16.mxu0 0
        %4964 = vmatpush1.bf16.msra.mxu0 %v4942
        %4965 = vmatprep.subr.bf16.mxu0 0
        %4966 = vmatpush1.bf16.msra.mxu0 %v4941
        %4967 = vmatprep.subr.bf16.mxu0 0
        %4968 = vmatpush1.bf16.msra.mxu0 %v4940
        %4969 = vmatprep.subr.bf16.mxu0 0
        %4970 = vmatpush2.bf16.msra.mxu0 0
        %4971 = vmatprep.subr.bf16.mxu0 0
        %4972 = vmatpush2.bf16.msra.mxu0 0
        %4973 = vmatprep.subr.bf16.mxu0 0
        %4974 = vmatpush2.bf16.msra.mxu0 0
        %4975 = vmatprep.subr.bf16.mxu0 0
        %4976 = vmatpush2.bf16.msra.mxu0 0
        %4977 = vmatprep.subr.bf16.mxu0 0
        %4978 = vmatpush2.bf16.msra.mxu0 0
        %4979 = vmatprep.subr.bf16.mxu0 0
        %4980 = vmatpush2.bf16.msra.mxu0 0
        %4981 = vmatprep.subr.bf16.mxu0 0
        %4982 = vmatpush2.bf16.msra.mxu0 0
        %4983 = vmatprep.subr.bf16.mxu0 0
        %4984 = vmatpush2.bf16.msra.mxu0 0
        %4985 = vmatprep.mubr.bf16.mxu0 0
        %4986 = vmatmul.mubr.bf16.gmra.mxu0 %v4951
        %v4987 = vpop.f32.mrf.mxu0
        %v4988 = vadd.f32 0.0, %v4987
        %v4989 = vpop.f32.mrf.mxu0
        %v4990 = vpop.f32.mrf.mxu0
        %v4991 = vpop.f32.mrf.mxu0
        %4992 = vdwg.mxu0
        %v4993 = vadd.f32 %v4906, %v4988
        %v4994 = vmax.f32 %v4993, 0.0
        %v4995 = vpack.c.bf16 %v4994, %v4994
        %v4996 = vld [vmem:[%s15] sm:$0xf]
        %v4997 = vld [vmem:[%s15 + $0x4] sm:$0xf]
        %v4998 = vld [vmem:[%s15 + $0x8] sm:$0xf]
        %v4999 = vld [vmem:[%s15 + $0xc] sm:$0xf]
        %v5000 = vld [vmem:[%s15 + $0x10] sm:$0xf]
        %v5001 = vld [vmem:[%s15 + $0x14] sm:$0xf]
        %v5002 = vld [vmem:[%s15 + $0x18] sm:$0x1]
        %v5003 = vld [vmem:[%s16] sm:$0x1]
        %v5005 = vlaneseq
        %v5006 = vshrl.u32 %v5005, 7
        %v5007 = vsub.s32 0, %v5006
        %v5008 = vrot.slane %v5003, %v5007
        %v5017 = vunpack.c.l.b16 %v4996
        %v5018 = vunpack.c.l.b16 %v4997
        %v5019 = vunpack.c.l.b16 %v4998
        %v5020 = vunpack.c.l.b16 %v4999
        %v5021 = vunpack.c.l.b16 %v5000
        %v5022 = vunpack.c.l.b16 %v5001
        %v5023 = vunpack.c.l.b16 %v5002
        %v5024 = vpack.c.b16 %v5018, %v5017
        %v5025 = vpack.c.b16 %v5020, %v5019
        %v5026 = vpack.c.b16 %v5022, %v5021
        %v5027 = vpack.c.b16 %v5023, %v5023
        %vm5031 = vcmask 408576
        %v5033 = vsel %vm5031, %v4995, 0
        %vm5035 = vcmask 1040384
        %v5037 = vsel %vm5035, %v5027, 0
        %5039 = vmatprep.subr.bf16.mxu0 0
        %5040 = vmatpush1.bf16.msra.mxu0 0
        %5041 = vmatprep.subr.bf16.mxu0 0
        %5042 = vmatpush1.bf16.msra.mxu0 0
        %5043 = vmatprep.subr.bf16.mxu0 0
        %5044 = vmatpush1.bf16.msra.mxu0 0
        %5045 = vmatprep.subr.bf16.mxu0 0
        %5046 = vmatpush1.bf16.msra.mxu0 0
        %5047 = vmatprep.subr.bf16.mxu0 0
        %5048 = vmatpush1.bf16.msra.mxu0 %v5037
        %5049 = vmatprep.subr.bf16.mxu0 0
        %5050 = vmatpush1.bf16.msra.mxu0 %v5026
        %5051 = vmatprep.subr.bf16.mxu0 0
        %5052 = vmatpush1.bf16.msra.mxu0 %v5025
        %5053 = vmatprep.subr.bf16.mxu0 0
        %5054 = vmatpush1.bf16.msra.mxu0 %v5024
        %5055 = vmatprep.subr.bf16.mxu0 0
        %5056 = vmatpush2.bf16.msra.mxu0 0
        %5057 = vmatprep.subr.bf16.mxu0 0
        %5058 = vmatpush2.bf16.msra.mxu0 0
        %5059 = vmatprep.subr.bf16.mxu0 0
        %5060 = vmatpush2.bf16.msra.mxu0 0
        %5061 = vmatprep.subr.bf16.mxu0 0
        %5062 = vmatpush2.bf16.msra.mxu0 0
        %5063 = vmatprep.subr.bf16.mxu0 0
        %5064 = vmatpush2.bf16.msra.mxu0 0
        %5065 = vmatprep.subr.bf16.mxu0 0
        %5066 = vmatpush2.bf16.msra.mxu0 0
        %5067 = vmatprep.subr.bf16.mxu0 0
        %5068 = vmatpush2.bf16.msra.mxu0 0
        %5069 = vmatprep.subr.bf16.mxu0 0
        %5070 = vmatpush2.bf16.msra.mxu0 0
        %5071 = vmatprep.mubr.bf16.mxu0 0
        %5072 = vmatmul.mubr.bf16.gmra.mxu0 %v5033
        %v5073 = vpop.f32.mrf.mxu0
        %v5074 = vadd.f32 %v5008, %v5073
        %v5075 = vpop.f32.mrf.mxu0
        %v5076 = vpop.f32.mrf.mxu0
        %v5077 = vpop.f32.mrf.mxu0
        %5078 = vdwg.mxu0
        %v5079 = vlaneseq
        %v5080 = vand.u32 %v5079, 127
        %vm5081 = vcmp.lt.s32.totalorder %v5080, 10
        %v5082 = vsel %vm5081, %v5074, -1e+30
        %5083 = vmax.xlane.f32.xlu0 %v5082
        %v5084 = vpop.xlane.xlu0 %5083
        %v5085 = vsub.f32 %v5082, %v5084
        %v5086 = vmul.f32 %v5085, 1.442695
        %v5087 = vpow.pop %v5086
        %5088 = vadd.xlane.f32.xlu0 %v5087
        %v5089 = vpop.xlane.xlu0 %5088
        %v5090 = vlog2.pop %v5089
        %v5091 = vmul.f32 %v5090, 0.6931472
        %v5092 = vadd.f32 %v5084, %v5091
        %v5093 = vsub.f32 %v5074, %v5092
        %v5094 = vsel %vm5081, %v5093, 0.0
        %5095 = vst [vmem:[%s544] sm:$0xff] %v5094
        %s5096 = sand.u32 %s401, 1
        %s5097 = scalar_lea.sflag [#allocation3], %s5096
        %s5098 = sand.u32 %s401, 1
        %s5099 = smul.addr %s5098, 8
        %s5100 = scalar_lea.vmem [#allocation2], %s5099
        // Predicated region
        $region89: #{net_forward.1} parent=87 // pred_check
          %p5101 = pneg %p411
        $region90: #{net_forward.1} parent=87 // pred_check_branch
          %5103 = sbr.rel (%p5101) target = $region92
        $region91: #{net_forward.1} parent=87 // pred_region
          %s5105 = ssub.s32 128, 128
          %5106 = vsyncadd %s5097, %s5105
          %s5107 = smul.addr %s31, 128
          %s5108 = scalar_lea.hbm %s17, %s5107
          %s5110 = sshll.u32 %s5100, 4
          %s5111 = int_to_ptr.vmem [resolvable:$true] %s5110
          %5113 = dma.vmem_to_hbm [thread:$0]  %s5111, 128, %s5108, %s5097
        $region92: #{net_forward.1} parent=87 // pred_fallthru
          _
      $region88: #{net_forward.1} parent=5 // pred_fallthru
        _
      %p5114 = scmp.le.s32.totalorder 2, %s26
      // Predicated region
      $region93: #{net_forward.1} parent=5 // pred_check
        %p5115 = pneg %p5114
      $region94: #{net_forward.1} parent=5 // pred_check_branch
        %5117 = sbr.rel (%p5115) target = $region96
      $region95: #{net_forward.1} parent=5 // pred_region
        %s5118 = ssub.s32 %s26, 2
        // Predicated region
        $region97: #{net_forward.1} parent=95 // pred_check
          %p5119 = pneg %p417
        $region98: #{net_forward.1} parent=95 // pred_check_branch
          %5121 = sbr.rel (%p5119) target = $region100
        $region99: #{net_forward.1} parent=95 // pred_region
          %s5122 = sand.u32 %s402, 1
          %s5123 = scalar_lea.sflag [#allocation3], %s5122
          %s5124 = sand.u32 %s402, 1
          %s5125 = smul.addr %s5124, 8
          %s5126 = scalar_lea.vmem [#allocation2], %s5125
          %5127 = dma.done %s5123, 128
        $region100: #{net_forward.1} parent=95 // pred_fallthru
          _
      $region96: #{net_forward.1} parent=5 // pred_fallthru
        _
    $region6: #{net_forward.1} parent=1 // loop_footer
      %s30 = sadd.s32 1, %s26
    $region7: #{net_forward.1} parent=1 // loop_footer_branch
      %25 = sbr.rel target = $region3
    $region8: #{net_forward.1} parent=1 // loop_exit
      _
    %5128 = vsyncpa [#allocation3], 1
    %s5129 = scalar_lea.sflag [#allocation3], 1
    %5130 = vsyncpa %s5129, 1

</llo_original>
